<compile_context>
chip_gen: v5e
topology: v5e:2x2
jax: 0.10.0
libtpu: 0.0.40
codegen_flags: <defaults>
</compile_context>

<pallas_src>
import functools
import math

import jax
import jax.numpy as jnp
from jax.experimental import pallas as pl
from jax.experimental.pallas import tpu as pltpu

_LANE = 128

# ----------------------------- fast bounded sine -----------------------------

_PI_HI = 3.140625               # exact in f32 (few mantissa bits)
_PI_LO = 9.6765358979e-04       # pi - _PI_HI
_INV_PI = 0.3183098861837907    # 1/pi


def _fast_sin(x):
    """sin(x) for moderately bounded x (|x| <~ 1e3).

    Reduce by the nearest multiple of pi with a two-term Cody-Waite split,
    apply the parity sign, then evaluate a degree-11 odd polynomial on
    [-pi/2, pi/2].  Absolute error ~1e-6 -- far below the test tolerance --
    and much cheaper on the (saturated) VALU slot than wide-range jnp.sin.
    """
    k = jnp.round(x * _INV_PI)
    r = (x - k * _PI_HI) - k * _PI_LO
    # (-1)^k without integer casts: k - 2*floor(k/2) is 0.0 or 1.0.
    sign = 1.0 - 2.0 * (k - 2.0 * jnp.floor(0.5 * k))
    s = r * r
    p = -2.5052108385441720e-08          # ~ -1/11!
    p = p * s + 2.7557319223985893e-06   # 1/9!
    p = p * s - 1.9841269841269841e-04   # -1/7!
    p = p * s + 8.3333333333333333e-03   # 1/5!
    p = p * s - 1.6666666666666666e-01   # -1/3!
    p = p * s + 1.0
    return sign * (r * p)


# --------------------------------- kernel ------------------------------------

def _siren_kernel(x_ref,
                  w1_ref, b1_ref, w2_ref, b2_ref,
                  w3_ref, b3_ref, w4_ref, b4_ref,
                  o_ref, *, precision):
    """Fused 4-layer SIREN on one lane-dense tile.

    x_ref: (in_ch, tile); w*: (out, in); b*: (out, 1); o_ref: (out_ch, tile).
    omega is pre-folded into weights/biases; all math in f32.
    """
    def layer(w_ref, b_ref, h):
        z = jnp.dot(w_ref[...], h, preferred_element_type=jnp.float32,
                    precision=precision) + b_ref[...]
        return _fast_sin(z)

    h = x_ref[...].astype(jnp.float32)
    h = layer(w1_ref, b1_ref, h)          # layer1 (is_first=True)
    h = layer(w2_ref, b2_ref, h)          # layer2
    h = layer(w3_ref, b3_ref, h)          # layer3
    y = layer(w4_ref, b4_ref, h)          # final: outermost_linear=False -> SineLayer
    o_ref[...] = y.astype(o_ref.dtype)


# ------------------------------ host-side wrapper -----------------------------

def _vmem_ceiling_bytes():
    """Generation-aware scoped-VMEM ceiling.

    ~32 MiB on v7x (64 MiB physical per TC), 48 MiB on v5e/v6e (128 MiB).
    """
    try:
        cap = int(pltpu.get_tpu_info().vmem_capacity_bytes)
    except Exception:
        cap = 64 << 20  # conservative (v7x-sized) fallback
    return max(16 << 20, min(48 << 20, cap // 2))


def _vmem_need_bytes(tile, c_in, c_out, width, w_bytes):
    item = 4  # f32
    io_tiles = 2 * (c_in + c_out) * tile * item   # double-buffered x / out tiles
    acts = 2 * width * tile * item                # two live activation slabs
    return io_tiles + acts + 2 * w_bytes


def siren_forward_t(x_t, folded_params, *, tile_n=8192):
    """Feature-major fast path: x_t is (in_ch, N), returns (out_ch, N).

    No HBM transposes -- fuse the layout into coordinate generation upstream.
    """
    c_in, n = x_t.shape
    width = folded_params["w1"].shape[0]
    c_out = folded_params["w4"].shape[0]
    assert folded_params["w1"].shape[1] == c_in

    w_bytes = sum(int(p.size) * 4 for p in folded_params.values())
    ceiling = _vmem_ceiling_bytes()

    # Row tile in 128-lane groups: start from the request (default 8192 lanes),
    # shrink if the conservative VMEM estimate (with 2x headroom) would exceed
    # the generation-aware scoped limit.
    groups = pl.cdiv(n, _LANE)
    cap_groups = max(1, min(int(tile_n) // _LANE, groups))
    while cap_groups > 1 and 2 * _vmem_need_bytes(cap_groups * _LANE, c_in,
                                                  c_out, width, w_bytes) > ceiling:
        cap_groups = (cap_groups + 1) // 2

    grid = pl.cdiv(groups, cap_groups)
    if groups >= 2 and grid % 2 == 1:
        grid += 1           # even parallel grid -> shards across v7x's 2 TCs
    tile_groups = pl.cdiv(groups, grid)
    tile = tile_groups * _LANE
    n_pad = grid * tile

    if n_pad != n:
        x_t = jnp.pad(x_t, ((0, 0), (0, n_pad - n)))

    vmem_need = _vmem_need_bytes(tile, c_in, c_out, width, w_bytes)
    vmem_limit = int(min(max(2 * vmem_need, 16 << 20), ceiling))

    full = lambda shape: pl.BlockSpec(shape, lambda i: (0, 0))
    p = folded_params

    def call(precision):
        kern = functools.partial(_siren_kernel, precision=precision)
        return pl.pallas_call(
            kern,
            out_shape=jax.ShapeDtypeStruct((c_out, n_pad), x_t.dtype),
            grid_spec=pltpu.PrefetchScalarGridSpec(
                num_scalar_prefetch=0,
                grid=(grid,),
                in_specs=[
                    pl.BlockSpec((c_in, tile), lambda i: (0, i)),  # x tile (lane-dense)
                    full(p["w1"].shape), full(p["b1"].shape),
                    full(p["w2"].shape), full(p["b2"].shape),
                    full(p["w3"].shape), full(p["b3"].shape),
                    full(p["w4"].shape), full(p["b4"].shape),
                ],
                out_specs=pl.BlockSpec((c_out, tile), lambda i: (0, i)),
            ),
            compiler_params=pltpu.CompilerParams(
                dimension_semantics=("parallel",),
                vmem_limit_bytes=vmem_limit),
        )(x_t, p["w1"], p["b1"], p["w2"], p["b2"],
          p["w3"], p["b3"], p["w4"], p["b4"])

    try:
        out_t = call(jax.lax.Precision.HIGHEST)   # MXU is idle here; HIGHEST is free
    except Exception:
        out_t = call(None)                        # fallback to default precision

    return out_t[:, :n] if n_pad != n else out_t


def siren_forward(x, folded_params, *, tile_n=8192):
    """Module-faithful API: x is (N, in_ch), returns (N, out_ch).

    Pays two HBM transposes; prefer siren_forward_t on the hot path.
    """
    return jnp.transpose(siren_forward_t(jnp.transpose(x), folded_params,
                                         tile_n=tile_n))


# ------------------------- parameters / reference ----------------------------

def init_siren_params(key, in_channels, width, out_channels,
                      first_omega=30.0, hidden_omega=30.0):
    """PyTorch-convention parameters: W is (out, in), b is (out, 1), no omega folded.

    SineLayer weights: first layer U(-1/in, 1/in); hidden layers
    U(-sqrt(6/in)/omega, sqrt(6/in)/omega).  Biases keep nn.Linear's default
    U(-1/sqrt(in), 1/sqrt(in)).
    """
    keys = jax.random.split(key, 8)

    def uniform(k, shape, bound):
        return jax.random.uniform(k, shape, jnp.float32, -bound, bound)

    hidden_bound = lambda fan_in: math.sqrt(6.0 / fan_in) / hidden_omega
    bias_bound = lambda fan_in: 1.0 / math.sqrt(fan_in)

    return {
        "w1": uniform(keys[0], (width, in_channels), 1.0 / in_channels),
        "b1": uniform(keys[1], (width, 1), bias_bound(in_channels)),
        "w2": uniform(keys[2], (width, width), hidden_bound(width)),
        "b2": uniform(keys[3], (width, 1), bias_bound(width)),
        "w3": uniform(keys[4], (width, width), hidden_bound(width)),
        "b3": uniform(keys[5], (width, 1), bias_bound(width)),
        "w4": uniform(keys[6], (out_channels, width), hidden_bound(width)),
        "b4": uniform(keys[7], (out_channels, 1), bias_bound(width)),
    }


def fold_omega(params, first_omega=30.0, hidden_omega=30.0):
    """One-time prep: fold omega into weights/biases so the kernel skips the mul."""
    f, h = float(first_omega), float(hidden_omega)
    return {
        "w1": params["w1"] * f, "b1": params["b1"] * f,
        "w2": params["w2"] * h, "b2": params["b2"] * h,
        "w3": params["w3"] * h, "b3": params["b3"] * h,
        "w4": params["w4"] * h, "b4": params["b4"] * h,
    }


def siren_reference(x, params, first_omega=30.0, hidden_omega=30.0):
    """Plain-JAX mirror of the PyTorch module (raw, unfolded (out, in) params)."""
    hp = jax.lax.Precision.HIGHEST

    def layer(h, w, b, omega):
        return jnp.sin(omega * (jnp.dot(h, w.T, precision=hp) + b.T))

    h = layer(x, params["w1"], params["b1"], first_omega)
    h = layer(h, params["w2"], params["b2"], hidden_omega)
    h = layer(h, params["w3"], params["b3"], hidden_omega)
    return layer(h, params["w4"], params["b4"], hidden_omega)


# ----------------------------------- test -------------------------------------

if __name__ == "__main__":
    key = jax.random.PRNGKey(0)
    k_param, k_x = jax.random.split(key)

    # Small image-fitting-style shapes; N deliberately not a multiple of 128
    # to exercise padding, and >=2 lane groups to exercise the even-grid path.
    N, IN_CH, WIDTH, OUT_CH = 300, 2, 32, 3
    FIRST_OMEGA, HIDDEN_OMEGA = 30.0, 30.0

    raw_params = init_siren_params(k_param, IN_CH, WIDTH, OUT_CH,
                                   FIRST_OMEGA, HIDDEN_OMEGA)
    folded = fold_omega(raw_params, FIRST_OMEGA, HIDDEN_OMEGA)

    # Coordinates generated directly in feature-major (in_ch, N) layout: the
    # transpose is fused into coordinate generation, not paid as an HBM op.
    x_t = jax.random.uniform(k_x, (IN_CH, N), jnp.float32, -1.0, 1.0)

    out_t = jax.block_until_ready(siren_forward_t(x_t, folded))
    ref = siren_reference(jnp.transpose(x_t), raw_params,
                          FIRST_OMEGA, HIDDEN_OMEGA)

    assert out_t.shape == (OUT_CH, N)
    assert jnp.allclose(jnp.transpose(out_t), ref, atol=2e-4, rtol=2e-4), \
        "feature-major path mismatch vs reference"

    # Module-faithful (N, C) wrapper (pays the transposes) must agree too.
    out = jax.block_until_ready(siren_forward(jnp.transpose(x_t), folded))
    assert out.shape == (N, OUT_CH)
    assert jnp.allclose(out, ref, atol=2e-4, rtol=2e-4), \
        "(N, C) wrapper mismatch vs reference"

    print("KERNEL_OK")
</pallas_src>

<mosaic_0001>
module attributes {stable_mosaic.version = 11 : i64} {
  func.func @_siren_kernel(%arg0: i32, %arg1: memref<2x256xf32, #tpu.memory_space<vmem>>, %arg2: memref<32x2xf32, #tpu.memory_space<vmem>>, %arg3: memref<32x1xf32, #tpu.memory_space<vmem>>, %arg4: memref<32x32xf32, #tpu.memory_space<vmem>>, %arg5: memref<32x1xf32, #tpu.memory_space<vmem>>, %arg6: memref<32x32xf32, #tpu.memory_space<vmem>>, %arg7: memref<32x1xf32, #tpu.memory_space<vmem>>, %arg8: memref<3x32xf32, #tpu.memory_space<vmem>>, %arg9: memref<3x1xf32, #tpu.memory_space<vmem>>, %arg10: memref<3x256xf32, #tpu.memory_space<vmem>>) attributes {dimension_semantics = [#tpu.dimension_semantics<parallel>], iteration_bounds = array<i64: 2>, scalar_prefetch = 0 : i64, scratch_operands = 0 : i64, tpu.core_type = #tpu.core_type<tc>, window_params = [{transform_indices = @transform_0, window_bounds = array<i64: 2, 256>}, {pipeline_mode = #tpu.pipeline_mode<synchronous>, transform_indices = @transform_1, window_bounds = array<i64: 32, 2>}, {pipeline_mode = #tpu.pipeline_mode<synchronous>, transform_indices = @transform_2, window_bounds = array<i64: 32, 1>}, {pipeline_mode = #tpu.pipeline_mode<synchronous>, transform_indices = @transform_3, window_bounds = array<i64: 32, 32>}, {pipeline_mode = #tpu.pipeline_mode<synchronous>, transform_indices = @transform_4, window_bounds = array<i64: 32, 1>}, {pipeline_mode = #tpu.pipeline_mode<synchronous>, transform_indices = @transform_5, window_bounds = array<i64: 32, 32>}, {pipeline_mode = #tpu.pipeline_mode<synchronous>, transform_indices = @transform_6, window_bounds = array<i64: 32, 1>}, {pipeline_mode = #tpu.pipeline_mode<synchronous>, transform_indices = @transform_7, window_bounds = array<i64: 3, 32>}, {pipeline_mode = #tpu.pipeline_mode<synchronous>, transform_indices = @transform_8, window_bounds = array<i64: 3, 1>}, {transform_indices = @transform_9, window_bounds = array<i64: 3, 256>}]} {
    %c0 = arith.constant 0 : index
    %c0_0 = arith.constant 0 : index
    %0 = vector.load %arg1[%c0, %c0_0] : memref<2x256xf32, #tpu.memory_space<vmem>>, vector<2x256xf32>
    %c0_1 = arith.constant 0 : index
    %c0_2 = arith.constant 0 : index
    %1 = vector.load %arg2[%c0_1, %c0_2] : memref<32x2xf32, #tpu.memory_space<vmem>>, vector<32x2xf32>
    %cst = arith.constant dense<0.000000e+00> : vector<32x256xf32>
    %2 = tpu.matmul %1, %0, %cst {dimension_numbers = #tpu.dot_dimension_numbers<[1], [0], [0], [1], [0, 0, 1, 1], [], []>, precision = #tpu.contract_precision<fp32>} : vector<32x2xf32>, vector<2x256xf32>, vector<32x256xf32> -> vector<32x256xf32>
    %c0_3 = arith.constant 0 : index
    %c0_4 = arith.constant 0 : index
    %3 = vector.load %arg3[%c0_3, %c0_4] : memref<32x1xf32, #tpu.memory_space<vmem>>, vector<32x1xf32>
    %4 = vector.broadcast %3 : vector<32x1xf32> to vector<32x256xf32>
    %5 = arith.addf %2, %4 : vector<32x256xf32>
    %cst_5 = arith.constant 0.318309873 : f32
    %6 = vector.broadcast %cst_5 : f32 to vector<32x256xf32>
    %7 = arith.mulf %5, %6 : vector<32x256xf32>
    %8 = math.roundeven %7 : vector<32x256xf32>
    %cst_6 = arith.constant 3.140625 : f32
    %9 = vector.broadcast %cst_6 : f32 to vector<32x256xf32>
    %10 = arith.mulf %8, %9 : vector<32x256xf32>
    %11 = arith.subf %5, %10 : vector<32x256xf32>
    %cst_7 = arith.constant 9.67653584E-4 : f32
    %12 = vector.broadcast %cst_7 : f32 to vector<32x256xf32>
    %13 = arith.mulf %8, %12 : vector<32x256xf32>
    %14 = arith.subf %11, %13 : vector<32x256xf32>
    %cst_8 = arith.constant 5.000000e-01 : f32
    %15 = vector.broadcast %cst_8 : f32 to vector<32x256xf32>
    %16 = arith.mulf %15, %8 : vector<32x256xf32>
    %17 = math.floor %16 : vector<32x256xf32>
    %cst_9 = arith.constant 2.000000e+00 : f32
    %18 = vector.broadcast %cst_9 : f32 to vector<32x256xf32>
    %19 = arith.mulf %18, %17 : vector<32x256xf32>
    %20 = arith.subf %8, %19 : vector<32x256xf32>
    %cst_10 = arith.constant 2.000000e+00 : f32
    %21 = vector.broadcast %cst_10 : f32 to vector<32x256xf32>
    %22 = arith.mulf %21, %20 : vector<32x256xf32>
    %cst_11 = arith.constant 1.000000e+00 : f32
    %23 = vector.broadcast %cst_11 : f32 to vector<32x256xf32>
    %24 = arith.subf %23, %22 : vector<32x256xf32>
    %25 = arith.mulf %14, %14 : vector<32x256xf32>
    %cst_12 = arith.constant -2.50521079E-8 : f32
    %26 = vector.broadcast %cst_12 : f32 to vector<32x256xf32>
    %27 = arith.mulf %26, %25 : vector<32x256xf32>
    %cst_13 = arith.constant 2.75573188E-6 : f32
    %28 = vector.broadcast %cst_13 : f32 to vector<32x256xf32>
    %29 = arith.addf %27, %28 : vector<32x256xf32>
    %30 = arith.mulf %29, %25 : vector<32x256xf32>
    %cst_14 = arith.constant 1.98412701E-4 : f32
    %31 = vector.broadcast %cst_14 : f32 to vector<32x256xf32>
    %32 = arith.subf %30, %31 : vector<32x256xf32>
    %33 = arith.mulf %32, %25 : vector<32x256xf32>
    %cst_15 = arith.constant 0.00833333377 : f32
    %34 = vector.broadcast %cst_15 : f32 to vector<32x256xf32>
    %35 = arith.addf %33, %34 : vector<32x256xf32>
    %36 = arith.mulf %35, %25 : vector<32x256xf32>
    %cst_16 = arith.constant 0.166666672 : f32
    %37 = vector.broadcast %cst_16 : f32 to vector<32x256xf32>
    %38 = arith.subf %36, %37 : vector<32x256xf32>
    %39 = arith.mulf %38, %25 : vector<32x256xf32>
    %cst_17 = arith.constant 1.000000e+00 : f32
    %40 = vector.broadcast %cst_17 : f32 to vector<32x256xf32>
    %41 = arith.addf %39, %40 : vector<32x256xf32>
    %42 = arith.mulf %14, %41 : vector<32x256xf32>
    %43 = arith.mulf %24, %42 : vector<32x256xf32>
    %c0_18 = arith.constant 0 : index
    %c0_19 = arith.constant 0 : index
    %44 = vector.load %arg4[%c0_18, %c0_19] : memref<32x32xf32, #tpu.memory_space<vmem>>, vector<32x32xf32>
    %cst_20 = arith.constant dense<0.000000e+00> : vector<32x256xf32>
    %45 = tpu.matmul %44, %43, %cst_20 {dimension_numbers = #tpu.dot_dimension_numbers<[1], [0], [0], [1], [0, 0, 1, 1], [], []>, precision = #tpu.contract_precision<fp32>} : vector<32x32xf32>, vector<32x256xf32>, vector<32x256xf32> -> vector<32x256xf32>
    %c0_21 = arith.constant 0 : index
    %c0_22 = arith.constant 0 : index
    %46 = vector.load %arg5[%c0_21, %c0_22] : memref<32x1xf32, #tpu.memory_space<vmem>>, vector<32x1xf32>
    %47 = vector.broadcast %46 : vector<32x1xf32> to vector<32x256xf32>
    %48 = arith.addf %45, %47 : vector<32x256xf32>
    %cst_23 = arith.constant 0.318309873 : f32
    %49 = vector.broadcast %cst_23 : f32 to vector<32x256xf32>
    %50 = arith.mulf %48, %49 : vector<32x256xf32>
    %51 = math.roundeven %50 : vector<32x256xf32>
    %cst_24 = arith.constant 3.140625 : f32
    %52 = vector.broadcast %cst_24 : f32 to vector<32x256xf32>
    %53 = arith.mulf %51, %52 : vector<32x256xf32>
    %54 = arith.subf %48, %53 : vector<32x256xf32>
    %cst_25 = arith.constant 9.67653584E-4 : f32
    %55 = vector.broadcast %cst_25 : f32 to vector<32x256xf32>
    %56 = arith.mulf %51, %55 : vector<32x256xf32>
    %57 = arith.subf %54, %56 : vector<32x256xf32>
    %cst_26 = arith.constant 5.000000e-01 : f32
    %58 = vector.broadcast %cst_26 : f32 to vector<32x256xf32>
    %59 = arith.mulf %58, %51 : vector<32x256xf32>
    %60 = math.floor %59 : vector<32x256xf32>
    %cst_27 = arith.constant 2.000000e+00 : f32
    %61 = vector.broadcast %cst_27 : f32 to vector<32x256xf32>
    %62 = arith.mulf %61, %60 : vector<32x256xf32>
    %63 = arith.subf %51, %62 : vector<32x256xf32>
    %cst_28 = arith.constant 2.000000e+00 : f32
    %64 = vector.broadcast %cst_28 : f32 to vector<32x256xf32>
    %65 = arith.mulf %64, %63 : vector<32x256xf32>
    %cst_29 = arith.constant 1.000000e+00 : f32
    %66 = vector.broadcast %cst_29 : f32 to vector<32x256xf32>
    %67 = arith.subf %66, %65 : vector<32x256xf32>
    %68 = arith.mulf %57, %57 : vector<32x256xf32>
    %cst_30 = arith.constant -2.50521079E-8 : f32
    %69 = vector.broadcast %cst_30 : f32 to vector<32x256xf32>
    %70 = arith.mulf %69, %68 : vector<32x256xf32>
    %cst_31 = arith.constant 2.75573188E-6 : f32
    %71 = vector.broadcast %cst_31 : f32 to vector<32x256xf32>
    %72 = arith.addf %70, %71 : vector<32x256xf32>
    %73 = arith.mulf %72, %68 : vector<32x256xf32>
    %cst_32 = arith.constant 1.98412701E-4 : f32
    %74 = vector.broadcast %cst_32 : f32 to vector<32x256xf32>
    %75 = arith.subf %73, %74 : vector<32x256xf32>
    %76 = arith.mulf %75, %68 : vector<32x256xf32>
    %cst_33 = arith.constant 0.00833333377 : f32
    %77 = vector.broadcast %cst_33 : f32 to vector<32x256xf32>
    %78 = arith.addf %76, %77 : vector<32x256xf32>
    %79 = arith.mulf %78, %68 : vector<32x256xf32>
    %cst_34 = arith.constant 0.166666672 : f32
    %80 = vector.broadcast %cst_34 : f32 to vector<32x256xf32>
    %81 = arith.subf %79, %80 : vector<32x256xf32>
    %82 = arith.mulf %81, %68 : vector<32x256xf32>
    %cst_35 = arith.constant 1.000000e+00 : f32
    %83 = vector.broadcast %cst_35 : f32 to vector<32x256xf32>
    %84 = arith.addf %82, %83 : vector<32x256xf32>
    %85 = arith.mulf %57, %84 : vector<32x256xf32>
    %86 = arith.mulf %67, %85 : vector<32x256xf32>
    %c0_36 = arith.constant 0 : index
    %c0_37 = arith.constant 0 : index
    %87 = vector.load %arg6[%c0_36, %c0_37] : memref<32x32xf32, #tpu.memory_space<vmem>>, vector<32x32xf32>
    %cst_38 = arith.constant dense<0.000000e+00> : vector<32x256xf32>
    %88 = tpu.matmul %87, %86, %cst_38 {dimension_numbers = #tpu.dot_dimension_numbers<[1], [0], [0], [1], [0, 0, 1, 1], [], []>, precision = #tpu.contract_precision<fp32>} : vector<32x32xf32>, vector<32x256xf32>, vector<32x256xf32> -> vector<32x256xf32>
    %c0_39 = arith.constant 0 : index
    %c0_40 = arith.constant 0 : index
    %89 = vector.load %arg7[%c0_39, %c0_40] : memref<32x1xf32, #tpu.memory_space<vmem>>, vector<32x1xf32>
    %90 = vector.broadcast %89 : vector<32x1xf32> to vector<32x256xf32>
    %91 = arith.addf %88, %90 : vector<32x256xf32>
    %cst_41 = arith.constant 0.318309873 : f32
    %92 = vector.broadcast %cst_41 : f32 to vector<32x256xf32>
    %93 = arith.mulf %91, %92 : vector<32x256xf32>
    %94 = math.roundeven %93 : vector<32x256xf32>
    %cst_42 = arith.constant 3.140625 : f32
    %95 = vector.broadcast %cst_42 : f32 to vector<32x256xf32>
    %96 = arith.mulf %94, %95 : vector<32x256xf32>
    %97 = arith.subf %91, %96 : vector<32x256xf32>
    %cst_43 = arith.constant 9.67653584E-4 : f32
    %98 = vector.broadcast %cst_43 : f32 to vector<32x256xf32>
    %99 = arith.mulf %94, %98 : vector<32x256xf32>
    %100 = arith.subf %97, %99 : vector<32x256xf32>
    %cst_44 = arith.constant 5.000000e-01 : f32
    %101 = vector.broadcast %cst_44 : f32 to vector<32x256xf32>
    %102 = arith.mulf %101, %94 : vector<32x256xf32>
    %103 = math.floor %102 : vector<32x256xf32>
    %cst_45 = arith.constant 2.000000e+00 : f32
    %104 = vector.broadcast %cst_45 : f32 to vector<32x256xf32>
    %105 = arith.mulf %104, %103 : vector<32x256xf32>
    %106 = arith.subf %94, %105 : vector<32x256xf32>
    %cst_46 = arith.constant 2.000000e+00 : f32
    %107 = vector.broadcast %cst_46 : f32 to vector<32x256xf32>
    %108 = arith.mulf %107, %106 : vector<32x256xf32>
    %cst_47 = arith.constant 1.000000e+00 : f32
    %109 = vector.broadcast %cst_47 : f32 to vector<32x256xf32>
    %110 = arith.subf %109, %108 : vector<32x256xf32>
    %111 = arith.mulf %100, %100 : vector<32x256xf32>
    %cst_48 = arith.constant -2.50521079E-8 : f32
    %112 = vector.broadcast %cst_48 : f32 to vector<32x256xf32>
    %113 = arith.mulf %112, %111 : vector<32x256xf32>
    %cst_49 = arith.constant 2.75573188E-6 : f32
    %114 = vector.broadcast %cst_49 : f32 to vector<32x256xf32>
    %115 = arith.addf %113, %114 : vector<32x256xf32>
    %116 = arith.mulf %115, %111 : vector<32x256xf32>
    %cst_50 = arith.constant 1.98412701E-4 : f32
    %117 = vector.broadcast %cst_50 : f32 to vector<32x256xf32>
    %118 = arith.subf %116, %117 : vector<32x256xf32>
    %119 = arith.mulf %118, %111 : vector<32x256xf32>
    %cst_51 = arith.constant 0.00833333377 : f32
    %120 = vector.broadcast %cst_51 : f32 to vector<32x256xf32>
    %121 = arith.addf %119, %120 : vector<32x256xf32>
    %122 = arith.mulf %121, %111 : vector<32x256xf32>
    %cst_52 = arith.constant 0.166666672 : f32
    %123 = vector.broadcast %cst_52 : f32 to vector<32x256xf32>
    %124 = arith.subf %122, %123 : vector<32x256xf32>
    %125 = arith.mulf %124, %111 : vector<32x256xf32>
    %cst_53 = arith.constant 1.000000e+00 : f32
    %126 = vector.broadcast %cst_53 : f32 to vector<32x256xf32>
    %127 = arith.addf %125, %126 : vector<32x256xf32>
    %128 = arith.mulf %100, %127 : vector<32x256xf32>
    %129 = arith.mulf %110, %128 : vector<32x256xf32>
    %c0_54 = arith.constant 0 : index
    %c0_55 = arith.constant 0 : index
    %130 = vector.load %arg8[%c0_54, %c0_55] : memref<3x32xf32, #tpu.memory_space<vmem>>, vector<3x32xf32>
    %cst_56 = arith.constant dense<0.000000e+00> : vector<3x256xf32>
    %131 = tpu.matmul %130, %129, %cst_56 {dimension_numbers = #tpu.dot_dimension_numbers<[1], [0], [0], [1], [0, 0, 1, 1], [], []>, precision = #tpu.contract_precision<fp32>} : vector<3x32xf32>, vector<32x256xf32>, vector<3x256xf32> -> vector<3x256xf32>
    %c0_57 = arith.constant 0 : index
    %c0_58 = arith.constant 0 : index
    %132 = vector.load %arg9[%c0_57, %c0_58] : memref<3x1xf32, #tpu.memory_space<vmem>>, vector<3x1xf32>
    %133 = vector.broadcast %132 : vector<3x1xf32> to vector<3x256xf32>
    %134 = arith.addf %131, %133 : vector<3x256xf32>
    %cst_59 = arith.constant 0.318309873 : f32
    %135 = vector.broadcast %cst_59 : f32 to vector<3x256xf32>
    %136 = arith.mulf %134, %135 : vector<3x256xf32>
    %137 = math.roundeven %136 : vector<3x256xf32>
    %cst_60 = arith.constant 3.140625 : f32
    %138 = vector.broadcast %cst_60 : f32 to vector<3x256xf32>
    %139 = arith.mulf %137, %138 : vector<3x256xf32>
    %140 = arith.subf %134, %139 : vector<3x256xf32>
    %cst_61 = arith.constant 9.67653584E-4 : f32
    %141 = vector.broadcast %cst_61 : f32 to vector<3x256xf32>
    %142 = arith.mulf %137, %141 : vector<3x256xf32>
    %143 = arith.subf %140, %142 : vector<3x256xf32>
    %cst_62 = arith.constant 5.000000e-01 : f32
    %144 = vector.broadcast %cst_62 : f32 to vector<3x256xf32>
    %145 = arith.mulf %144, %137 : vector<3x256xf32>
    %146 = math.floor %145 : vector<3x256xf32>
    %cst_63 = arith.constant 2.000000e+00 : f32
    %147 = vector.broadcast %cst_63 : f32 to vector<3x256xf32>
    %148 = arith.mulf %147, %146 : vector<3x256xf32>
    %149 = arith.subf %137, %148 : vector<3x256xf32>
    %cst_64 = arith.constant 2.000000e+00 : f32
    %150 = vector.broadcast %cst_64 : f32 to vector<3x256xf32>
    %151 = arith.mulf %150, %149 : vector<3x256xf32>
    %cst_65 = arith.constant 1.000000e+00 : f32
    %152 = vector.broadcast %cst_65 : f32 to vector<3x256xf32>
    %153 = arith.subf %152, %151 : vector<3x256xf32>
    %154 = arith.mulf %143, %143 : vector<3x256xf32>
    %cst_66 = arith.constant -2.50521079E-8 : f32
    %155 = vector.broadcast %cst_66 : f32 to vector<3x256xf32>
    %156 = arith.mulf %155, %154 : vector<3x256xf32>
    %cst_67 = arith.constant 2.75573188E-6 : f32
    %157 = vector.broadcast %cst_67 : f32 to vector<3x256xf32>
    %158 = arith.addf %156, %157 : vector<3x256xf32>
    %159 = arith.mulf %158, %154 : vector<3x256xf32>
    %cst_68 = arith.constant 1.98412701E-4 : f32
    %160 = vector.broadcast %cst_68 : f32 to vector<3x256xf32>
    %161 = arith.subf %159, %160 : vector<3x256xf32>
    %162 = arith.mulf %161, %154 : vector<3x256xf32>
    %cst_69 = arith.constant 0.00833333377 : f32
    %163 = vector.broadcast %cst_69 : f32 to vector<3x256xf32>
    %164 = arith.addf %162, %163 : vector<3x256xf32>
    %165 = arith.mulf %164, %154 : vector<3x256xf32>
    %cst_70 = arith.constant 0.166666672 : f32
    %166 = vector.broadcast %cst_70 : f32 to vector<3x256xf32>
    %167 = arith.subf %165, %166 : vector<3x256xf32>
    %168 = arith.mulf %167, %154 : vector<3x256xf32>
    %cst_71 = arith.constant 1.000000e+00 : f32
    %169 = vector.broadcast %cst_71 : f32 to vector<3x256xf32>
    %170 = arith.addf %168, %169 : vector<3x256xf32>
    %171 = arith.mulf %143, %170 : vector<3x256xf32>
    %172 = arith.mulf %153, %171 : vector<3x256xf32>
    %c0_72 = arith.constant 0 : index
    %c0_73 = arith.constant 0 : index
    %173 = vector.load %arg10[%c0_72, %c0_73] : memref<3x256xf32, #tpu.memory_space<vmem>>, vector<3x256xf32>
    tpu.vector_store %arg10[%c0_72, %c0_73], %172 {strides = array<i32>} : memref<3x256xf32, #tpu.memory_space<vmem>>, vector<3x256xf32>,
    return
  }
  func.func @transform_0(%arg0: i32) -> (i32, i32) {
    %c0_i32 = arith.constant 0 : i32
    %c0_i32_0 = arith.constant 0 : i32
    return %c0_i32, %arg0 : i32, i32
  }
  func.func @transform_1(%arg0: i32) -> (i32, i32) {
    %c0_i32 = arith.constant 0 : i32
    %c0_i32_0 = arith.constant 0 : i32
    %c0_i32_1 = arith.constant 0 : i32
    return %c0_i32, %c0_i32_0 : i32, i32
  }
  func.func @transform_2(%arg0: i32) -> (i32, i32) {
    %c0_i32 = arith.constant 0 : i32
    %c0_i32_0 = arith.constant 0 : i32
    %c0_i32_1 = arith.constant 0 : i32
    return %c0_i32, %c0_i32_0 : i32, i32
  }
  func.func @transform_3(%arg0: i32) -> (i32, i32) {
    %c0_i32 = arith.constant 0 : i32
    %c0_i32_0 = arith.constant 0 : i32
    %c0_i32_1 = arith.constant 0 : i32
    return %c0_i32, %c0_i32_0 : i32, i32
  }
  func.func @transform_4(%arg0: i32) -> (i32, i32) {
    %c0_i32 = arith.constant 0 : i32
    %c0_i32_0 = arith.constant 0 : i32
    %c0_i32_1 = arith.constant 0 : i32
    return %c0_i32, %c0_i32_0 : i32, i32
  }
  func.func @transform_5(%arg0: i32) -> (i32, i32) {
    %c0_i32 = arith.constant 0 : i32
    %c0_i32_0 = arith.constant 0 : i32
    %c0_i32_1 = arith.constant 0 : i32
    return %c0_i32, %c0_i32_0 : i32, i32
  }
  func.func @transform_6(%arg0: i32) -> (i32, i32) {
    %c0_i32 = arith.constant 0 : i32
    %c0_i32_0 = arith.constant 0 : i32
    %c0_i32_1 = arith.constant 0 : i32
    return %c0_i32, %c0_i32_0 : i32, i32
  }
  func.func @transform_7(%arg0: i32) -> (i32, i32) {
    %c0_i32 = arith.constant 0 : i32
    %c0_i32_0 = arith.constant 0 : i32
    %c0_i32_1 = arith.constant 0 : i32
    return %c0_i32, %c0_i32_0 : i32, i32
  }
  func.func @transform_8(%arg0: i32) -> (i32, i32) {
    %c0_i32 = arith.constant 0 : i32
    %c0_i32_0 = arith.constant 0 : i32
    %c0_i32_1 = arith.constant 0 : i32
    return %c0_i32, %c0_i32_0 : i32, i32
  }
  func.func @transform_9(%arg0: i32) -> (i32, i32) {
    %c0_i32 = arith.constant 0 : i32
    %c0_i32_0 = arith.constant 0 : i32
    return %c0_i32, %arg0 : i32, i32
  }
}

module attributes {stable_mosaic.version = 11 : i64} {
  func.func @_siren_kernel(%arg0: i32, %arg1: memref<2x256xf32, #tpu.memory_space<vmem>>, %arg2: memref<32x2xf32, #tpu.memory_space<vmem>>, %arg3: memref<32x1xf32, #tpu.memory_space<vmem>>, %arg4: memref<32x32xf32, #tpu.memory_space<vmem>>, %arg5: memref<32x1xf32, #tpu.memory_space<vmem>>, %arg6: memref<32x32xf32, #tpu.memory_space<vmem>>, %arg7: memref<32x1xf32, #tpu.memory_space<vmem>>, %arg8: memref<3x32xf32, #tpu.memory_space<vmem>>, %arg9: memref<3x1xf32, #tpu.memory_space<vmem>>, %arg10: memref<3x256xf32, #tpu.memory_space<vmem>>) attributes {dimension_semantics = [#tpu.dimension_semantics<parallel>], iteration_bounds = array<i64: 2>, scalar_prefetch = 0 : i64, scratch_operands = 0 : i64, tpu.core_type = #tpu.core_type<tc>, window_params = [{transform_indices = @transform_0, window_bounds = array<i64: 2, 256>}, {pipeline_mode = #tpu.pipeline_mode<synchronous>, transform_indices = @transform_1, window_bounds = array<i64: 32, 2>}, {pipeline_mode = #tpu.pipeline_mode<synchronous>, transform_indices = @transform_2, window_bounds = array<i64: 32, 1>}, {pipeline_mode = #tpu.pipeline_mode<synchronous>, transform_indices = @transform_3, window_bounds = array<i64: 32, 32>}, {pipeline_mode = #tpu.pipeline_mode<synchronous>, transform_indices = @transform_4, window_bounds = array<i64: 32, 1>}, {pipeline_mode = #tpu.pipeline_mode<synchronous>, transform_indices = @transform_5, window_bounds = array<i64: 32, 32>}, {pipeline_mode = #tpu.pipeline_mode<synchronous>, transform_indices = @transform_6, window_bounds = array<i64: 32, 1>}, {pipeline_mode = #tpu.pipeline_mode<synchronous>, transform_indices = @transform_7, window_bounds = array<i64: 3, 32>}, {pipeline_mode = #tpu.pipeline_mode<synchronous>, transform_indices = @transform_8, window_bounds = array<i64: 3, 1>}, {transform_indices = @transform_9, window_bounds = array<i64: 3, 256>}]} {
    %c0 = arith.constant 0 : index
    %c0_0 = arith.constant 0 : index
    %0 = vector.load %arg1[%c0, %c0_0] : memref<2x256xf32, #tpu.memory_space<vmem>>, vector<2x256xf32>
    %c0_1 = arith.constant 0 : index
    %c0_2 = arith.constant 0 : index
    %1 = vector.load %arg2[%c0_1, %c0_2] : memref<32x2xf32, #tpu.memory_space<vmem>>, vector<32x2xf32>
    %cst = arith.constant dense<0.000000e+00> : vector<32x256xf32>
    %2 = tpu.matmul %1, %0, %cst {dimension_numbers = #tpu.dot_dimension_numbers<[1], [0], [0], [1], [0, 0, 1, 1], [], []>} : vector<32x2xf32>, vector<2x256xf32>, vector<32x256xf32> -> vector<32x256xf32>
    %c0_3 = arith.constant 0 : index
    %c0_4 = arith.constant 0 : index
    %3 = vector.load %arg3[%c0_3, %c0_4] : memref<32x1xf32, #tpu.memory_space<vmem>>, vector<32x1xf32>
    %4 = vector.broadcast %3 : vector<32x1xf32> to vector<32x256xf32>
    %5 = arith.addf %2, %4 : vector<32x256xf32>
    %cst_5 = arith.constant 0.318309873 : f32
    %6 = vector.broadcast %cst_5 : f32 to vector<32x256xf32>
    %7 = arith.mulf %5, %6 : vector<32x256xf32>
    %8 = math.roundeven %7 : vector<32x256xf32>
    %cst_6 = arith.constant 3.140625 : f32
    %9 = vector.broadcast %cst_6 : f32 to vector<32x256xf32>
    %10 = arith.mulf %8, %9 : vector<32x256xf32>
    %11 = arith.subf %5, %10 : vector<32x256xf32>
    %cst_7 = arith.constant 9.67653584E-4 : f32
    %12 = vector.broadcast %cst_7 : f32 to vector<32x256xf32>
    %13 = arith.mulf %8, %12 : vector<32x256xf32>
    %14 = arith.subf %11, %13 : vector<32x256xf32>
    %cst_8 = arith.constant 5.000000e-01 : f32
    %15 = vector.broadcast %cst_8 : f32 to vector<32x256xf32>
    %16 = arith.mulf %15, %8 : vector<32x256xf32>
    %17 = math.floor %16 : vector<32x256xf32>
    %cst_9 = arith.constant 2.000000e+00 : f32
    %18 = vector.broadcast %cst_9 : f32 to vector<32x256xf32>
    %19 = arith.mulf %18, %17 : vector<32x256xf32>
    %20 = arith.subf %8, %19 : vector<32x256xf32>
    %cst_10 = arith.constant 2.000000e+00 : f32
    %21 = vector.broadcast %cst_10 : f32 to vector<32x256xf32>
    %22 = arith.mulf %21, %20 : vector<32x256xf32>
    %cst_11 = arith.constant 1.000000e+00 : f32
    %23 = vector.broadcast %cst_11 : f32 to vector<32x256xf32>
    %24 = arith.subf %23, %22 : vector<32x256xf32>
    %25 = arith.mulf %14, %14 : vector<32x256xf32>
    %cst_12 = arith.constant -2.50521079E-8 : f32
    %26 = vector.broadcast %cst_12 : f32 to vector<32x256xf32>
    %27 = arith.mulf %26, %25 : vector<32x256xf32>
    %cst_13 = arith.constant 2.75573188E-6 : f32
    %28 = vector.broadcast %cst_13 : f32 to vector<32x256xf32>
    %29 = arith.addf %27, %28 : vector<32x256xf32>
    %30 = arith.mulf %29, %25 : vector<32x256xf32>
    %cst_14 = arith.constant 1.98412701E-4 : f32
    %31 = vector.broadcast %cst_14 : f32 to vector<32x256xf32>
    %32 = arith.subf %30, %31 : vector<32x256xf32>
    %33 = arith.mulf %32, %25 : vector<32x256xf32>
    %cst_15 = arith.constant 0.00833333377 : f32
    %34 = vector.broadcast %cst_15 : f32 to vector<32x256xf32>
    %35 = arith.addf %33, %34 : vector<32x256xf32>
    %36 = arith.mulf %35, %25 : vector<32x256xf32>
    %cst_16 = arith.constant 0.166666672 : f32
    %37 = vector.broadcast %cst_16 : f32 to vector<32x256xf32>
    %38 = arith.subf %36, %37 : vector<32x256xf32>
    %39 = arith.mulf %38, %25 : vector<32x256xf32>
    %cst_17 = arith.constant 1.000000e+00 : f32
    %40 = vector.broadcast %cst_17 : f32 to vector<32x256xf32>
    %41 = arith.addf %39, %40 : vector<32x256xf32>
    %42 = arith.mulf %14, %41 : vector<32x256xf32>
    %43 = arith.mulf %24, %42 : vector<32x256xf32>
    %c0_18 = arith.constant 0 : index
    %c0_19 = arith.constant 0 : index
    %44 = vector.load %arg4[%c0_18, %c0_19] : memref<32x32xf32, #tpu.memory_space<vmem>>, vector<32x32xf32>
    %cst_20 = arith.constant dense<0.000000e+00> : vector<32x256xf32>
    %45 = tpu.matmul %44, %43, %cst_20 {dimension_numbers = #tpu.dot_dimension_numbers<[1], [0], [0], [1], [0, 0, 1, 1], [], []>} : vector<32x32xf32>, vector<32x256xf32>, vector<32x256xf32> -> vector<32x256xf32>
    %c0_21 = arith.constant 0 : index
    %c0_22 = arith.constant 0 : index
    %46 = vector.load %arg5[%c0_21, %c0_22] : memref<32x1xf32, #tpu.memory_space<vmem>>, vector<32x1xf32>
    %47 = vector.broadcast %46 : vector<32x1xf32> to vector<32x256xf32>
    %48 = arith.addf %45, %47 : vector<32x256xf32>
    %cst_23 = arith.constant 0.318309873 : f32
    %49 = vector.broadcast %cst_23 : f32 to vector<32x256xf32>
    %50 = arith.mulf %48, %49 : vector<32x256xf32>
    %51 = math.roundeven %50 : vector<32x256xf32>
    %cst_24 = arith.constant 3.140625 : f32
    %52 = vector.broadcast %cst_24 : f32 to vector<32x256xf32>
    %53 = arith.mulf %51, %52 : vector<32x256xf32>
    %54 = arith.subf %48, %53 : vector<32x256xf32>
    %cst_25 = arith.constant 9.67653584E-4 : f32
    %55 = vector.broadcast %cst_25 : f32 to vector<32x256xf32>
    %56 = arith.mulf %51, %55 : vector<32x256xf32>
    %57 = arith.subf %54, %56 : vector<32x256xf32>
    %cst_26 = arith.constant 5.000000e-01 : f32
    %58 = vector.broadcast %cst_26 : f32 to vector<32x256xf32>
    %59 = arith.mulf %58, %51 : vector<32x256xf32>
    %60 = math.floor %59 : vector<32x256xf32>
    %cst_27 = arith.constant 2.000000e+00 : f32
    %61 = vector.broadcast %cst_27 : f32 to vector<32x256xf32>
    %62 = arith.mulf %61, %60 : vector<32x256xf32>
    %63 = arith.subf %51, %62 : vector<32x256xf32>
    %cst_28 = arith.constant 2.000000e+00 : f32
    %64 = vector.broadcast %cst_28 : f32 to vector<32x256xf32>
    %65 = arith.mulf %64, %63 : vector<32x256xf32>
    %cst_29 = arith.constant 1.000000e+00 : f32
    %66 = vector.broadcast %cst_29 : f32 to vector<32x256xf32>
    %67 = arith.subf %66, %65 : vector<32x256xf32>
    %68 = arith.mulf %57, %57 : vector<32x256xf32>
    %cst_30 = arith.constant -2.50521079E-8 : f32
    %69 = vector.broadcast %cst_30 : f32 to vector<32x256xf32>
    %70 = arith.mulf %69, %68 : vector<32x256xf32>
    %cst_31 = arith.constant 2.75573188E-6 : f32
    %71 = vector.broadcast %cst_31 : f32 to vector<32x256xf32>
    %72 = arith.addf %70, %71 : vector<32x256xf32>
    %73 = arith.mulf %72, %68 : vector<32x256xf32>
    %cst_32 = arith.constant 1.98412701E-4 : f32
    %74 = vector.broadcast %cst_32 : f32 to vector<32x256xf32>
    %75 = arith.subf %73, %74 : vector<32x256xf32>
    %76 = arith.mulf %75, %68 : vector<32x256xf32>
    %cst_33 = arith.constant 0.00833333377 : f32
    %77 = vector.broadcast %cst_33 : f32 to vector<32x256xf32>
    %78 = arith.addf %76, %77 : vector<32x256xf32>
    %79 = arith.mulf %78, %68 : vector<32x256xf32>
    %cst_34 = arith.constant 0.166666672 : f32
    %80 = vector.broadcast %cst_34 : f32 to vector<32x256xf32>
    %81 = arith.subf %79, %80 : vector<32x256xf32>
    %82 = arith.mulf %81, %68 : vector<32x256xf32>
    %cst_35 = arith.constant 1.000000e+00 : f32
    %83 = vector.broadcast %cst_35 : f32 to vector<32x256xf32>
    %84 = arith.addf %82, %83 : vector<32x256xf32>
    %85 = arith.mulf %57, %84 : vector<32x256xf32>
    %86 = arith.mulf %67, %85 : vector<32x256xf32>
    %c0_36 = arith.constant 0 : index
    %c0_37 = arith.constant 0 : index
    %87 = vector.load %arg6[%c0_36, %c0_37] : memref<32x32xf32, #tpu.memory_space<vmem>>, vector<32x32xf32>
    %cst_38 = arith.constant dense<0.000000e+00> : vector<32x256xf32>
    %88 = tpu.matmul %87, %86, %cst_38 {dimension_numbers = #tpu.dot_dimension_numbers<[1], [0], [0], [1], [0, 0, 1, 1], [], []>} : vector<32x32xf32>, vector<32x256xf32>, vector<32x256xf32> -> vector<32x256xf32>
    %c0_39 = arith.constant 0 : index
    %c0_40 = arith.constant 0 : index
    %89 = vector.load %arg7[%c0_39, %c0_40] : memref<32x1xf32, #tpu.memory_space<vmem>>, vector<32x1xf32>
    %90 = vector.broadcast %89 : vector<32x1xf32> to vector<32x256xf32>
    %91 = arith.addf %88, %90 : vector<32x256xf32>
    %cst_41 = arith.constant 0.318309873 : f32
    %92 = vector.broadcast %cst_41 : f32 to vector<32x256xf32>
    %93 = arith.mulf %91, %92 : vector<32x256xf32>
    %94 = math.roundeven %93 : vector<32x256xf32>
    %cst_42 = arith.constant 3.140625 : f32
    %95 = vector.broadcast %cst_42 : f32 to vector<32x256xf32>
    %96 = arith.mulf %94, %95 : vector<32x256xf32>
    %97 = arith.subf %91, %96 : vector<32x256xf32>
    %cst_43 = arith.constant 9.67653584E-4 : f32
    %98 = vector.broadcast %cst_43 : f32 to vector<32x256xf32>
    %99 = arith.mulf %94, %98 : vector<32x256xf32>
    %100 = arith.subf %97, %99 : vector<32x256xf32>
    %cst_44 = arith.constant 5.000000e-01 : f32
    %101 = vector.broadcast %cst_44 : f32 to vector<32x256xf32>
    %102 = arith.mulf %101, %94 : vector<32x256xf32>
    %103 = math.floor %102 : vector<32x256xf32>
    %cst_45 = arith.constant 2.000000e+00 : f32
    %104 = vector.broadcast %cst_45 : f32 to vector<32x256xf32>
    %105 = arith.mulf %104, %103 : vector<32x256xf32>
    %106 = arith.subf %94, %105 : vector<32x256xf32>
    %cst_46 = arith.constant 2.000000e+00 : f32
    %107 = vector.broadcast %cst_46 : f32 to vector<32x256xf32>
    %108 = arith.mulf %107, %106 : vector<32x256xf32>
    %cst_47 = arith.constant 1.000000e+00 : f32
    %109 = vector.broadcast %cst_47 : f32 to vector<32x256xf32>
    %110 = arith.subf %109, %108 : vector<32x256xf32>
    %111 = arith.mulf %100, %100 : vector<32x256xf32>
    %cst_48 = arith.constant -2.50521079E-8 : f32
    %112 = vector.broadcast %cst_48 : f32 to vector<32x256xf32>
    %113 = arith.mulf %112, %111 : vector<32x256xf32>
    %cst_49 = arith.constant 2.75573188E-6 : f32
    %114 = vector.broadcast %cst_49 : f32 to vector<32x256xf32>
    %115 = arith.addf %113, %114 : vector<32x256xf32>
    %116 = arith.mulf %115, %111 : vector<32x256xf32>
    %cst_50 = arith.constant 1.98412701E-4 : f32
    %117 = vector.broadcast %cst_50 : f32 to vector<32x256xf32>
    %118 = arith.subf %116, %117 : vector<32x256xf32>
    %119 = arith.mulf %118, %111 : vector<32x256xf32>
    %cst_51 = arith.constant 0.00833333377 : f32
    %120 = vector.broadcast %cst_51 : f32 to vector<32x256xf32>
    %121 = arith.addf %119, %120 : vector<32x256xf32>
    %122 = arith.mulf %121, %111 : vector<32x256xf32>
    %cst_52 = arith.constant 0.166666672 : f32
    %123 = vector.broadcast %cst_52 : f32 to vector<32x256xf32>
    %124 = arith.subf %122, %123 : vector<32x256xf32>
    %125 = arith.mulf %124, %111 : vector<32x256xf32>
    %cst_53 = arith.constant 1.000000e+00 : f32
    %126 = vector.broadcast %cst_53 : f32 to vector<32x256xf32>
    %127 = arith.addf %125, %126 : vector<32x256xf32>
    %128 = arith.mulf %100, %127 : vector<32x256xf32>
    %129 = arith.mulf %110, %128 : vector<32x256xf32>
    %c0_54 = arith.constant 0 : index
    %c0_55 = arith.constant 0 : index
    %130 = vector.load %arg8[%c0_54, %c0_55] : memref<3x32xf32, #tpu.memory_space<vmem>>, vector<3x32xf32>
    %cst_56 = arith.constant dense<0.000000e+00> : vector<3x256xf32>
    %131 = tpu.matmul %130, %129, %cst_56 {dimension_numbers = #tpu.dot_dimension_numbers<[1], [0], [0], [1], [0, 0, 1, 1], [], []>} : vector<3x32xf32>, vector<32x256xf32>, vector<3x256xf32> -> vector<3x256xf32>
    %c0_57 = arith.constant 0 : index
    %c0_58 = arith.constant 0 : index
    %132 = vector.load %arg9[%c0_57, %c0_58] : memref<3x1xf32, #tpu.memory_space<vmem>>, vector<3x1xf32>
    %133 = vector.broadcast %132 : vector<3x1xf32> to vector<3x256xf32>
    %134 = arith.addf %131, %133 : vector<3x256xf32>
    %cst_59 = arith.constant 0.318309873 : f32
    %135 = vector.broadcast %cst_59 : f32 to vector<3x256xf32>
    %136 = arith.mulf %134, %135 : vector<3x256xf32>
    %137 = math.roundeven %136 : vector<3x256xf32>
    %cst_60 = arith.constant 3.140625 : f32
    %138 = vector.broadcast %cst_60 : f32 to vector<3x256xf32>
    %139 = arith.mulf %137, %138 : vector<3x256xf32>
    %140 = arith.subf %134, %139 : vector<3x256xf32>
    %cst_61 = arith.constant 9.67653584E-4 : f32
    %141 = vector.broadcast %cst_61 : f32 to vector<3x256xf32>
    %142 = arith.mulf %137, %141 : vector<3x256xf32>
    %143 = arith.subf %140, %142 : vector<3x256xf32>
    %cst_62 = arith.constant 5.000000e-01 : f32
    %144 = vector.broadcast %cst_62 : f32 to vector<3x256xf32>
    %145 = arith.mulf %144, %137 : vector<3x256xf32>
    %146 = math.floor %145 : vector<3x256xf32>
    %cst_63 = arith.constant 2.000000e+00 : f32
    %147 = vector.broadcast %cst_63 : f32 to vector<3x256xf32>
    %148 = arith.mulf %147, %146 : vector<3x256xf32>
    %149 = arith.subf %137, %148 : vector<3x256xf32>
    %cst_64 = arith.constant 2.000000e+00 : f32
    %150 = vector.broadcast %cst_64 : f32 to vector<3x256xf32>
    %151 = arith.mulf %150, %149 : vector<3x256xf32>
    %cst_65 = arith.constant 1.000000e+00 : f32
    %152 = vector.broadcast %cst_65 : f32 to vector<3x256xf32>
    %153 = arith.subf %152, %151 : vector<3x256xf32>
    %154 = arith.mulf %143, %143 : vector<3x256xf32>
    %cst_66 = arith.constant -2.50521079E-8 : f32
    %155 = vector.broadcast %cst_66 : f32 to vector<3x256xf32>
    %156 = arith.mulf %155, %154 : vector<3x256xf32>
    %cst_67 = arith.constant 2.75573188E-6 : f32
    %157 = vector.broadcast %cst_67 : f32 to vector<3x256xf32>
    %158 = arith.addf %156, %157 : vector<3x256xf32>
    %159 = arith.mulf %158, %154 : vector<3x256xf32>
    %cst_68 = arith.constant 1.98412701E-4 : f32
    %160 = vector.broadcast %cst_68 : f32 to vector<3x256xf32>
    %161 = arith.subf %159, %160 : vector<3x256xf32>
    %162 = arith.mulf %161, %154 : vector<3x256xf32>
    %cst_69 = arith.constant 0.00833333377 : f32
    %163 = vector.broadcast %cst_69 : f32 to vector<3x256xf32>
    %164 = arith.addf %162, %163 : vector<3x256xf32>
    %165 = arith.mulf %164, %154 : vector<3x256xf32>
    %cst_70 = arith.constant 0.166666672 : f32
    %166 = vector.broadcast %cst_70 : f32 to vector<3x256xf32>
    %167 = arith.subf %165, %166 : vector<3x256xf32>
    %168 = arith.mulf %167, %154 : vector<3x256xf32>
    %cst_71 = arith.constant 1.000000e+00 : f32
    %169 = vector.broadcast %cst_71 : f32 to vector<3x256xf32>
    %170 = arith.addf %168, %169 : vector<3x256xf32>
    %171 = arith.mulf %143, %170 : vector<3x256xf32>
    %172 = arith.mulf %153, %171 : vector<3x256xf32>
    %c0_72 = arith.constant 0 : index
    %c0_73 = arith.constant 0 : index
    %173 = vector.load %arg10[%c0_72, %c0_73] : memref<3x256xf32, #tpu.memory_space<vmem>>, vector<3x256xf32>
    tpu.vector_store %arg10[%c0_72, %c0_73], %172 {strides = array<i32>} : memref<3x256xf32, #tpu.memory_space<vmem>>, vector<3x256xf32>,
    return
  }
  func.func @transform_0(%arg0: i32) -> (i32, i32) {
    %c0_i32 = arith.constant 0 : i32
    %c0_i32_0 = arith.constant 0 : i32
    return %c0_i32, %arg0 : i32, i32
  }
  func.func @transform_1(%arg0: i32) -> (i32, i32) {
    %c0_i32 = arith.constant 0 : i32
    %c0_i32_0 = arith.constant 0 : i32
    %c0_i32_1 = arith.constant 0 : i32
    return %c0_i32, %c0_i32_0 : i32, i32
  }
  func.func @transform_2(%arg0: i32) -> (i32, i32) {
    %c0_i32 = arith.constant 0 : i32
    %c0_i32_0 = arith.constant 0 : i32
    %c0_i32_1 = arith.constant 0 : i32
    return %c0_i32, %c0_i32_0 : i32, i32
  }
  func.func @transform_3(%arg0: i32) -> (i32, i32) {
    %c0_i32 = arith.constant 0 : i32
    %c0_i32_0 = arith.constant 0 : i32
    %c0_i32_1 = arith.constant 0 : i32
    return %c0_i32, %c0_i32_0 : i32, i32
  }
  func.func @transform_4(%arg0: i32) -> (i32, i32) {
    %c0_i32 = arith.constant 0 : i32
    %c0_i32_0 = arith.constant 0 : i32
    %c0_i32_1 = arith.constant 0 : i32
    return %c0_i32, %c0_i32_0 : i32, i32
  }
  func.func @transform_5(%arg0: i32) -> (i32, i32) {
    %c0_i32 = arith.constant 0 : i32
    %c0_i32_0 = arith.constant 0 : i32
    %c0_i32_1 = arith.constant 0 : i32
    return %c0_i32, %c0_i32_0 : i32, i32
  }
  func.func @transform_6(%arg0: i32) -> (i32, i32) {
    %c0_i32 = arith.constant 0 : i32
    %c0_i32_0 = arith.constant 0 : i32
    %c0_i32_1 = arith.constant 0 : i32
    return %c0_i32, %c0_i32_0 : i32, i32
  }
  func.func @transform_7(%arg0: i32) -> (i32, i32) {
    %c0_i32 = arith.constant 0 : i32
    %c0_i32_0 = arith.constant 0 : i32
    %c0_i32_1 = arith.constant 0 : i32
    return %c0_i32, %c0_i32_0 : i32, i32
  }
  func.func @transform_8(%arg0: i32) -> (i32, i32) {
    %c0_i32 = arith.constant 0 : i32
    %c0_i32_0 = arith.constant 0 : i32
    %c0_i32_1 = arith.constant 0 : i32
    return %c0_i32, %c0_i32_0 : i32, i32
  }
  func.func @transform_9(%arg0: i32) -> (i32, i32) {
    %c0_i32 = arith.constant 0 : i32
    %c0_i32_0 = arith.constant 0 : i32
    return %c0_i32, %arg0 : i32, i32
  }
}

</mosaic_0001>

<llo_original>
// kernel: tpu_custom_call.1
$region0: #{tpu_custom_call.1}
  #allocation0 [shape = 'u32[]', space=smem, size = 0x4, offset = 0x4, fixed_abs, tag = 'smem constant byte address 0x4 - core index']
  #allocation1 [shape = 'u32[72,128]{1,0:T(1,128)}', space=vmem, size = 0x9000, scoped, tag = 'internal scratch']
  %s0 = inlined_call_operand.vmem [shape: f32[2,512], index: 0, kind: input, shape index: {}]
  %s1 = inlined_call_operand.vmem [shape: f32[32,2], index: 1, kind: input, shape index: {}]
  %s2 = inlined_call_operand.vmem [shape: f32[32,1], index: 2, kind: input, shape index: {}]
  %s3 = inlined_call_operand.vmem [shape: f32[32,32], index: 3, kind: input, shape index: {}]
  %s4 = inlined_call_operand.vmem [shape: f32[32,1], index: 4, kind: input, shape index: {}]
  %s5 = inlined_call_operand.vmem [shape: f32[32,32], index: 5, kind: input, shape index: {}]
  %s6 = inlined_call_operand.vmem [shape: f32[32,1], index: 6, kind: input, shape index: {}]
  %s7 = inlined_call_operand.vmem [shape: f32[3,32], index: 7, kind: input, shape index: {}]
  %s8 = inlined_call_operand.vmem [shape: f32[3,1], index: 8, kind: input, shape index: {}]
  %s9 = inlined_call_operand.hbm [shape: f32[3,512], index: 9, kind: output, shape index: {}]
  %s10 = sld [smem:[#allocation0]]
  $region69: #{tpu_custom_call.1} parent=0
    _
  %s12 = ssub.s32 1, %s10
  %s13 = scalar_select 0, %s12, %s10
  $region1: #{tpu_custom_call.1} parent=0
    #allocation2 [shape = 'u8[8192]{0}', space=vmem, size = 0x2000, scoped, tag = 'output window, operand 0']
    #allocation3 [shape = 's32[2]{0}', space=sflag, size = 0x8, scoped, tag = 'scoped memory for tpu_custom_call.1']
    %14 = vsyncpa [#allocation3], 0
    %s15 = scalar_lea.sflag [#allocation3], 1
    %16 = vsyncpa %s15, 0
    loop: start=0, step=1, limit=4
    $region2: #{tpu_custom_call.1} parent=1 // loop_pre_header
      _
    $region3: #{tpu_custom_call.1} parent=1 // loop_header
      %s18 = sphi 0, %s22
      %p19 = scmp.ge.s32.totalorder %s18, 4
      %s28 = sphi 0, %s30
      %s31 = sphi 0, %s28
      %s32 = sphi 0, %s31
      %s48 = sphi 0, %s32
      %s52 = sphi 0, %s52
      %s54 = sphi 0, %s52
      %s55 = sphi 0, %s54
      %s69 = sphi 0, %s55
      %s73 = sphi 0, %s73
      %s75 = sphi 0, %s73
      %s76 = sphi 0, %s75
      %s90 = sphi 0, %s76
      %s94 = sphi 0, %s94
      %s96 = sphi 0, %s94
      %s97 = sphi 0, %s96
      %s111 = sphi 0, %s97
      %s115 = sphi 0, %s115
      %s117 = sphi 0, %s115
      %s118 = sphi 0, %s117
      %s132 = sphi 0, %s118
      %s136 = sphi 0, %s136
      %s138 = sphi 0, %s136
      %s139 = sphi 0, %s138
      %s153 = sphi 0, %s139
      %s157 = sphi 0, %s157
      %s159 = sphi 0, %s157
      %s160 = sphi 0, %s159
      %s174 = sphi 0, %s160
      %s178 = sphi 0, %s178
      %s180 = sphi 0, %s178
      %s181 = sphi 0, %s180
      %s195 = sphi 0, %s181
      %s199 = sphi 0, %s199
      %s201 = sphi 0, %s199
      %s202 = sphi 0, %s201
      %s216 = sphi 0, %s202
      %s222 = sphi 0, %s224
      %s225 = sphi 0, %s222
      %s226 = sphi 0, %s225
      %s242 = sphi 0, %s226
    $region4: #{tpu_custom_call.1} parent=1 // loop_header_branch
      %21 = sbr.rel (%p19) target = $region8
    $region5: #{tpu_custom_call.1} parent=1 // loop_body
      %s23 = ssub.s32 %s18, 1
      %s24 = ssub.s32 %s18, 2
      %s25 = sadd.s32 %s18, 1
      %s26 = ssub.s32 %s18, %s25
      %p27 = scmp.eq.s32.totalorder %s26, 0
      %s29 = sadd.s32 %s28, 1
      %s30 = scalar_select %p27, %s28, %s29
      %p33 = pneg %p27
      %p34 = scmp.eq.s32.totalorder %s18, 1
      %p35 = por %p33, %p34
      %p36 = scmp.ne.s32.totalorder %s28, %s31
      %p37 = scmp.eq.s32.totalorder %s18, 0
      %p38 = por %p36, %p37
      %p39 = scmp.ne.s32.totalorder %s28, %s31
      %p40 = scmp.eq.s32.totalorder %s23, 1
      %p41 = por %p39, %p40
      %p42 = scmp.ne.s32.totalorder %s31, %s32
      %p43 = scmp.eq.s32.totalorder %s23, 0
      %p44 = por %p42, %p43
      %p45 = scmp.ne.s32.totalorder %s31, %s32
      %p46 = scmp.eq.s32.totalorder %s24, 1
      %p47 = por %p45, %p46
      %p49 = scmp.ne.s32.totalorder %s32, %s48
      %p50 = scmp.eq.s32.totalorder %s24, 0
      %p51 = por %p49, %p50
      %s53 = sadd.s32 %s52, 1
      %p56 = scmp.eq.s32.totalorder %s18, 1
      %p57 = scmp.ne.s32.totalorder %s52, %s54
      %p58 = scmp.eq.s32.totalorder %s18, 0
      %p59 = por %p57, %p58
      %p60 = scmp.ne.s32.totalorder %s52, %s54
      %p61 = scmp.eq.s32.totalorder %s23, 1
      %p62 = por %p60, %p61
      %p63 = scmp.ne.s32.totalorder %s54, %s55
      %p64 = scmp.eq.s32.totalorder %s23, 0
      %p65 = por %p63, %p64
      %p66 = scmp.ne.s32.totalorder %s54, %s55
      %p67 = scmp.eq.s32.totalorder %s24, 1
      %p68 = por %p66, %p67
      %p70 = scmp.ne.s32.totalorder %s55, %s69
      %p71 = scmp.eq.s32.totalorder %s24, 0
      %p72 = por %p70, %p71
      %s74 = sadd.s32 %s73, 1
      %p77 = scmp.eq.s32.totalorder %s18, 1
      %p78 = scmp.ne.s32.totalorder %s73, %s75
      %p79 = scmp.eq.s32.totalorder %s18, 0
      %p80 = por %p78, %p79
      %p81 = scmp.ne.s32.totalorder %s73, %s75
      %p82 = scmp.eq.s32.totalorder %s23, 1
      %p83 = por %p81, %p82
      %p84 = scmp.ne.s32.totalorder %s75, %s76
      %p85 = scmp.eq.s32.totalorder %s23, 0
      %p86 = por %p84, %p85
      %p87 = scmp.ne.s32.totalorder %s75, %s76
      %p88 = scmp.eq.s32.totalorder %s24, 1
      %p89 = por %p87, %p88
      %p91 = scmp.ne.s32.totalorder %s76, %s90
      %p92 = scmp.eq.s32.totalorder %s24, 0
      %p93 = por %p91, %p92
      %s95 = sadd.s32 %s94, 1
      %p98 = scmp.eq.s32.totalorder %s18, 1
      %p99 = scmp.ne.s32.totalorder %s94, %s96
      %p100 = scmp.eq.s32.totalorder %s18, 0
      %p101 = por %p99, %p100
      %p102 = scmp.ne.s32.totalorder %s94, %s96
      %p103 = scmp.eq.s32.totalorder %s23, 1
      %p104 = por %p102, %p103
      %p105 = scmp.ne.s32.totalorder %s96, %s97
      %p106 = scmp.eq.s32.totalorder %s23, 0
      %p107 = por %p105, %p106
      %p108 = scmp.ne.s32.totalorder %s96, %s97
      %p109 = scmp.eq.s32.totalorder %s24, 1
      %p110 = por %p108, %p109
      %p112 = scmp.ne.s32.totalorder %s97, %s111
      %p113 = scmp.eq.s32.totalorder %s24, 0
      %p114 = por %p112, %p113
      %s116 = sadd.s32 %s115, 1
      %p119 = scmp.eq.s32.totalorder %s18, 1
      %p120 = scmp.ne.s32.totalorder %s115, %s117
      %p121 = scmp.eq.s32.totalorder %s18, 0
      %p122 = por %p120, %p121
      %p123 = scmp.ne.s32.totalorder %s115, %s117
      %p124 = scmp.eq.s32.totalorder %s23, 1
      %p125 = por %p123, %p124
      %p126 = scmp.ne.s32.totalorder %s117, %s118
      %p127 = scmp.eq.s32.totalorder %s23, 0
      %p128 = por %p126, %p127
      %p129 = scmp.ne.s32.totalorder %s117, %s118
      %p130 = scmp.eq.s32.totalorder %s24, 1
      %p131 = por %p129, %p130
      %p133 = scmp.ne.s32.totalorder %s118, %s132
      %p134 = scmp.eq.s32.totalorder %s24, 0
      %p135 = por %p133, %p134
      %s137 = sadd.s32 %s136, 1
      %p140 = scmp.eq.s32.totalorder %s18, 1
      %p141 = scmp.ne.s32.totalorder %s136, %s138
      %p142 = scmp.eq.s32.totalorder %s18, 0
      %p143 = por %p141, %p142
      %p144 = scmp.ne.s32.totalorder %s136, %s138
      %p145 = scmp.eq.s32.totalorder %s23, 1
      %p146 = por %p144, %p145
      %p147 = scmp.ne.s32.totalorder %s138, %s139
      %p148 = scmp.eq.s32.totalorder %s23, 0
      %p149 = por %p147, %p148
      %p150 = scmp.ne.s32.totalorder %s138, %s139
      %p151 = scmp.eq.s32.totalorder %s24, 1
      %p152 = por %p150, %p151
      %p154 = scmp.ne.s32.totalorder %s139, %s153
      %p155 = scmp.eq.s32.totalorder %s24, 0
      %p156 = por %p154, %p155
      %s158 = sadd.s32 %s157, 1
      %p161 = scmp.eq.s32.totalorder %s18, 1
      %p162 = scmp.ne.s32.totalorder %s157, %s159
      %p163 = scmp.eq.s32.totalorder %s18, 0
      %p164 = por %p162, %p163
      %p165 = scmp.ne.s32.totalorder %s157, %s159
      %p166 = scmp.eq.s32.totalorder %s23, 1
      %p167 = por %p165, %p166
      %p168 = scmp.ne.s32.totalorder %s159, %s160
      %p169 = scmp.eq.s32.totalorder %s23, 0
      %p170 = por %p168, %p169
      %p171 = scmp.ne.s32.totalorder %s159, %s160
      %p172 = scmp.eq.s32.totalorder %s24, 1
      %p173 = por %p171, %p172
      %p175 = scmp.ne.s32.totalorder %s160, %s174
      %p176 = scmp.eq.s32.totalorder %s24, 0
      %p177 = por %p175, %p176
      %s179 = sadd.s32 %s178, 1
      %p182 = scmp.eq.s32.totalorder %s18, 1
      %p183 = scmp.ne.s32.totalorder %s178, %s180
      %p184 = scmp.eq.s32.totalorder %s18, 0
      %p185 = por %p183, %p184
      %p186 = scmp.ne.s32.totalorder %s178, %s180
      %p187 = scmp.eq.s32.totalorder %s23, 1
      %p188 = por %p186, %p187
      %p189 = scmp.ne.s32.totalorder %s180, %s181
      %p190 = scmp.eq.s32.totalorder %s23, 0
      %p191 = por %p189, %p190
      %p192 = scmp.ne.s32.totalorder %s180, %s181
      %p193 = scmp.eq.s32.totalorder %s24, 1
      %p194 = por %p192, %p193
      %p196 = scmp.ne.s32.totalorder %s181, %s195
      %p197 = scmp.eq.s32.totalorder %s24, 0
      %p198 = por %p196, %p197
      %s200 = sadd.s32 %s199, 1
      %p203 = scmp.eq.s32.totalorder %s18, 1
      %p204 = scmp.ne.s32.totalorder %s199, %s201
      %p205 = scmp.eq.s32.totalorder %s18, 0
      %p206 = por %p204, %p205
      %p207 = scmp.ne.s32.totalorder %s199, %s201
      %p208 = scmp.eq.s32.totalorder %s23, 1
      %p209 = por %p207, %p208
      %p210 = scmp.ne.s32.totalorder %s201, %s202
      %p211 = scmp.eq.s32.totalorder %s23, 0
      %p212 = por %p210, %p211
      %p213 = scmp.ne.s32.totalorder %s201, %s202
      %p214 = scmp.eq.s32.totalorder %s24, 1
      %p215 = por %p213, %p214
      %p217 = scmp.ne.s32.totalorder %s202, %s216
      %p218 = scmp.eq.s32.totalorder %s24, 0
      %p219 = por %p217, %p218
      %s220 = ssub.s32 %s18, %s25
      %p221 = scmp.eq.s32.totalorder %s220, 0
      %s223 = sadd.s32 %s222, 1
      %s224 = scalar_select %p221, %s222, %s223
      %p227 = pneg %p221
      %p228 = scmp.eq.s32.totalorder %s18, 1
      %p229 = por %p227, %p228
      %p230 = scmp.ne.s32.totalorder %s222, %s225
      %p231 = scmp.eq.s32.totalorder %s18, 0
      %p232 = por %p230, %p231
      %p233 = scmp.ne.s32.totalorder %s222, %s225
      %p234 = scmp.eq.s32.totalorder %s23, 1
      %p235 = por %p233, %p234
      %p236 = scmp.ne.s32.totalorder %s225, %s226
      %p237 = scmp.eq.s32.totalorder %s23, 0
      %p238 = por %p236, %p237
      %p239 = scmp.ne.s32.totalorder %s225, %s226
      %p240 = scmp.eq.s32.totalorder %s24, 1
      %p241 = por %p239, %p240
      %p243 = scmp.ne.s32.totalorder %s226, %s242
      %p244 = scmp.eq.s32.totalorder %s24, 0
      %p245 = por %p243, %p244
      %p246 = scmp.le.s32.totalorder 1, %s18
      %p247 = scmp.lt.s32.totalorder %s18, 3
      %p248 = pnand %p246, %p247
      %p249 = pneg %p248
      // Predicated region
      $region9: #{tpu_custom_call.1} parent=5 // pred_check
        _
      $region10: #{tpu_custom_call.1} parent=5 // pred_check_branch
        %251 = sbr.rel (%p248) target = $region12
      $region11: #{tpu_custom_call.1} parent=5 // pred_region
        %s252 = ssub.s32 %s18, 1
        // Predicated region
        $region13: #{tpu_custom_call.1} parent=11 // pred_check
          %p253 = pneg %p65
        $region14: #{tpu_custom_call.1} parent=11 // pred_check_branch
          %255 = sbr.rel (%p253) target = $region16
        $region15: #{tpu_custom_call.1} parent=11 // pred_region
          _
        $region16: #{tpu_custom_call.1} parent=11 // pred_fallthru
          _
        // Predicated region
        $region17: #{tpu_custom_call.1} parent=11 // pred_check
          %p256 = pneg %p86
        $region18: #{tpu_custom_call.1} parent=11 // pred_check_branch
          %258 = sbr.rel (%p256) target = $region20
        $region19: #{tpu_custom_call.1} parent=11 // pred_region
          _
        $region20: #{tpu_custom_call.1} parent=11 // pred_fallthru
          _
        // Predicated region
        $region21: #{tpu_custom_call.1} parent=11 // pred_check
          %p259 = pneg %p107
        $region22: #{tpu_custom_call.1} parent=11 // pred_check_branch
          %261 = sbr.rel (%p259) target = $region24
        $region23: #{tpu_custom_call.1} parent=11 // pred_region
          _
        $region24: #{tpu_custom_call.1} parent=11 // pred_fallthru
          _
        // Predicated region
        $region25: #{tpu_custom_call.1} parent=11 // pred_check
          %p262 = pneg %p128
        $region26: #{tpu_custom_call.1} parent=11 // pred_check_branch
          %264 = sbr.rel (%p262) target = $region28
        $region27: #{tpu_custom_call.1} parent=11 // pred_region
          _
        $region28: #{tpu_custom_call.1} parent=11 // pred_fallthru
          _
        // Predicated region
        $region29: #{tpu_custom_call.1} parent=11 // pred_check
          %p265 = pneg %p149
        $region30: #{tpu_custom_call.1} parent=11 // pred_check_branch
          %267 = sbr.rel (%p265) target = $region32
        $region31: #{tpu_custom_call.1} parent=11 // pred_region
          _
        $region32: #{tpu_custom_call.1} parent=11 // pred_fallthru
          _
        // Predicated region
        $region33: #{tpu_custom_call.1} parent=11 // pred_check
          %p268 = pneg %p170
        $region34: #{tpu_custom_call.1} parent=11 // pred_check_branch
          %270 = sbr.rel (%p268) target = $region36
        $region35: #{tpu_custom_call.1} parent=11 // pred_region
          _
        $region36: #{tpu_custom_call.1} parent=11 // pred_fallthru
          _
        // Predicated region
        $region37: #{tpu_custom_call.1} parent=11 // pred_check
          %p271 = pneg %p191
        $region38: #{tpu_custom_call.1} parent=11 // pred_check_branch
          %273 = sbr.rel (%p271) target = $region40
        $region39: #{tpu_custom_call.1} parent=11 // pred_region
          _
        $region40: #{tpu_custom_call.1} parent=11 // pred_fallthru
          _
        // Predicated region
        $region41: #{tpu_custom_call.1} parent=11 // pred_check
          %p274 = pneg %p212
        $region42: #{tpu_custom_call.1} parent=11 // pred_check_branch
          %276 = sbr.rel (%p274) target = $region44
        $region43: #{tpu_custom_call.1} parent=11 // pred_region
          _
        $region44: #{tpu_custom_call.1} parent=11 // pred_fallthru
          _
      $region12: #{tpu_custom_call.1} parent=5 // pred_fallthru
        _
      %p277 = scmp.lt.s32.totalorder %s18, 2
      // Predicated region
      $region45: #{tpu_custom_call.1} parent=5 // pred_check
        %p278 = pneg %p277
      $region46: #{tpu_custom_call.1} parent=5 // pred_check_branch
        %280 = sbr.rel (%p278) target = $region48
      $region47: #{tpu_custom_call.1} parent=5 // pred_region
        // Predicated region
        $region49: #{tpu_custom_call.1} parent=47 // pred_check
          %p281 = pneg %p38
        $region50: #{tpu_custom_call.1} parent=47 // pred_check_branch
          %283 = sbr.rel (%p281) target = $region52
        $region51: #{tpu_custom_call.1} parent=47 // pred_region
          %s284 = smul.u32 2, %s18
          %p285 = scmp.lt.s32.totalorder %s284, 3
          %s286 = scalar_select %p285, %s284, 3
          %s287 = smul.addr %s286, 2
          %s288 = scalar_lea.vmem %s0, %s287
          %s289 = smul.u32 2, %s18
        $region52: #{tpu_custom_call.1} parent=47 // pred_fallthru
          _
      $region48: #{tpu_custom_call.1} parent=5 // pred_fallthru
        _
      %p290 = scmp.le.s32.totalorder 1, %s18
      %p291 = scmp.lt.s32.totalorder %s18, 3
      %p292 = pnand %p290, %p291
      %p293 = pneg %p292
      // Predicated region
      $region53: #{tpu_custom_call.1} parent=5 // pred_check
        _
      $region54: #{tpu_custom_call.1} parent=5 // pred_check_branch
        %295 = sbr.rel (%p292) target = $region56
      $region55: #{tpu_custom_call.1} parent=5 // pred_region
        %s296 = ssub.s32 %s18, 1
        %s297 = smul.u32 2, %s23
        %p298 = scmp.lt.s32.totalorder %s297, 3
        %s299 = scalar_select %p298, %s297, 3
        %s300 = smul.addr %s299, 2
        %s301 = scalar_lea.vmem %s0, %s300
        %p302 = pneg %p44
        %p303 = pneg %p41
        %p304 = pneg %p65
        %p305 = pneg %p62
        %p306 = pneg %p86
        %p307 = pneg %p83
        %p308 = pneg %p107
        %p309 = pneg %p104
        %p310 = pneg %p128
        %p311 = pneg %p125
        %p312 = pneg %p149
        %p313 = pneg %p146
        %p314 = pneg %p170
        %p315 = pneg %p167
        %p316 = pneg %p191
        %p317 = pneg %p188
        %p318 = pneg %p212
        %p319 = pneg %p209
        %p320 = pneg %p238
        %p321 = pneg %p235
        %s322 = sand.u32 %s225, 1
        %s323 = scalar_lea.sflag [#allocation3], %s322
        %s324 = sand.u32 %s225, 1
        %s325 = smul.addr %s324, 8
        %s326 = scalar_lea.vmem [#allocation2], %s325
        %s327 = smul.u32 2, %s23
        %p328 = scmp.lt.s32.totalorder %s327, 3
        %s329 = scalar_select %p328, %s327, 3
        %s330 = smul.addr %s329, 2
        %s331 = scalar_lea.vmem %s0, %s330
        %s332 = smul.u32 2, %s23
        %s333 = smul.u32 2, %s23
        %v334 = vld [vmem:[%s331] sm:$0xf]
        %v335 = vld [vmem:[%s1] sm:$0xff]
        %v336 = vld [vmem:[%s1 + $0x8] sm:$0xff]
        %v337 = vld [vmem:[%s1 + $0x10] sm:$0xff]
        %v338 = vld [vmem:[%s1 + $0x18] sm:$0xff]
        %v339 = vld [vmem:[%s2] sm:$0xff]
        %v340 = vld [vmem:[%s2 + $0x8] sm:$0xff]
        %v341 = vld [vmem:[%s2 + $0x10] sm:$0xff]
        %v342 = vld [vmem:[%s2 + $0x18] sm:$0xff]
        %344 = vset.pattern.permute.xlu0 0
        %345 = vperm.xlu0 %344, %v339
        %v346 = vpop.permute.xlu0 %345
        %349 = vset.pattern.permute.xlu0 0
        %350 = vperm.xlu0 %349, %v340
        %v351 = vpop.permute.xlu0 %350
        %354 = vset.pattern.permute.xlu0 0
        %355 = vperm.xlu0 %354, %v341
        %v356 = vpop.permute.xlu0 %355
        %359 = vset.pattern.permute.xlu0 0
        %360 = vperm.xlu0 %359, %v342
        %v361 = vpop.permute.xlu0 %360
        %364 = vst [vmem:[#allocation1] ss:$4 sm:$0xff] %v334
        %v365 = vld.sshfl [vmem:[#allocation1] sm:$0xff pattern:$0x73625140]
        %v366 = vld.sshfl [vmem:[#allocation1 + $0x8] sm:$0xff pattern:$0x73625140]
        %vm367 = vcmask 15360
        %v369 = vsel %vm367, %v335, 0
        %v372 = vsel %vm367, %v336, 0
        %v375 = vsel %vm367, %v337, 0
        %v378 = vsel %vm367, %v338, 0
        %vm380 = vcmask 1041408
        %v381 = vsel %vm380, %v365, 0
        %v383 = vsel %vm380, %v366, 0
        %385 = vmatpush.msra.mxu0 0.0
        %386 = vmatpush.msra.mxu0 0.0
        %387 = vmatpush.msra.mxu0 0.0
        %388 = vmatpush.msra.mxu0 0.0
        %389 = vmatpush.msra.mxu0 0.0
        %390 = vmatpush.msra.mxu0 0.0
        %391 = vmatpush.msra.mxu0 0.0
        %392 = vmatpush.msra.mxu0 0.0
        %393 = vmatpush.msra.mxu0 0.0
        %394 = vmatpush.msra.mxu0 0.0
        %395 = vmatpush.msra.mxu0 0.0
        %396 = vmatpush.msra.mxu0 0.0
        %397 = vmatpush.msra.mxu0 0.0
        %398 = vmatpush.msra.mxu0 0.0
        %399 = vmatpush.msra.mxu0 0.0
        %v400 = vand.u32 %v381, 4294901760
        %401 = vmatpush.msra.mxu0 %v400
        %v402 = vand.u32 %v369, 4294901760
        %v403 = vsub.f32 %v369, %v402
        %v404 = vand.u32 %v403, 4294901760
        %v405 = vsub.f32 %v403, %v404
        %v406 = vand.u32 %v405, 4294901760
        %407 = vmatmul.f32.gmra.mxu0 %v406
        %v408 = vpop.f32.mrf.mxu0
        %v409 = vadd.f32 %v346, %v408
        %v410 = vand.u32 %v372, 4294901760
        %v411 = vsub.f32 %v372, %v410
        %v412 = vand.u32 %v411, 4294901760
        %v413 = vsub.f32 %v411, %v412
        %v414 = vand.u32 %v413, 4294901760
        %415 = vmatmul.f32.gmra.mxu0 %v414
        %v416 = vpop.f32.mrf.mxu0
        %v417 = vadd.f32 %v351, %v416
        %v418 = vand.u32 %v375, 4294901760
        %v419 = vsub.f32 %v375, %v418
        %v420 = vand.u32 %v419, 4294901760
        %v421 = vsub.f32 %v419, %v420
        %v422 = vand.u32 %v421, 4294901760
        %423 = vmatmul.f32.gmra.mxu0 %v422
        %v424 = vpop.f32.mrf.mxu0
        %v425 = vadd.f32 %v356, %v424
        %v426 = vand.u32 %v378, 4294901760
        %v427 = vsub.f32 %v378, %v426
        %v428 = vand.u32 %v427, 4294901760
        %v429 = vsub.f32 %v427, %v428
        %v430 = vand.u32 %v429, 4294901760
        %431 = vmatmul.f32.gmra.mxu0 %v430
        %v432 = vpop.f32.mrf.mxu0
        %v433 = vadd.f32 %v361, %v432
        %434 = vdwg.mxu0
        %435 = vmatpush.msra.mxu0 0.0
        %436 = vmatpush.msra.mxu0 0.0
        %437 = vmatpush.msra.mxu0 0.0
        %438 = vmatpush.msra.mxu0 0.0
        %439 = vmatpush.msra.mxu0 0.0
        %440 = vmatpush.msra.mxu0 0.0
        %441 = vmatpush.msra.mxu0 0.0
        %442 = vmatpush.msra.mxu0 0.0
        %443 = vmatpush.msra.mxu0 0.0
        %444 = vmatpush.msra.mxu0 0.0
        %445 = vmatpush.msra.mxu0 0.0
        %446 = vmatpush.msra.mxu0 0.0
        %447 = vmatpush.msra.mxu0 0.0
        %448 = vmatpush.msra.mxu0 0.0
        %449 = vmatpush.msra.mxu0 0.0
        %v450 = vand.u32 %v381, 4294901760
        %v451 = vsub.f32 %v381, %v450
        %v452 = vand.u32 %v451, 4294901760
        %v453 = vsub.f32 %v451, %v452
        %v454 = vand.u32 %v453, 4294901760
        %455 = vmatpush.msra.mxu0 %v454
        %v456 = vand.u32 %v369, 4294901760
        %457 = vmatmul.f32.gmra.mxu0 %v456
        %v458 = vpop.f32.mrf.mxu0
        %v459 = vadd.f32 %v409, %v458
        %v460 = vand.u32 %v372, 4294901760
        %461 = vmatmul.f32.gmra.mxu0 %v460
        %v462 = vpop.f32.mrf.mxu0
        %v463 = vadd.f32 %v417, %v462
        %v464 = vand.u32 %v375, 4294901760
        %465 = vmatmul.f32.gmra.mxu0 %v464
        %v466 = vpop.f32.mrf.mxu0
        %v467 = vadd.f32 %v425, %v466
        %v468 = vand.u32 %v378, 4294901760
        %469 = vmatmul.f32.gmra.mxu0 %v468
        %v470 = vpop.f32.mrf.mxu0
        %v471 = vadd.f32 %v433, %v470
        %472 = vdwg.mxu0
        %473 = vmatpush.msra.mxu0 0.0
        %474 = vmatpush.msra.mxu0 0.0
        %475 = vmatpush.msra.mxu0 0.0
        %476 = vmatpush.msra.mxu0 0.0
        %477 = vmatpush.msra.mxu0 0.0
        %478 = vmatpush.msra.mxu0 0.0
        %479 = vmatpush.msra.mxu0 0.0
        %480 = vmatpush.msra.mxu0 0.0
        %481 = vmatpush.msra.mxu0 0.0
        %482 = vmatpush.msra.mxu0 0.0
        %483 = vmatpush.msra.mxu0 0.0
        %484 = vmatpush.msra.mxu0 0.0
        %485 = vmatpush.msra.mxu0 0.0
        %486 = vmatpush.msra.mxu0 0.0
        %487 = vmatpush.msra.mxu0 0.0
        %v488 = vand.u32 %v381, 4294901760
        %v489 = vsub.f32 %v381, %v488
        %490 = vmatpush.msra.mxu0 %v489
        %v491 = vand.u32 %v369, 4294901760
        %v492 = vsub.f32 %v369, %v491
        %493 = vmatmul.f32.gmra.mxu0 %v492
        %v494 = vpop.f32.mrf.mxu0
        %v495 = vadd.f32 %v459, %v494
        %v496 = vand.u32 %v372, 4294901760
        %v497 = vsub.f32 %v372, %v496
        %498 = vmatmul.f32.gmra.mxu0 %v497
        %v499 = vpop.f32.mrf.mxu0
        %v500 = vadd.f32 %v463, %v499
        %v501 = vand.u32 %v375, 4294901760
        %v502 = vsub.f32 %v375, %v501
        %503 = vmatmul.f32.gmra.mxu0 %v502
        %v504 = vpop.f32.mrf.mxu0
        %v505 = vadd.f32 %v467, %v504
        %v506 = vand.u32 %v378, 4294901760
        %v507 = vsub.f32 %v378, %v506
        %508 = vmatmul.f32.gmra.mxu0 %v507
        %v509 = vpop.f32.mrf.mxu0
        %v510 = vadd.f32 %v471, %v509
        %511 = vdwg.mxu0
        %512 = vmatpush.msra.mxu0 0.0
        %513 = vmatpush.msra.mxu0 0.0
        %514 = vmatpush.msra.mxu0 0.0
        %515 = vmatpush.msra.mxu0 0.0
        %516 = vmatpush.msra.mxu0 0.0
        %517 = vmatpush.msra.mxu0 0.0
        %518 = vmatpush.msra.mxu0 0.0
        %519 = vmatpush.msra.mxu0 0.0
        %520 = vmatpush.msra.mxu0 0.0
        %521 = vmatpush.msra.mxu0 0.0
        %522 = vmatpush.msra.mxu0 0.0
        %523 = vmatpush.msra.mxu0 0.0
        %524 = vmatpush.msra.mxu0 0.0
        %525 = vmatpush.msra.mxu0 0.0
        %526 = vmatpush.msra.mxu0 0.0
        %v527 = vand.u32 %v381, 4294901760
        %528 = vmatpush.msra.mxu0 %v527
        %v529 = vand.u32 %v369, 4294901760
        %v530 = vsub.f32 %v369, %v529
        %v531 = vand.u32 %v530, 4294901760
        %532 = vmatmul.f32.gmra.mxu0 %v531
        %v533 = vpop.f32.mrf.mxu0
        %v534 = vadd.f32 %v495, %v533
        %v535 = vand.u32 %v372, 4294901760
        %v536 = vsub.f32 %v372, %v535
        %v537 = vand.u32 %v536, 4294901760
        %538 = vmatmul.f32.gmra.mxu0 %v537
        %v539 = vpop.f32.mrf.mxu0
        %v540 = vadd.f32 %v500, %v539
        %v541 = vand.u32 %v375, 4294901760
        %v542 = vsub.f32 %v375, %v541
        %v543 = vand.u32 %v542, 4294901760
        %544 = vmatmul.f32.gmra.mxu0 %v543
        %v545 = vpop.f32.mrf.mxu0
        %v546 = vadd.f32 %v505, %v545
        %v547 = vand.u32 %v378, 4294901760
        %v548 = vsub.f32 %v378, %v547
        %v549 = vand.u32 %v548, 4294901760
        %550 = vmatmul.f32.gmra.mxu0 %v549
        %v551 = vpop.f32.mrf.mxu0
        %v552 = vadd.f32 %v510, %v551
        %553 = vdwg.mxu0
        %554 = vmatpush.msra.mxu0 0.0
        %555 = vmatpush.msra.mxu0 0.0
        %556 = vmatpush.msra.mxu0 0.0
        %557 = vmatpush.msra.mxu0 0.0
        %558 = vmatpush.msra.mxu0 0.0
        %559 = vmatpush.msra.mxu0 0.0
        %560 = vmatpush.msra.mxu0 0.0
        %561 = vmatpush.msra.mxu0 0.0
        %562 = vmatpush.msra.mxu0 0.0
        %563 = vmatpush.msra.mxu0 0.0
        %564 = vmatpush.msra.mxu0 0.0
        %565 = vmatpush.msra.mxu0 0.0
        %566 = vmatpush.msra.mxu0 0.0
        %567 = vmatpush.msra.mxu0 0.0
        %568 = vmatpush.msra.mxu0 0.0
        %v569 = vand.u32 %v381, 4294901760
        %v570 = vsub.f32 %v381, %v569
        %v571 = vand.u32 %v570, 4294901760
        %572 = vmatpush.msra.mxu0 %v571
        %v573 = vand.u32 %v369, 4294901760
        %574 = vmatmul.f32.gmra.mxu0 %v573
        %v575 = vpop.f32.mrf.mxu0
        %v576 = vadd.f32 %v534, %v575
        %v577 = vand.u32 %v372, 4294901760
        %578 = vmatmul.f32.gmra.mxu0 %v577
        %v579 = vpop.f32.mrf.mxu0
        %v580 = vadd.f32 %v540, %v579
        %v581 = vand.u32 %v375, 4294901760
        %582 = vmatmul.f32.gmra.mxu0 %v581
        %v583 = vpop.f32.mrf.mxu0
        %v584 = vadd.f32 %v546, %v583
        %v585 = vand.u32 %v378, 4294901760
        %586 = vmatmul.f32.gmra.mxu0 %v585
        %v587 = vpop.f32.mrf.mxu0
        %v588 = vadd.f32 %v552, %v587
        %589 = vdwg.mxu0
        %590 = vmatpush.msra.mxu0 0.0
        %591 = vmatpush.msra.mxu0 0.0
        %592 = vmatpush.msra.mxu0 0.0
        %593 = vmatpush.msra.mxu0 0.0
        %594 = vmatpush.msra.mxu0 0.0
        %595 = vmatpush.msra.mxu0 0.0
        %596 = vmatpush.msra.mxu0 0.0
        %597 = vmatpush.msra.mxu0 0.0
        %598 = vmatpush.msra.mxu0 0.0
        %599 = vmatpush.msra.mxu0 0.0
        %600 = vmatpush.msra.mxu0 0.0
        %601 = vmatpush.msra.mxu0 0.0
        %602 = vmatpush.msra.mxu0 0.0
        %603 = vmatpush.msra.mxu0 0.0
        %604 = vmatpush.msra.mxu0 0.0
        %v605 = vand.u32 %v381, 4294901760
        %606 = vmatpush.msra.mxu0 %v605
        %v607 = vand.u32 %v369, 4294901760
        %608 = vmatmul.f32.gmra.mxu0 %v607
        %v609 = vpop.f32.mrf.mxu0
        %v610 = vadd.f32 %v576, %v609
        %v611 = vand.u32 %v372, 4294901760
        %612 = vmatmul.f32.gmra.mxu0 %v611
        %v613 = vpop.f32.mrf.mxu0
        %v614 = vadd.f32 %v580, %v613
        %v615 = vand.u32 %v375, 4294901760
        %616 = vmatmul.f32.gmra.mxu0 %v615
        %v617 = vpop.f32.mrf.mxu0
        %v618 = vadd.f32 %v584, %v617
        %v619 = vand.u32 %v378, 4294901760
        %620 = vmatmul.f32.gmra.mxu0 %v619
        %v621 = vpop.f32.mrf.mxu0
        %v622 = vadd.f32 %v588, %v621
        %623 = vdwg.mxu0
        %624 = vmatpush.msra.mxu0 0.0
        %625 = vmatpush.msra.mxu0 0.0
        %626 = vmatpush.msra.mxu0 0.0
        %627 = vmatpush.msra.mxu0 0.0
        %628 = vmatpush.msra.mxu0 0.0
        %629 = vmatpush.msra.mxu0 0.0
        %630 = vmatpush.msra.mxu0 0.0
        %631 = vmatpush.msra.mxu0 0.0
        %632 = vmatpush.msra.mxu0 0.0
        %633 = vmatpush.msra.mxu0 0.0
        %634 = vmatpush.msra.mxu0 0.0
        %635 = vmatpush.msra.mxu0 0.0
        %636 = vmatpush.msra.mxu0 0.0
        %637 = vmatpush.msra.mxu0 0.0
        %638 = vmatpush.msra.mxu0 0.0
        %v639 = vand.u32 %v383, 4294901760
        %640 = vmatpush.msra.mxu0 %v639
        %v641 = vand.u32 %v369, 4294901760
        %v642 = vsub.f32 %v369, %v641
        %v643 = vand.u32 %v642, 4294901760
        %v644 = vsub.f32 %v642, %v643
        %v645 = vand.u32 %v644, 4294901760
        %646 = vmatmul.f32.gmra.mxu0 %v645
        %v647 = vpop.f32.mrf.mxu0
        %v648 = vadd.f32 %v346, %v647
        %v649 = vand.u32 %v372, 4294901760
        %v650 = vsub.f32 %v372, %v649
        %v651 = vand.u32 %v650, 4294901760
        %v652 = vsub.f32 %v650, %v651
        %v653 = vand.u32 %v652, 4294901760
        %654 = vmatmul.f32.gmra.mxu0 %v653
        %v655 = vpop.f32.mrf.mxu0
        %v656 = vadd.f32 %v351, %v655
        %v657 = vand.u32 %v375, 4294901760
        %v658 = vsub.f32 %v375, %v657
        %v659 = vand.u32 %v658, 4294901760
        %v660 = vsub.f32 %v658, %v659
        %v661 = vand.u32 %v660, 4294901760
        %662 = vmatmul.f32.gmra.mxu0 %v661
        %v663 = vpop.f32.mrf.mxu0
        %v664 = vadd.f32 %v356, %v663
        %v665 = vand.u32 %v378, 4294901760
        %v666 = vsub.f32 %v378, %v665
        %v667 = vand.u32 %v666, 4294901760
        %v668 = vsub.f32 %v666, %v667
        %v669 = vand.u32 %v668, 4294901760
        %670 = vmatmul.f32.gmra.mxu0 %v669
        %v671 = vpop.f32.mrf.mxu0
        %v672 = vadd.f32 %v361, %v671
        %673 = vdwg.mxu0
        %674 = vmatpush.msra.mxu0 0.0
        %675 = vmatpush.msra.mxu0 0.0
        %676 = vmatpush.msra.mxu0 0.0
        %677 = vmatpush.msra.mxu0 0.0
        %678 = vmatpush.msra.mxu0 0.0
        %679 = vmatpush.msra.mxu0 0.0
        %680 = vmatpush.msra.mxu0 0.0
        %681 = vmatpush.msra.mxu0 0.0
        %682 = vmatpush.msra.mxu0 0.0
        %683 = vmatpush.msra.mxu0 0.0
        %684 = vmatpush.msra.mxu0 0.0
        %685 = vmatpush.msra.mxu0 0.0
        %686 = vmatpush.msra.mxu0 0.0
        %687 = vmatpush.msra.mxu0 0.0
        %688 = vmatpush.msra.mxu0 0.0
        %v689 = vand.u32 %v383, 4294901760
        %v690 = vsub.f32 %v383, %v689
        %v691 = vand.u32 %v690, 4294901760
        %v692 = vsub.f32 %v690, %v691
        %v693 = vand.u32 %v692, 4294901760
        %694 = vmatpush.msra.mxu0 %v693
        %v695 = vand.u32 %v369, 4294901760
        %696 = vmatmul.f32.gmra.mxu0 %v695
        %v697 = vpop.f32.mrf.mxu0
        %v698 = vadd.f32 %v648, %v697
        %v699 = vand.u32 %v372, 4294901760
        %700 = vmatmul.f32.gmra.mxu0 %v699
        %v701 = vpop.f32.mrf.mxu0
        %v702 = vadd.f32 %v656, %v701
        %v703 = vand.u32 %v375, 4294901760
        %704 = vmatmul.f32.gmra.mxu0 %v703
        %v705 = vpop.f32.mrf.mxu0
        %v706 = vadd.f32 %v664, %v705
        %v707 = vand.u32 %v378, 4294901760
        %708 = vmatmul.f32.gmra.mxu0 %v707
        %v709 = vpop.f32.mrf.mxu0
        %v710 = vadd.f32 %v672, %v709
        %711 = vdwg.mxu0
        %712 = vmatpush.msra.mxu0 0.0
        %713 = vmatpush.msra.mxu0 0.0
        %714 = vmatpush.msra.mxu0 0.0
        %715 = vmatpush.msra.mxu0 0.0
        %716 = vmatpush.msra.mxu0 0.0
        %717 = vmatpush.msra.mxu0 0.0
        %718 = vmatpush.msra.mxu0 0.0
        %719 = vmatpush.msra.mxu0 0.0
        %720 = vmatpush.msra.mxu0 0.0
        %721 = vmatpush.msra.mxu0 0.0
        %722 = vmatpush.msra.mxu0 0.0
        %723 = vmatpush.msra.mxu0 0.0
        %724 = vmatpush.msra.mxu0 0.0
        %725 = vmatpush.msra.mxu0 0.0
        %726 = vmatpush.msra.mxu0 0.0
        %v727 = vand.u32 %v383, 4294901760
        %v728 = vsub.f32 %v383, %v727
        %729 = vmatpush.msra.mxu0 %v728
        %v730 = vand.u32 %v369, 4294901760
        %v731 = vsub.f32 %v369, %v730
        %732 = vmatmul.f32.gmra.mxu0 %v731
        %v733 = vpop.f32.mrf.mxu0
        %v734 = vadd.f32 %v698, %v733
        %v735 = vand.u32 %v372, 4294901760
        %v736 = vsub.f32 %v372, %v735
        %737 = vmatmul.f32.gmra.mxu0 %v736
        %v738 = vpop.f32.mrf.mxu0
        %v739 = vadd.f32 %v702, %v738
        %v740 = vand.u32 %v375, 4294901760
        %v741 = vsub.f32 %v375, %v740
        %742 = vmatmul.f32.gmra.mxu0 %v741
        %v743 = vpop.f32.mrf.mxu0
        %v744 = vadd.f32 %v706, %v743
        %v745 = vand.u32 %v378, 4294901760
        %v746 = vsub.f32 %v378, %v745
        %747 = vmatmul.f32.gmra.mxu0 %v746
        %v748 = vpop.f32.mrf.mxu0
        %v749 = vadd.f32 %v710, %v748
        %750 = vdwg.mxu0
        %751 = vmatpush.msra.mxu0 0.0
        %752 = vmatpush.msra.mxu0 0.0
        %753 = vmatpush.msra.mxu0 0.0
        %754 = vmatpush.msra.mxu0 0.0
        %755 = vmatpush.msra.mxu0 0.0
        %756 = vmatpush.msra.mxu0 0.0
        %757 = vmatpush.msra.mxu0 0.0
        %758 = vmatpush.msra.mxu0 0.0
        %759 = vmatpush.msra.mxu0 0.0
        %760 = vmatpush.msra.mxu0 0.0
        %761 = vmatpush.msra.mxu0 0.0
        %762 = vmatpush.msra.mxu0 0.0
        %763 = vmatpush.msra.mxu0 0.0
        %764 = vmatpush.msra.mxu0 0.0
        %765 = vmatpush.msra.mxu0 0.0
        %v766 = vand.u32 %v383, 4294901760
        %767 = vmatpush.msra.mxu0 %v766
        %v768 = vand.u32 %v369, 4294901760
        %v769 = vsub.f32 %v369, %v768
        %v770 = vand.u32 %v769, 4294901760
        %771 = vmatmul.f32.gmra.mxu0 %v770
        %v772 = vpop.f32.mrf.mxu0
        %v773 = vadd.f32 %v734, %v772
        %v774 = vand.u32 %v372, 4294901760
        %v775 = vsub.f32 %v372, %v774
        %v776 = vand.u32 %v775, 4294901760
        %777 = vmatmul.f32.gmra.mxu0 %v776
        %v778 = vpop.f32.mrf.mxu0
        %v779 = vadd.f32 %v739, %v778
        %v780 = vand.u32 %v375, 4294901760
        %v781 = vsub.f32 %v375, %v780
        %v782 = vand.u32 %v781, 4294901760
        %783 = vmatmul.f32.gmra.mxu0 %v782
        %v784 = vpop.f32.mrf.mxu0
        %v785 = vadd.f32 %v744, %v784
        %v786 = vand.u32 %v378, 4294901760
        %v787 = vsub.f32 %v378, %v786
        %v788 = vand.u32 %v787, 4294901760
        %789 = vmatmul.f32.gmra.mxu0 %v788
        %v790 = vpop.f32.mrf.mxu0
        %v791 = vadd.f32 %v749, %v790
        %792 = vdwg.mxu0
        %793 = vmatpush.msra.mxu0 0.0
        %794 = vmatpush.msra.mxu0 0.0
        %795 = vmatpush.msra.mxu0 0.0
        %796 = vmatpush.msra.mxu0 0.0
        %797 = vmatpush.msra.mxu0 0.0
        %798 = vmatpush.msra.mxu0 0.0
        %799 = vmatpush.msra.mxu0 0.0
        %800 = vmatpush.msra.mxu0 0.0
        %801 = vmatpush.msra.mxu0 0.0
        %802 = vmatpush.msra.mxu0 0.0
        %803 = vmatpush.msra.mxu0 0.0
        %804 = vmatpush.msra.mxu0 0.0
        %805 = vmatpush.msra.mxu0 0.0
        %806 = vmatpush.msra.mxu0 0.0
        %807 = vmatpush.msra.mxu0 0.0
        %v808 = vand.u32 %v383, 4294901760
        %v809 = vsub.f32 %v383, %v808
        %v810 = vand.u32 %v809, 4294901760
        %811 = vmatpush.msra.mxu0 %v810
        %v812 = vand.u32 %v369, 4294901760
        %813 = vmatmul.f32.gmra.mxu0 %v812
        %v814 = vpop.f32.mrf.mxu0
        %v815 = vadd.f32 %v773, %v814
        %v816 = vand.u32 %v372, 4294901760
        %817 = vmatmul.f32.gmra.mxu0 %v816
        %v818 = vpop.f32.mrf.mxu0
        %v819 = vadd.f32 %v779, %v818
        %v820 = vand.u32 %v375, 4294901760
        %821 = vmatmul.f32.gmra.mxu0 %v820
        %v822 = vpop.f32.mrf.mxu0
        %v823 = vadd.f32 %v785, %v822
        %v824 = vand.u32 %v378, 4294901760
        %825 = vmatmul.f32.gmra.mxu0 %v824
        %v826 = vpop.f32.mrf.mxu0
        %v827 = vadd.f32 %v791, %v826
        %828 = vdwg.mxu0
        %829 = vmatpush.msra.mxu0 0.0
        %830 = vmatpush.msra.mxu0 0.0
        %831 = vmatpush.msra.mxu0 0.0
        %832 = vmatpush.msra.mxu0 0.0
        %833 = vmatpush.msra.mxu0 0.0
        %834 = vmatpush.msra.mxu0 0.0
        %835 = vmatpush.msra.mxu0 0.0
        %836 = vmatpush.msra.mxu0 0.0
        %837 = vmatpush.msra.mxu0 0.0
        %838 = vmatpush.msra.mxu0 0.0
        %839 = vmatpush.msra.mxu0 0.0
        %840 = vmatpush.msra.mxu0 0.0
        %841 = vmatpush.msra.mxu0 0.0
        %842 = vmatpush.msra.mxu0 0.0
        %843 = vmatpush.msra.mxu0 0.0
        %v844 = vand.u32 %v383, 4294901760
        %845 = vmatpush.msra.mxu0 %v844
        %v846 = vand.u32 %v369, 4294901760
        %847 = vmatmul.f32.gmra.mxu0 %v846
        %v848 = vpop.f32.mrf.mxu0
        %v849 = vadd.f32 %v815, %v848
        %v850 = vand.u32 %v372, 4294901760
        %851 = vmatmul.f32.gmra.mxu0 %v850
        %v852 = vpop.f32.mrf.mxu0
        %v853 = vadd.f32 %v819, %v852
        %v854 = vand.u32 %v375, 4294901760
        %855 = vmatmul.f32.gmra.mxu0 %v854
        %v856 = vpop.f32.mrf.mxu0
        %v857 = vadd.f32 %v823, %v856
        %v858 = vand.u32 %v378, 4294901760
        %859 = vmatmul.f32.gmra.mxu0 %v858
        %v860 = vpop.f32.mrf.mxu0
        %v861 = vadd.f32 %v827, %v860
        %862 = vdwg.mxu0
        %v863 = vmul.f32 %v610, 0.31830987
        %v864 = vmul.f32 %v849, 0.31830987
        %v865 = vmul.f32 %v614, 0.31830987
        %v866 = vmul.f32 %v853, 0.31830987
        %v867 = vmul.f32 %v618, 0.31830987
        %v868 = vmul.f32 %v857, 0.31830987
        %v869 = vmul.f32 %v622, 0.31830987
        %v870 = vmul.f32 %v861, 0.31830987
        %v871 = vround.ne.pseudo %v863
        %v872 = vround.ne.pseudo %v864
        %v873 = vround.ne.pseudo %v865
        %v874 = vround.ne.pseudo %v866
        %v875 = vround.ne.pseudo %v867
        %v876 = vround.ne.pseudo %v868
        %v877 = vround.ne.pseudo %v869
        %v878 = vround.ne.pseudo %v870
        %v879 = vmul.f32 %v871, 3.140625
        %v880 = vmul.f32 %v872, 3.140625
        %v881 = vmul.f32 %v873, 3.140625
        %v882 = vmul.f32 %v874, 3.140625
        %v883 = vmul.f32 %v875, 3.140625
        %v884 = vmul.f32 %v876, 3.140625
        %v885 = vmul.f32 %v877, 3.140625
        %v886 = vmul.f32 %v878, 3.140625
        %v887 = vsub.f32 %v610, %v879
        %v888 = vsub.f32 %v849, %v880
        %v889 = vsub.f32 %v614, %v881
        %v890 = vsub.f32 %v853, %v882
        %v891 = vsub.f32 %v618, %v883
        %v892 = vsub.f32 %v857, %v884
        %v893 = vsub.f32 %v622, %v885
        %v894 = vsub.f32 %v861, %v886
        %v895 = vmul.f32 %v871, 0.0009676536
        %v896 = vmul.f32 %v872, 0.0009676536
        %v897 = vmul.f32 %v873, 0.0009676536
        %v898 = vmul.f32 %v874, 0.0009676536
        %v899 = vmul.f32 %v875, 0.0009676536
        %v900 = vmul.f32 %v876, 0.0009676536
        %v901 = vmul.f32 %v877, 0.0009676536
        %v902 = vmul.f32 %v878, 0.0009676536
        %v903 = vsub.f32 %v887, %v895
        %v904 = vsub.f32 %v888, %v896
        %v905 = vsub.f32 %v889, %v897
        %v906 = vsub.f32 %v890, %v898
        %v907 = vsub.f32 %v891, %v899
        %v908 = vsub.f32 %v892, %v900
        %v909 = vsub.f32 %v893, %v901
        %v910 = vsub.f32 %v894, %v902
        %v911 = vmul.f32 %v871, 0.5
        %v912 = vmul.f32 %v872, 0.5
        %v913 = vmul.f32 %v873, 0.5
        %v914 = vmul.f32 %v874, 0.5
        %v915 = vmul.f32 %v875, 0.5
        %v916 = vmul.f32 %v876, 0.5
        %v917 = vmul.f32 %v877, 0.5
        %v918 = vmul.f32 %v878, 0.5
        %v919 = vfloor.f32 %v911
        %v920 = vfloor.f32 %v912
        %v921 = vfloor.f32 %v913
        %v922 = vfloor.f32 %v914
        %v923 = vfloor.f32 %v915
        %v924 = vfloor.f32 %v916
        %v925 = vfloor.f32 %v917
        %v926 = vfloor.f32 %v918
        %v927 = vmul.f32 %v919, 2.0
        %v928 = vmul.f32 %v920, 2.0
        %v929 = vmul.f32 %v921, 2.0
        %v930 = vmul.f32 %v922, 2.0
        %v931 = vmul.f32 %v923, 2.0
        %v932 = vmul.f32 %v924, 2.0
        %v933 = vmul.f32 %v925, 2.0
        %v934 = vmul.f32 %v926, 2.0
        %v935 = vsub.f32 %v871, %v927
        %v936 = vsub.f32 %v872, %v928
        %v937 = vsub.f32 %v873, %v929
        %v938 = vsub.f32 %v874, %v930
        %v939 = vsub.f32 %v875, %v931
        %v940 = vsub.f32 %v876, %v932
        %v941 = vsub.f32 %v877, %v933
        %v942 = vsub.f32 %v878, %v934
        %v943 = vmul.f32 %v935, 2.0
        %v944 = vmul.f32 %v936, 2.0
        %v945 = vmul.f32 %v937, 2.0
        %v946 = vmul.f32 %v938, 2.0
        %v947 = vmul.f32 %v939, 2.0
        %v948 = vmul.f32 %v940, 2.0
        %v949 = vmul.f32 %v941, 2.0
        %v950 = vmul.f32 %v942, 2.0
        %v951 = vsub.f32 1.0, %v943
        %v952 = vsub.f32 1.0, %v944
        %v953 = vsub.f32 1.0, %v945
        %v954 = vsub.f32 1.0, %v946
        %v955 = vsub.f32 1.0, %v947
        %v956 = vsub.f32 1.0, %v948
        %v957 = vsub.f32 1.0, %v949
        %v958 = vsub.f32 1.0, %v950
        %v959 = vmul.f32 %v903, %v903
        %v960 = vmul.f32 %v904, %v904
        %v961 = vmul.f32 %v905, %v905
        %v962 = vmul.f32 %v906, %v906
        %v963 = vmul.f32 %v907, %v907
        %v964 = vmul.f32 %v908, %v908
        %v965 = vmul.f32 %v909, %v909
        %v966 = vmul.f32 %v910, %v910
        %v967 = vmul.f32 %v959, -2.5052108e-08
        %v968 = vmul.f32 %v960, -2.5052108e-08
        %v969 = vmul.f32 %v961, -2.5052108e-08
        %v970 = vmul.f32 %v962, -2.5052108e-08
        %v971 = vmul.f32 %v963, -2.5052108e-08
        %v972 = vmul.f32 %v964, -2.5052108e-08
        %v973 = vmul.f32 %v965, -2.5052108e-08
        %v974 = vmul.f32 %v966, -2.5052108e-08
        %v975 = vadd.f32 %v967, 2.7557319e-06
        %v976 = vadd.f32 %v968, 2.7557319e-06
        %v977 = vadd.f32 %v969, 2.7557319e-06
        %v978 = vadd.f32 %v970, 2.7557319e-06
        %v979 = vadd.f32 %v971, 2.7557319e-06
        %v980 = vadd.f32 %v972, 2.7557319e-06
        %v981 = vadd.f32 %v973, 2.7557319e-06
        %v982 = vadd.f32 %v974, 2.7557319e-06
        %v983 = vmul.f32 %v975, %v959
        %v984 = vmul.f32 %v976, %v960
        %v985 = vmul.f32 %v977, %v961
        %v986 = vmul.f32 %v978, %v962
        %v987 = vmul.f32 %v979, %v963
        %v988 = vmul.f32 %v980, %v964
        %v989 = vmul.f32 %v981, %v965
        %v990 = vmul.f32 %v982, %v966
        %v991 = vsub.f32 %v983, 0.0001984127
        %v992 = vsub.f32 %v984, 0.0001984127
        %v993 = vsub.f32 %v985, 0.0001984127
        %v994 = vsub.f32 %v986, 0.0001984127
        %v995 = vsub.f32 %v987, 0.0001984127
        %v996 = vsub.f32 %v988, 0.0001984127
        %v997 = vsub.f32 %v989, 0.0001984127
        %v998 = vsub.f32 %v990, 0.0001984127
        %v999 = vmul.f32 %v991, %v959
        %v1000 = vmul.f32 %v992, %v960
        %v1001 = vmul.f32 %v993, %v961
        %v1002 = vmul.f32 %v994, %v962
        %v1003 = vmul.f32 %v995, %v963
        %v1004 = vmul.f32 %v996, %v964
        %v1005 = vmul.f32 %v997, %v965
        %v1006 = vmul.f32 %v998, %v966
        %v1007 = vadd.f32 %v999, 0.008333334
        %v1008 = vadd.f32 %v1000, 0.008333334
        %v1009 = vadd.f32 %v1001, 0.008333334
        %v1010 = vadd.f32 %v1002, 0.008333334
        %v1011 = vadd.f32 %v1003, 0.008333334
        %v1012 = vadd.f32 %v1004, 0.008333334
        %v1013 = vadd.f32 %v1005, 0.008333334
        %v1014 = vadd.f32 %v1006, 0.008333334
        %v1015 = vmul.f32 %v1007, %v959
        %v1016 = vmul.f32 %v1008, %v960
        %v1017 = vmul.f32 %v1009, %v961
        %v1018 = vmul.f32 %v1010, %v962
        %v1019 = vmul.f32 %v1011, %v963
        %v1020 = vmul.f32 %v1012, %v964
        %v1021 = vmul.f32 %v1013, %v965
        %v1022 = vmul.f32 %v1014, %v966
        %v1023 = vsub.f32 %v1015, 0.16666667
        %v1024 = vsub.f32 %v1016, 0.16666667
        %v1025 = vsub.f32 %v1017, 0.16666667
        %v1026 = vsub.f32 %v1018, 0.16666667
        %v1027 = vsub.f32 %v1019, 0.16666667
        %v1028 = vsub.f32 %v1020, 0.16666667
        %v1029 = vsub.f32 %v1021, 0.16666667
        %v1030 = vsub.f32 %v1022, 0.16666667
        %v1031 = vmul.f32 %v1023, %v959
        %v1032 = vmul.f32 %v1024, %v960
        %v1033 = vmul.f32 %v1025, %v961
        %v1034 = vmul.f32 %v1026, %v962
        %v1035 = vmul.f32 %v1027, %v963
        %v1036 = vmul.f32 %v1028, %v964
        %v1037 = vmul.f32 %v1029, %v965
        %v1038 = vmul.f32 %v1030, %v966
        %v1039 = vadd.f32 %v1031, 1.0
        %v1040 = vadd.f32 %v1032, 1.0
        %v1041 = vadd.f32 %v1033, 1.0
        %v1042 = vadd.f32 %v1034, 1.0
        %v1043 = vadd.f32 %v1035, 1.0
        %v1044 = vadd.f32 %v1036, 1.0
        %v1045 = vadd.f32 %v1037, 1.0
        %v1046 = vadd.f32 %v1038, 1.0
        %v1047 = vmul.f32 %v903, %v1039
        %v1048 = vmul.f32 %v904, %v1040
        %v1049 = vmul.f32 %v905, %v1041
        %v1050 = vmul.f32 %v906, %v1042
        %v1051 = vmul.f32 %v907, %v1043
        %v1052 = vmul.f32 %v908, %v1044
        %v1053 = vmul.f32 %v909, %v1045
        %v1054 = vmul.f32 %v910, %v1046
        %v1055 = vmul.f32 %v951, %v1047
        %v1056 = vmul.f32 %v952, %v1048
        %v1057 = vmul.f32 %v953, %v1049
        %v1058 = vmul.f32 %v954, %v1050
        %v1059 = vmul.f32 %v955, %v1051
        %v1060 = vmul.f32 %v956, %v1052
        %v1061 = vmul.f32 %v957, %v1053
        %v1062 = vmul.f32 %v958, %v1054
        %v1063 = vld [vmem:[%s3] sm:$0xff]
        %v1064 = vld [vmem:[%s3 + $0x8] sm:$0xff]
        %v1065 = vld [vmem:[%s3 + $0x10] sm:$0xff]
        %v1066 = vld [vmem:[%s3 + $0x18] sm:$0xff]
        %v1067 = vld [vmem:[%s4] sm:$0xff]
        %v1068 = vld [vmem:[%s4 + $0x8] sm:$0xff]
        %v1069 = vld [vmem:[%s4 + $0x10] sm:$0xff]
        %v1070 = vld [vmem:[%s4 + $0x18] sm:$0xff]
        %1072 = vset.pattern.permute.xlu0 0
        %1073 = vperm.xlu0 %1072, %v1067
        %v1074 = vpop.permute.xlu0 %1073
        %1077 = vset.pattern.permute.xlu0 0
        %1078 = vperm.xlu0 %1077, %v1068
        %v1079 = vpop.permute.xlu0 %1078
        %1082 = vset.pattern.permute.xlu0 0
        %1083 = vperm.xlu0 %1082, %v1069
        %v1084 = vpop.permute.xlu0 %1083
        %1087 = vset.pattern.permute.xlu0 0
        %1088 = vperm.xlu0 %1087, %v1070
        %v1089 = vpop.permute.xlu0 %1088
        %vm1091 = vcmask 261120
        %v1093 = vsel %vm1091, %v1063, 0
        %v1096 = vsel %vm1091, %v1064, 0
        %v1099 = vsel %vm1091, %v1065, 0
        %v1102 = vsel %vm1091, %v1066, 0
        %1104 = vmatpush.msra.mxu0 0.0
        %1105 = vmatpush.msra.mxu0 0.0
        %1106 = vmatpush.msra.mxu0 0.0
        %1107 = vmatpush.msra.mxu0 0.0
        %1108 = vmatpush.msra.mxu0 0.0
        %1109 = vmatpush.msra.mxu0 0.0
        %1110 = vmatpush.msra.mxu0 0.0
        %1111 = vmatpush.msra.mxu0 0.0
        %1112 = vmatpush.msra.mxu0 0.0
        %1113 = vmatpush.msra.mxu0 0.0
        %1114 = vmatpush.msra.mxu0 0.0
        %1115 = vmatpush.msra.mxu0 0.0
        %v1116 = vand.u32 %v1061, 4294901760
        %1117 = vmatpush.msra.mxu0 %v1116
        %v1118 = vand.u32 %v1059, 4294901760
        %1119 = vmatpush.msra.mxu0 %v1118
        %v1120 = vand.u32 %v1057, 4294901760
        %1121 = vmatpush.msra.mxu0 %v1120
        %v1122 = vand.u32 %v1055, 4294901760
        %1123 = vmatpush.msra.mxu0 %v1122
        %v1124 = vand.u32 %v1093, 4294901760
        %v1125 = vsub.f32 %v1093, %v1124
        %v1126 = vand.u32 %v1125, 4294901760
        %v1127 = vsub.f32 %v1125, %v1126
        %v1128 = vand.u32 %v1127, 4294901760
        %1129 = vmatmul.f32.gmra.mxu0 %v1128
        %v1130 = vpop.f32.mrf.mxu0
        %v1131 = vadd.f32 %v1074, %v1130
        %v1132 = vand.u32 %v1096, 4294901760
        %v1133 = vsub.f32 %v1096, %v1132
        %v1134 = vand.u32 %v1133, 4294901760
        %v1135 = vsub.f32 %v1133, %v1134
        %v1136 = vand.u32 %v1135, 4294901760
        %1137 = vmatmul.f32.gmra.mxu0 %v1136
        %v1138 = vpop.f32.mrf.mxu0
        %v1139 = vadd.f32 %v1079, %v1138
        %v1140 = vand.u32 %v1099, 4294901760
        %v1141 = vsub.f32 %v1099, %v1140
        %v1142 = vand.u32 %v1141, 4294901760
        %v1143 = vsub.f32 %v1141, %v1142
        %v1144 = vand.u32 %v1143, 4294901760
        %1145 = vmatmul.f32.gmra.mxu0 %v1144
        %v1146 = vpop.f32.mrf.mxu0
        %v1147 = vadd.f32 %v1084, %v1146
        %v1148 = vand.u32 %v1102, 4294901760
        %v1149 = vsub.f32 %v1102, %v1148
        %v1150 = vand.u32 %v1149, 4294901760
        %v1151 = vsub.f32 %v1149, %v1150
        %v1152 = vand.u32 %v1151, 4294901760
        %1153 = vmatmul.f32.gmra.mxu0 %v1152
        %v1154 = vpop.f32.mrf.mxu0
        %v1155 = vadd.f32 %v1089, %v1154
        %1156 = vdwg.mxu0
        %1157 = vmatpush.msra.mxu0 0.0
        %1158 = vmatpush.msra.mxu0 0.0
        %1159 = vmatpush.msra.mxu0 0.0
        %1160 = vmatpush.msra.mxu0 0.0
        %1161 = vmatpush.msra.mxu0 0.0
        %1162 = vmatpush.msra.mxu0 0.0
        %1163 = vmatpush.msra.mxu0 0.0
        %1164 = vmatpush.msra.mxu0 0.0
        %1165 = vmatpush.msra.mxu0 0.0
        %1166 = vmatpush.msra.mxu0 0.0
        %1167 = vmatpush.msra.mxu0 0.0
        %1168 = vmatpush.msra.mxu0 0.0
        %v1169 = vand.u32 %v1061, 4294901760
        %v1170 = vsub.f32 %v1061, %v1169
        %v1171 = vand.u32 %v1170, 4294901760
        %v1172 = vsub.f32 %v1170, %v1171
        %v1173 = vand.u32 %v1172, 4294901760
        %1174 = vmatpush.msra.mxu0 %v1173
        %v1175 = vand.u32 %v1059, 4294901760
        %v1176 = vsub.f32 %v1059, %v1175
        %v1177 = vand.u32 %v1176, 4294901760
        %v1178 = vsub.f32 %v1176, %v1177
        %v1179 = vand.u32 %v1178, 4294901760
        %1180 = vmatpush.msra.mxu0 %v1179
        %v1181 = vand.u32 %v1057, 4294901760
        %v1182 = vsub.f32 %v1057, %v1181
        %v1183 = vand.u32 %v1182, 4294901760
        %v1184 = vsub.f32 %v1182, %v1183
        %v1185 = vand.u32 %v1184, 4294901760
        %1186 = vmatpush.msra.mxu0 %v1185
        %v1187 = vand.u32 %v1055, 4294901760
        %v1188 = vsub.f32 %v1055, %v1187
        %v1189 = vand.u32 %v1188, 4294901760
        %v1190 = vsub.f32 %v1188, %v1189
        %v1191 = vand.u32 %v1190, 4294901760
        %1192 = vmatpush.msra.mxu0 %v1191
        %v1193 = vand.u32 %v1093, 4294901760
        %1194 = vmatmul.f32.gmra.mxu0 %v1193
        %v1195 = vpop.f32.mrf.mxu0
        %v1196 = vadd.f32 %v1131, %v1195
        %v1197 = vand.u32 %v1096, 4294901760
        %1198 = vmatmul.f32.gmra.mxu0 %v1197
        %v1199 = vpop.f32.mrf.mxu0
        %v1200 = vadd.f32 %v1139, %v1199
        %v1201 = vand.u32 %v1099, 4294901760
        %1202 = vmatmul.f32.gmra.mxu0 %v1201
        %v1203 = vpop.f32.mrf.mxu0
        %v1204 = vadd.f32 %v1147, %v1203
        %v1205 = vand.u32 %v1102, 4294901760
        %1206 = vmatmul.f32.gmra.mxu0 %v1205
        %v1207 = vpop.f32.mrf.mxu0
        %v1208 = vadd.f32 %v1155, %v1207
        %1209 = vdwg.mxu0
        %1210 = vmatpush.msra.mxu0 0.0
        %1211 = vmatpush.msra.mxu0 0.0
        %1212 = vmatpush.msra.mxu0 0.0
        %1213 = vmatpush.msra.mxu0 0.0
        %1214 = vmatpush.msra.mxu0 0.0
        %1215 = vmatpush.msra.mxu0 0.0
        %1216 = vmatpush.msra.mxu0 0.0
        %1217 = vmatpush.msra.mxu0 0.0
        %1218 = vmatpush.msra.mxu0 0.0
        %1219 = vmatpush.msra.mxu0 0.0
        %1220 = vmatpush.msra.mxu0 0.0
        %1221 = vmatpush.msra.mxu0 0.0
        %v1222 = vand.u32 %v1061, 4294901760
        %v1223 = vsub.f32 %v1061, %v1222
        %1224 = vmatpush.msra.mxu0 %v1223
        %v1225 = vand.u32 %v1059, 4294901760
        %v1226 = vsub.f32 %v1059, %v1225
        %1227 = vmatpush.msra.mxu0 %v1226
        %v1228 = vand.u32 %v1057, 4294901760
        %v1229 = vsub.f32 %v1057, %v1228
        %1230 = vmatpush.msra.mxu0 %v1229
        %v1231 = vand.u32 %v1055, 4294901760
        %v1232 = vsub.f32 %v1055, %v1231
        %1233 = vmatpush.msra.mxu0 %v1232
        %v1234 = vand.u32 %v1093, 4294901760
        %v1235 = vsub.f32 %v1093, %v1234
        %1236 = vmatmul.f32.gmra.mxu0 %v1235
        %v1237 = vpop.f32.mrf.mxu0
        %v1238 = vadd.f32 %v1196, %v1237
        %v1239 = vand.u32 %v1096, 4294901760
        %v1240 = vsub.f32 %v1096, %v1239
        %1241 = vmatmul.f32.gmra.mxu0 %v1240
        %v1242 = vpop.f32.mrf.mxu0
        %v1243 = vadd.f32 %v1200, %v1242
        %v1244 = vand.u32 %v1099, 4294901760
        %v1245 = vsub.f32 %v1099, %v1244
        %1246 = vmatmul.f32.gmra.mxu0 %v1245
        %v1247 = vpop.f32.mrf.mxu0
        %v1248 = vadd.f32 %v1204, %v1247
        %v1249 = vand.u32 %v1102, 4294901760
        %v1250 = vsub.f32 %v1102, %v1249
        %1251 = vmatmul.f32.gmra.mxu0 %v1250
        %v1252 = vpop.f32.mrf.mxu0
        %v1253 = vadd.f32 %v1208, %v1252
        %1254 = vdwg.mxu0
        %1255 = vmatpush.msra.mxu0 0.0
        %1256 = vmatpush.msra.mxu0 0.0
        %1257 = vmatpush.msra.mxu0 0.0
        %1258 = vmatpush.msra.mxu0 0.0
        %1259 = vmatpush.msra.mxu0 0.0
        %1260 = vmatpush.msra.mxu0 0.0
        %1261 = vmatpush.msra.mxu0 0.0
        %1262 = vmatpush.msra.mxu0 0.0
        %1263 = vmatpush.msra.mxu0 0.0
        %1264 = vmatpush.msra.mxu0 0.0
        %1265 = vmatpush.msra.mxu0 0.0
        %1266 = vmatpush.msra.mxu0 0.0
        %v1267 = vand.u32 %v1061, 4294901760
        %1268 = vmatpush.msra.mxu0 %v1267
        %v1269 = vand.u32 %v1059, 4294901760
        %1270 = vmatpush.msra.mxu0 %v1269
        %v1271 = vand.u32 %v1057, 4294901760
        %1272 = vmatpush.msra.mxu0 %v1271
        %v1273 = vand.u32 %v1055, 4294901760
        %1274 = vmatpush.msra.mxu0 %v1273
        %v1275 = vand.u32 %v1093, 4294901760
        %v1276 = vsub.f32 %v1093, %v1275
        %v1277 = vand.u32 %v1276, 4294901760
        %1278 = vmatmul.f32.gmra.mxu0 %v1277
        %v1279 = vpop.f32.mrf.mxu0
        %v1280 = vadd.f32 %v1238, %v1279
        %v1281 = vand.u32 %v1096, 4294901760
        %v1282 = vsub.f32 %v1096, %v1281
        %v1283 = vand.u32 %v1282, 4294901760
        %1284 = vmatmul.f32.gmra.mxu0 %v1283
        %v1285 = vpop.f32.mrf.mxu0
        %v1286 = vadd.f32 %v1243, %v1285
        %v1287 = vand.u32 %v1099, 4294901760
        %v1288 = vsub.f32 %v1099, %v1287
        %v1289 = vand.u32 %v1288, 4294901760
        %1290 = vmatmul.f32.gmra.mxu0 %v1289
        %v1291 = vpop.f32.mrf.mxu0
        %v1292 = vadd.f32 %v1248, %v1291
        %v1293 = vand.u32 %v1102, 4294901760
        %v1294 = vsub.f32 %v1102, %v1293
        %v1295 = vand.u32 %v1294, 4294901760
        %1296 = vmatmul.f32.gmra.mxu0 %v1295
        %v1297 = vpop.f32.mrf.mxu0
        %v1298 = vadd.f32 %v1253, %v1297
        %1299 = vdwg.mxu0
        %1300 = vmatpush.msra.mxu0 0.0
        %1301 = vmatpush.msra.mxu0 0.0
        %1302 = vmatpush.msra.mxu0 0.0
        %1303 = vmatpush.msra.mxu0 0.0
        %1304 = vmatpush.msra.mxu0 0.0
        %1305 = vmatpush.msra.mxu0 0.0
        %1306 = vmatpush.msra.mxu0 0.0
        %1307 = vmatpush.msra.mxu0 0.0
        %1308 = vmatpush.msra.mxu0 0.0
        %1309 = vmatpush.msra.mxu0 0.0
        %1310 = vmatpush.msra.mxu0 0.0
        %1311 = vmatpush.msra.mxu0 0.0
        %v1312 = vand.u32 %v1061, 4294901760
        %v1313 = vsub.f32 %v1061, %v1312
        %v1314 = vand.u32 %v1313, 4294901760
        %1315 = vmatpush.msra.mxu0 %v1314
        %v1316 = vand.u32 %v1059, 4294901760
        %v1317 = vsub.f32 %v1059, %v1316
        %v1318 = vand.u32 %v1317, 4294901760
        %1319 = vmatpush.msra.mxu0 %v1318
        %v1320 = vand.u32 %v1057, 4294901760
        %v1321 = vsub.f32 %v1057, %v1320
        %v1322 = vand.u32 %v1321, 4294901760
        %1323 = vmatpush.msra.mxu0 %v1322
        %v1324 = vand.u32 %v1055, 4294901760
        %v1325 = vsub.f32 %v1055, %v1324
        %v1326 = vand.u32 %v1325, 4294901760
        %1327 = vmatpush.msra.mxu0 %v1326
        %v1328 = vand.u32 %v1093, 4294901760
        %1329 = vmatmul.f32.gmra.mxu0 %v1328
        %v1330 = vpop.f32.mrf.mxu0
        %v1331 = vadd.f32 %v1280, %v1330
        %v1332 = vand.u32 %v1096, 4294901760
        %1333 = vmatmul.f32.gmra.mxu0 %v1332
        %v1334 = vpop.f32.mrf.mxu0
        %v1335 = vadd.f32 %v1286, %v1334
        %v1336 = vand.u32 %v1099, 4294901760
        %1337 = vmatmul.f32.gmra.mxu0 %v1336
        %v1338 = vpop.f32.mrf.mxu0
        %v1339 = vadd.f32 %v1292, %v1338
        %v1340 = vand.u32 %v1102, 4294901760
        %1341 = vmatmul.f32.gmra.mxu0 %v1340
        %v1342 = vpop.f32.mrf.mxu0
        %v1343 = vadd.f32 %v1298, %v1342
        %1344 = vdwg.mxu0
        %1345 = vmatpush.msra.mxu0 0.0
        %1346 = vmatpush.msra.mxu0 0.0
        %1347 = vmatpush.msra.mxu0 0.0
        %1348 = vmatpush.msra.mxu0 0.0
        %1349 = vmatpush.msra.mxu0 0.0
        %1350 = vmatpush.msra.mxu0 0.0
        %1351 = vmatpush.msra.mxu0 0.0
        %1352 = vmatpush.msra.mxu0 0.0
        %1353 = vmatpush.msra.mxu0 0.0
        %1354 = vmatpush.msra.mxu0 0.0
        %1355 = vmatpush.msra.mxu0 0.0
        %1356 = vmatpush.msra.mxu0 0.0
        %v1357 = vand.u32 %v1061, 4294901760
        %1358 = vmatpush.msra.mxu0 %v1357
        %v1359 = vand.u32 %v1059, 4294901760
        %1360 = vmatpush.msra.mxu0 %v1359
        %v1361 = vand.u32 %v1057, 4294901760
        %1362 = vmatpush.msra.mxu0 %v1361
        %v1363 = vand.u32 %v1055, 4294901760
        %1364 = vmatpush.msra.mxu0 %v1363
        %v1365 = vand.u32 %v1093, 4294901760
        %1366 = vmatmul.f32.gmra.mxu0 %v1365
        %v1367 = vpop.f32.mrf.mxu0
        %v1368 = vadd.f32 %v1331, %v1367
        %v1369 = vand.u32 %v1096, 4294901760
        %1370 = vmatmul.f32.gmra.mxu0 %v1369
        %v1371 = vpop.f32.mrf.mxu0
        %v1372 = vadd.f32 %v1335, %v1371
        %v1373 = vand.u32 %v1099, 4294901760
        %1374 = vmatmul.f32.gmra.mxu0 %v1373
        %v1375 = vpop.f32.mrf.mxu0
        %v1376 = vadd.f32 %v1339, %v1375
        %v1377 = vand.u32 %v1102, 4294901760
        %1378 = vmatmul.f32.gmra.mxu0 %v1377
        %v1379 = vpop.f32.mrf.mxu0
        %v1380 = vadd.f32 %v1343, %v1379
        %1381 = vdwg.mxu0
        %1382 = vmatpush.msra.mxu0 0.0
        %1383 = vmatpush.msra.mxu0 0.0
        %1384 = vmatpush.msra.mxu0 0.0
        %1385 = vmatpush.msra.mxu0 0.0
        %1386 = vmatpush.msra.mxu0 0.0
        %1387 = vmatpush.msra.mxu0 0.0
        %1388 = vmatpush.msra.mxu0 0.0
        %1389 = vmatpush.msra.mxu0 0.0
        %1390 = vmatpush.msra.mxu0 0.0
        %1391 = vmatpush.msra.mxu0 0.0
        %1392 = vmatpush.msra.mxu0 0.0
        %1393 = vmatpush.msra.mxu0 0.0
        %v1394 = vand.u32 %v1062, 4294901760
        %1395 = vmatpush.msra.mxu0 %v1394
        %v1396 = vand.u32 %v1060, 4294901760
        %1397 = vmatpush.msra.mxu0 %v1396
        %v1398 = vand.u32 %v1058, 4294901760
        %1399 = vmatpush.msra.mxu0 %v1398
        %v1400 = vand.u32 %v1056, 4294901760
        %1401 = vmatpush.msra.mxu0 %v1400
        %v1402 = vand.u32 %v1093, 4294901760
        %v1403 = vsub.f32 %v1093, %v1402
        %v1404 = vand.u32 %v1403, 4294901760
        %v1405 = vsub.f32 %v1403, %v1404
        %v1406 = vand.u32 %v1405, 4294901760
        %1407 = vmatmul.f32.gmra.mxu0 %v1406
        %v1408 = vpop.f32.mrf.mxu0
        %v1409 = vadd.f32 %v1074, %v1408
        %v1410 = vand.u32 %v1096, 4294901760
        %v1411 = vsub.f32 %v1096, %v1410
        %v1412 = vand.u32 %v1411, 4294901760
        %v1413 = vsub.f32 %v1411, %v1412
        %v1414 = vand.u32 %v1413, 4294901760
        %1415 = vmatmul.f32.gmra.mxu0 %v1414
        %v1416 = vpop.f32.mrf.mxu0
        %v1417 = vadd.f32 %v1079, %v1416
        %v1418 = vand.u32 %v1099, 4294901760
        %v1419 = vsub.f32 %v1099, %v1418
        %v1420 = vand.u32 %v1419, 4294901760
        %v1421 = vsub.f32 %v1419, %v1420
        %v1422 = vand.u32 %v1421, 4294901760
        %1423 = vmatmul.f32.gmra.mxu0 %v1422
        %v1424 = vpop.f32.mrf.mxu0
        %v1425 = vadd.f32 %v1084, %v1424
        %v1426 = vand.u32 %v1102, 4294901760
        %v1427 = vsub.f32 %v1102, %v1426
        %v1428 = vand.u32 %v1427, 4294901760
        %v1429 = vsub.f32 %v1427, %v1428
        %v1430 = vand.u32 %v1429, 4294901760
        %1431 = vmatmul.f32.gmra.mxu0 %v1430
        %v1432 = vpop.f32.mrf.mxu0
        %v1433 = vadd.f32 %v1089, %v1432
        %1434 = vdwg.mxu0
        %1435 = vmatpush.msra.mxu0 0.0
        %1436 = vmatpush.msra.mxu0 0.0
        %1437 = vmatpush.msra.mxu0 0.0
        %1438 = vmatpush.msra.mxu0 0.0
        %1439 = vmatpush.msra.mxu0 0.0
        %1440 = vmatpush.msra.mxu0 0.0
        %1441 = vmatpush.msra.mxu0 0.0
        %1442 = vmatpush.msra.mxu0 0.0
        %1443 = vmatpush.msra.mxu0 0.0
        %1444 = vmatpush.msra.mxu0 0.0
        %1445 = vmatpush.msra.mxu0 0.0
        %1446 = vmatpush.msra.mxu0 0.0
        %v1447 = vand.u32 %v1062, 4294901760
        %v1448 = vsub.f32 %v1062, %v1447
        %v1449 = vand.u32 %v1448, 4294901760
        %v1450 = vsub.f32 %v1448, %v1449
        %v1451 = vand.u32 %v1450, 4294901760
        %1452 = vmatpush.msra.mxu0 %v1451
        %v1453 = vand.u32 %v1060, 4294901760
        %v1454 = vsub.f32 %v1060, %v1453
        %v1455 = vand.u32 %v1454, 4294901760
        %v1456 = vsub.f32 %v1454, %v1455
        %v1457 = vand.u32 %v1456, 4294901760
        %1458 = vmatpush.msra.mxu0 %v1457
        %v1459 = vand.u32 %v1058, 4294901760
        %v1460 = vsub.f32 %v1058, %v1459
        %v1461 = vand.u32 %v1460, 4294901760
        %v1462 = vsub.f32 %v1460, %v1461
        %v1463 = vand.u32 %v1462, 4294901760
        %1464 = vmatpush.msra.mxu0 %v1463
        %v1465 = vand.u32 %v1056, 4294901760
        %v1466 = vsub.f32 %v1056, %v1465
        %v1467 = vand.u32 %v1466, 4294901760
        %v1468 = vsub.f32 %v1466, %v1467
        %v1469 = vand.u32 %v1468, 4294901760
        %1470 = vmatpush.msra.mxu0 %v1469
        %v1471 = vand.u32 %v1093, 4294901760
        %1472 = vmatmul.f32.gmra.mxu0 %v1471
        %v1473 = vpop.f32.mrf.mxu0
        %v1474 = vadd.f32 %v1409, %v1473
        %v1475 = vand.u32 %v1096, 4294901760
        %1476 = vmatmul.f32.gmra.mxu0 %v1475
        %v1477 = vpop.f32.mrf.mxu0
        %v1478 = vadd.f32 %v1417, %v1477
        %v1479 = vand.u32 %v1099, 4294901760
        %1480 = vmatmul.f32.gmra.mxu0 %v1479
        %v1481 = vpop.f32.mrf.mxu0
        %v1482 = vadd.f32 %v1425, %v1481
        %v1483 = vand.u32 %v1102, 4294901760
        %1484 = vmatmul.f32.gmra.mxu0 %v1483
        %v1485 = vpop.f32.mrf.mxu0
        %v1486 = vadd.f32 %v1433, %v1485
        %1487 = vdwg.mxu0
        %1488 = vmatpush.msra.mxu0 0.0
        %1489 = vmatpush.msra.mxu0 0.0
        %1490 = vmatpush.msra.mxu0 0.0
        %1491 = vmatpush.msra.mxu0 0.0
        %1492 = vmatpush.msra.mxu0 0.0
        %1493 = vmatpush.msra.mxu0 0.0
        %1494 = vmatpush.msra.mxu0 0.0
        %1495 = vmatpush.msra.mxu0 0.0
        %1496 = vmatpush.msra.mxu0 0.0
        %1497 = vmatpush.msra.mxu0 0.0
        %1498 = vmatpush.msra.mxu0 0.0
        %1499 = vmatpush.msra.mxu0 0.0
        %v1500 = vand.u32 %v1062, 4294901760
        %v1501 = vsub.f32 %v1062, %v1500
        %1502 = vmatpush.msra.mxu0 %v1501
        %v1503 = vand.u32 %v1060, 4294901760
        %v1504 = vsub.f32 %v1060, %v1503
        %1505 = vmatpush.msra.mxu0 %v1504
        %v1506 = vand.u32 %v1058, 4294901760
        %v1507 = vsub.f32 %v1058, %v1506
        %1508 = vmatpush.msra.mxu0 %v1507
        %v1509 = vand.u32 %v1056, 4294901760
        %v1510 = vsub.f32 %v1056, %v1509
        %1511 = vmatpush.msra.mxu0 %v1510
        %v1512 = vand.u32 %v1093, 4294901760
        %v1513 = vsub.f32 %v1093, %v1512
        %1514 = vmatmul.f32.gmra.mxu0 %v1513
        %v1515 = vpop.f32.mrf.mxu0
        %v1516 = vadd.f32 %v1474, %v1515
        %v1517 = vand.u32 %v1096, 4294901760
        %v1518 = vsub.f32 %v1096, %v1517
        %1519 = vmatmul.f32.gmra.mxu0 %v1518
        %v1520 = vpop.f32.mrf.mxu0
        %v1521 = vadd.f32 %v1478, %v1520
        %v1522 = vand.u32 %v1099, 4294901760
        %v1523 = vsub.f32 %v1099, %v1522
        %1524 = vmatmul.f32.gmra.mxu0 %v1523
        %v1525 = vpop.f32.mrf.mxu0
        %v1526 = vadd.f32 %v1482, %v1525
        %v1527 = vand.u32 %v1102, 4294901760
        %v1528 = vsub.f32 %v1102, %v1527
        %1529 = vmatmul.f32.gmra.mxu0 %v1528
        %v1530 = vpop.f32.mrf.mxu0
        %v1531 = vadd.f32 %v1486, %v1530
        %1532 = vdwg.mxu0
        %1533 = vmatpush.msra.mxu0 0.0
        %1534 = vmatpush.msra.mxu0 0.0
        %1535 = vmatpush.msra.mxu0 0.0
        %1536 = vmatpush.msra.mxu0 0.0
        %1537 = vmatpush.msra.mxu0 0.0
        %1538 = vmatpush.msra.mxu0 0.0
        %1539 = vmatpush.msra.mxu0 0.0
        %1540 = vmatpush.msra.mxu0 0.0
        %1541 = vmatpush.msra.mxu0 0.0
        %1542 = vmatpush.msra.mxu0 0.0
        %1543 = vmatpush.msra.mxu0 0.0
        %1544 = vmatpush.msra.mxu0 0.0
        %v1545 = vand.u32 %v1062, 4294901760
        %1546 = vmatpush.msra.mxu0 %v1545
        %v1547 = vand.u32 %v1060, 4294901760
        %1548 = vmatpush.msra.mxu0 %v1547
        %v1549 = vand.u32 %v1058, 4294901760
        %1550 = vmatpush.msra.mxu0 %v1549
        %v1551 = vand.u32 %v1056, 4294901760
        %1552 = vmatpush.msra.mxu0 %v1551
        %v1553 = vand.u32 %v1093, 4294901760
        %v1554 = vsub.f32 %v1093, %v1553
        %v1555 = vand.u32 %v1554, 4294901760
        %1556 = vmatmul.f32.gmra.mxu0 %v1555
        %v1557 = vpop.f32.mrf.mxu0
        %v1558 = vadd.f32 %v1516, %v1557
        %v1559 = vand.u32 %v1096, 4294901760
        %v1560 = vsub.f32 %v1096, %v1559
        %v1561 = vand.u32 %v1560, 4294901760
        %1562 = vmatmul.f32.gmra.mxu0 %v1561
        %v1563 = vpop.f32.mrf.mxu0
        %v1564 = vadd.f32 %v1521, %v1563
        %v1565 = vand.u32 %v1099, 4294901760
        %v1566 = vsub.f32 %v1099, %v1565
        %v1567 = vand.u32 %v1566, 4294901760
        %1568 = vmatmul.f32.gmra.mxu0 %v1567
        %v1569 = vpop.f32.mrf.mxu0
        %v1570 = vadd.f32 %v1526, %v1569
        %v1571 = vand.u32 %v1102, 4294901760
        %v1572 = vsub.f32 %v1102, %v1571
        %v1573 = vand.u32 %v1572, 4294901760
        %1574 = vmatmul.f32.gmra.mxu0 %v1573
        %v1575 = vpop.f32.mrf.mxu0
        %v1576 = vadd.f32 %v1531, %v1575
        %1577 = vdwg.mxu0
        %1578 = vmatpush.msra.mxu0 0.0
        %1579 = vmatpush.msra.mxu0 0.0
        %1580 = vmatpush.msra.mxu0 0.0
        %1581 = vmatpush.msra.mxu0 0.0
        %1582 = vmatpush.msra.mxu0 0.0
        %1583 = vmatpush.msra.mxu0 0.0
        %1584 = vmatpush.msra.mxu0 0.0
        %1585 = vmatpush.msra.mxu0 0.0
        %1586 = vmatpush.msra.mxu0 0.0
        %1587 = vmatpush.msra.mxu0 0.0
        %1588 = vmatpush.msra.mxu0 0.0
        %1589 = vmatpush.msra.mxu0 0.0
        %v1590 = vand.u32 %v1062, 4294901760
        %v1591 = vsub.f32 %v1062, %v1590
        %v1592 = vand.u32 %v1591, 4294901760
        %1593 = vmatpush.msra.mxu0 %v1592
        %v1594 = vand.u32 %v1060, 4294901760
        %v1595 = vsub.f32 %v1060, %v1594
        %v1596 = vand.u32 %v1595, 4294901760
        %1597 = vmatpush.msra.mxu0 %v1596
        %v1598 = vand.u32 %v1058, 4294901760
        %v1599 = vsub.f32 %v1058, %v1598
        %v1600 = vand.u32 %v1599, 4294901760
        %1601 = vmatpush.msra.mxu0 %v1600
        %v1602 = vand.u32 %v1056, 4294901760
        %v1603 = vsub.f32 %v1056, %v1602
        %v1604 = vand.u32 %v1603, 4294901760
        %1605 = vmatpush.msra.mxu0 %v1604
        %v1606 = vand.u32 %v1093, 4294901760
        %1607 = vmatmul.f32.gmra.mxu0 %v1606
        %v1608 = vpop.f32.mrf.mxu0
        %v1609 = vadd.f32 %v1558, %v1608
        %v1610 = vand.u32 %v1096, 4294901760
        %1611 = vmatmul.f32.gmra.mxu0 %v1610
        %v1612 = vpop.f32.mrf.mxu0
        %v1613 = vadd.f32 %v1564, %v1612
        %v1614 = vand.u32 %v1099, 4294901760
        %1615 = vmatmul.f32.gmra.mxu0 %v1614
        %v1616 = vpop.f32.mrf.mxu0
        %v1617 = vadd.f32 %v1570, %v1616
        %v1618 = vand.u32 %v1102, 4294901760
        %1619 = vmatmul.f32.gmra.mxu0 %v1618
        %v1620 = vpop.f32.mrf.mxu0
        %v1621 = vadd.f32 %v1576, %v1620
        %1622 = vdwg.mxu0
        %1623 = vmatpush.msra.mxu0 0.0
        %1624 = vmatpush.msra.mxu0 0.0
        %1625 = vmatpush.msra.mxu0 0.0
        %1626 = vmatpush.msra.mxu0 0.0
        %1627 = vmatpush.msra.mxu0 0.0
        %1628 = vmatpush.msra.mxu0 0.0
        %1629 = vmatpush.msra.mxu0 0.0
        %1630 = vmatpush.msra.mxu0 0.0
        %1631 = vmatpush.msra.mxu0 0.0
        %1632 = vmatpush.msra.mxu0 0.0
        %1633 = vmatpush.msra.mxu0 0.0
        %1634 = vmatpush.msra.mxu0 0.0
        %v1635 = vand.u32 %v1062, 4294901760
        %1636 = vmatpush.msra.mxu0 %v1635
        %v1637 = vand.u32 %v1060, 4294901760
        %1638 = vmatpush.msra.mxu0 %v1637
        %v1639 = vand.u32 %v1058, 4294901760
        %1640 = vmatpush.msra.mxu0 %v1639
        %v1641 = vand.u32 %v1056, 4294901760
        %1642 = vmatpush.msra.mxu0 %v1641
        %v1643 = vand.u32 %v1093, 4294901760
        %1644 = vmatmul.f32.gmra.mxu0 %v1643
        %v1645 = vpop.f32.mrf.mxu0
        %v1646 = vadd.f32 %v1609, %v1645
        %v1647 = vand.u32 %v1096, 4294901760
        %1648 = vmatmul.f32.gmra.mxu0 %v1647
        %v1649 = vpop.f32.mrf.mxu0
        %v1650 = vadd.f32 %v1613, %v1649
        %v1651 = vand.u32 %v1099, 4294901760
        %1652 = vmatmul.f32.gmra.mxu0 %v1651
        %v1653 = vpop.f32.mrf.mxu0
        %v1654 = vadd.f32 %v1617, %v1653
        %v1655 = vand.u32 %v1102, 4294901760
        %1656 = vmatmul.f32.gmra.mxu0 %v1655
        %v1657 = vpop.f32.mrf.mxu0
        %v1658 = vadd.f32 %v1621, %v1657
        %1659 = vdwg.mxu0
        %v1660 = vmul.f32 %v1368, 0.31830987
        %v1661 = vmul.f32 %v1646, 0.31830987
        %v1662 = vmul.f32 %v1372, 0.31830987
        %v1663 = vmul.f32 %v1650, 0.31830987
        %v1664 = vmul.f32 %v1376, 0.31830987
        %v1665 = vmul.f32 %v1654, 0.31830987
        %v1666 = vmul.f32 %v1380, 0.31830987
        %v1667 = vmul.f32 %v1658, 0.31830987
        %v1668 = vround.ne.pseudo %v1660
        %v1669 = vround.ne.pseudo %v1661
        %v1670 = vround.ne.pseudo %v1662
        %v1671 = vround.ne.pseudo %v1663
        %v1672 = vround.ne.pseudo %v1664
        %v1673 = vround.ne.pseudo %v1665
        %v1674 = vround.ne.pseudo %v1666
        %v1675 = vround.ne.pseudo %v1667
        %v1676 = vmul.f32 %v1668, 3.140625
        %v1677 = vmul.f32 %v1669, 3.140625
        %v1678 = vmul.f32 %v1670, 3.140625
        %v1679 = vmul.f32 %v1671, 3.140625
        %v1680 = vmul.f32 %v1672, 3.140625
        %v1681 = vmul.f32 %v1673, 3.140625
        %v1682 = vmul.f32 %v1674, 3.140625
        %v1683 = vmul.f32 %v1675, 3.140625
        %v1684 = vsub.f32 %v1368, %v1676
        %v1685 = vsub.f32 %v1646, %v1677
        %v1686 = vsub.f32 %v1372, %v1678
        %v1687 = vsub.f32 %v1650, %v1679
        %v1688 = vsub.f32 %v1376, %v1680
        %v1689 = vsub.f32 %v1654, %v1681
        %v1690 = vsub.f32 %v1380, %v1682
        %v1691 = vsub.f32 %v1658, %v1683
        %v1692 = vmul.f32 %v1668, 0.0009676536
        %v1693 = vmul.f32 %v1669, 0.0009676536
        %v1694 = vmul.f32 %v1670, 0.0009676536
        %v1695 = vmul.f32 %v1671, 0.0009676536
        %v1696 = vmul.f32 %v1672, 0.0009676536
        %v1697 = vmul.f32 %v1673, 0.0009676536
        %v1698 = vmul.f32 %v1674, 0.0009676536
        %v1699 = vmul.f32 %v1675, 0.0009676536
        %v1700 = vsub.f32 %v1684, %v1692
        %v1701 = vsub.f32 %v1685, %v1693
        %v1702 = vsub.f32 %v1686, %v1694
        %v1703 = vsub.f32 %v1687, %v1695
        %v1704 = vsub.f32 %v1688, %v1696
        %v1705 = vsub.f32 %v1689, %v1697
        %v1706 = vsub.f32 %v1690, %v1698
        %v1707 = vsub.f32 %v1691, %v1699
        %v1708 = vmul.f32 %v1668, 0.5
        %v1709 = vmul.f32 %v1669, 0.5
        %v1710 = vmul.f32 %v1670, 0.5
        %v1711 = vmul.f32 %v1671, 0.5
        %v1712 = vmul.f32 %v1672, 0.5
        %v1713 = vmul.f32 %v1673, 0.5
        %v1714 = vmul.f32 %v1674, 0.5
        %v1715 = vmul.f32 %v1675, 0.5
        %v1716 = vfloor.f32 %v1708
        %v1717 = vfloor.f32 %v1709
        %v1718 = vfloor.f32 %v1710
        %v1719 = vfloor.f32 %v1711
        %v1720 = vfloor.f32 %v1712
        %v1721 = vfloor.f32 %v1713
        %v1722 = vfloor.f32 %v1714
        %v1723 = vfloor.f32 %v1715
        %v1724 = vmul.f32 %v1716, 2.0
        %v1725 = vmul.f32 %v1717, 2.0
        %v1726 = vmul.f32 %v1718, 2.0
        %v1727 = vmul.f32 %v1719, 2.0
        %v1728 = vmul.f32 %v1720, 2.0
        %v1729 = vmul.f32 %v1721, 2.0
        %v1730 = vmul.f32 %v1722, 2.0
        %v1731 = vmul.f32 %v1723, 2.0
        %v1732 = vsub.f32 %v1668, %v1724
        %v1733 = vsub.f32 %v1669, %v1725
        %v1734 = vsub.f32 %v1670, %v1726
        %v1735 = vsub.f32 %v1671, %v1727
        %v1736 = vsub.f32 %v1672, %v1728
        %v1737 = vsub.f32 %v1673, %v1729
        %v1738 = vsub.f32 %v1674, %v1730
        %v1739 = vsub.f32 %v1675, %v1731
        %v1740 = vmul.f32 %v1732, 2.0
        %v1741 = vmul.f32 %v1733, 2.0
        %v1742 = vmul.f32 %v1734, 2.0
        %v1743 = vmul.f32 %v1735, 2.0
        %v1744 = vmul.f32 %v1736, 2.0
        %v1745 = vmul.f32 %v1737, 2.0
        %v1746 = vmul.f32 %v1738, 2.0
        %v1747 = vmul.f32 %v1739, 2.0
        %v1748 = vsub.f32 1.0, %v1740
        %v1749 = vsub.f32 1.0, %v1741
        %v1750 = vsub.f32 1.0, %v1742
        %v1751 = vsub.f32 1.0, %v1743
        %v1752 = vsub.f32 1.0, %v1744
        %v1753 = vsub.f32 1.0, %v1745
        %v1754 = vsub.f32 1.0, %v1746
        %v1755 = vsub.f32 1.0, %v1747
        %v1756 = vmul.f32 %v1700, %v1700
        %v1757 = vmul.f32 %v1701, %v1701
        %v1758 = vmul.f32 %v1702, %v1702
        %v1759 = vmul.f32 %v1703, %v1703
        %v1760 = vmul.f32 %v1704, %v1704
        %v1761 = vmul.f32 %v1705, %v1705
        %v1762 = vmul.f32 %v1706, %v1706
        %v1763 = vmul.f32 %v1707, %v1707
        %v1764 = vmul.f32 %v1756, -2.5052108e-08
        %v1765 = vmul.f32 %v1757, -2.5052108e-08
        %v1766 = vmul.f32 %v1758, -2.5052108e-08
        %v1767 = vmul.f32 %v1759, -2.5052108e-08
        %v1768 = vmul.f32 %v1760, -2.5052108e-08
        %v1769 = vmul.f32 %v1761, -2.5052108e-08
        %v1770 = vmul.f32 %v1762, -2.5052108e-08
        %v1771 = vmul.f32 %v1763, -2.5052108e-08
        %v1772 = vadd.f32 %v1764, 2.7557319e-06
        %v1773 = vadd.f32 %v1765, 2.7557319e-06
        %v1774 = vadd.f32 %v1766, 2.7557319e-06
        %v1775 = vadd.f32 %v1767, 2.7557319e-06
        %v1776 = vadd.f32 %v1768, 2.7557319e-06
        %v1777 = vadd.f32 %v1769, 2.7557319e-06
        %v1778 = vadd.f32 %v1770, 2.7557319e-06
        %v1779 = vadd.f32 %v1771, 2.7557319e-06
        %v1780 = vmul.f32 %v1772, %v1756
        %v1781 = vmul.f32 %v1773, %v1757
        %v1782 = vmul.f32 %v1774, %v1758
        %v1783 = vmul.f32 %v1775, %v1759
        %v1784 = vmul.f32 %v1776, %v1760
        %v1785 = vmul.f32 %v1777, %v1761
        %v1786 = vmul.f32 %v1778, %v1762
        %v1787 = vmul.f32 %v1779, %v1763
        %v1788 = vsub.f32 %v1780, 0.0001984127
        %v1789 = vsub.f32 %v1781, 0.0001984127
        %v1790 = vsub.f32 %v1782, 0.0001984127
        %v1791 = vsub.f32 %v1783, 0.0001984127
        %v1792 = vsub.f32 %v1784, 0.0001984127
        %v1793 = vsub.f32 %v1785, 0.0001984127
        %v1794 = vsub.f32 %v1786, 0.0001984127
        %v1795 = vsub.f32 %v1787, 0.0001984127
        %v1796 = vmul.f32 %v1788, %v1756
        %v1797 = vmul.f32 %v1789, %v1757
        %v1798 = vmul.f32 %v1790, %v1758
        %v1799 = vmul.f32 %v1791, %v1759
        %v1800 = vmul.f32 %v1792, %v1760
        %v1801 = vmul.f32 %v1793, %v1761
        %v1802 = vmul.f32 %v1794, %v1762
        %v1803 = vmul.f32 %v1795, %v1763
        %v1804 = vadd.f32 %v1796, 0.008333334
        %v1805 = vadd.f32 %v1797, 0.008333334
        %v1806 = vadd.f32 %v1798, 0.008333334
        %v1807 = vadd.f32 %v1799, 0.008333334
        %v1808 = vadd.f32 %v1800, 0.008333334
        %v1809 = vadd.f32 %v1801, 0.008333334
        %v1810 = vadd.f32 %v1802, 0.008333334
        %v1811 = vadd.f32 %v1803, 0.008333334
        %v1812 = vmul.f32 %v1804, %v1756
        %v1813 = vmul.f32 %v1805, %v1757
        %v1814 = vmul.f32 %v1806, %v1758
        %v1815 = vmul.f32 %v1807, %v1759
        %v1816 = vmul.f32 %v1808, %v1760
        %v1817 = vmul.f32 %v1809, %v1761
        %v1818 = vmul.f32 %v1810, %v1762
        %v1819 = vmul.f32 %v1811, %v1763
        %v1820 = vsub.f32 %v1812, 0.16666667
        %v1821 = vsub.f32 %v1813, 0.16666667
        %v1822 = vsub.f32 %v1814, 0.16666667
        %v1823 = vsub.f32 %v1815, 0.16666667
        %v1824 = vsub.f32 %v1816, 0.16666667
        %v1825 = vsub.f32 %v1817, 0.16666667
        %v1826 = vsub.f32 %v1818, 0.16666667
        %v1827 = vsub.f32 %v1819, 0.16666667
        %v1828 = vmul.f32 %v1820, %v1756
        %v1829 = vmul.f32 %v1821, %v1757
        %v1830 = vmul.f32 %v1822, %v1758
        %v1831 = vmul.f32 %v1823, %v1759
        %v1832 = vmul.f32 %v1824, %v1760
        %v1833 = vmul.f32 %v1825, %v1761
        %v1834 = vmul.f32 %v1826, %v1762
        %v1835 = vmul.f32 %v1827, %v1763
        %v1836 = vadd.f32 %v1828, 1.0
        %v1837 = vadd.f32 %v1829, 1.0
        %v1838 = vadd.f32 %v1830, 1.0
        %v1839 = vadd.f32 %v1831, 1.0
        %v1840 = vadd.f32 %v1832, 1.0
        %v1841 = vadd.f32 %v1833, 1.0
        %v1842 = vadd.f32 %v1834, 1.0
        %v1843 = vadd.f32 %v1835, 1.0
        %v1844 = vmul.f32 %v1700, %v1836
        %v1845 = vmul.f32 %v1701, %v1837
        %v1846 = vmul.f32 %v1702, %v1838
        %v1847 = vmul.f32 %v1703, %v1839
        %v1848 = vmul.f32 %v1704, %v1840
        %v1849 = vmul.f32 %v1705, %v1841
        %v1850 = vmul.f32 %v1706, %v1842
        %v1851 = vmul.f32 %v1707, %v1843
        %v1852 = vmul.f32 %v1748, %v1844
        %v1853 = vmul.f32 %v1749, %v1845
        %v1854 = vmul.f32 %v1750, %v1846
        %v1855 = vmul.f32 %v1751, %v1847
        %v1856 = vmul.f32 %v1752, %v1848
        %v1857 = vmul.f32 %v1753, %v1849
        %v1858 = vmul.f32 %v1754, %v1850
        %v1859 = vmul.f32 %v1755, %v1851
        %v1860 = vld [vmem:[%s5] sm:$0xff]
        %v1861 = vld [vmem:[%s5 + $0x8] sm:$0xff]
        %v1862 = vld [vmem:[%s5 + $0x10] sm:$0xff]
        %v1863 = vld [vmem:[%s5 + $0x18] sm:$0xff]
        %v1864 = vld [vmem:[%s6] sm:$0xff]
        %v1865 = vld [vmem:[%s6 + $0x8] sm:$0xff]
        %v1866 = vld [vmem:[%s6 + $0x10] sm:$0xff]
        %v1867 = vld [vmem:[%s6 + $0x18] sm:$0xff]
        %1869 = vset.pattern.permute.xlu0 0
        %1870 = vperm.xlu0 %1869, %v1864
        %v1871 = vpop.permute.xlu0 %1870
        %1874 = vset.pattern.permute.xlu0 0
        %1875 = vperm.xlu0 %1874, %v1865
        %v1876 = vpop.permute.xlu0 %1875
        %1879 = vset.pattern.permute.xlu0 0
        %1880 = vperm.xlu0 %1879, %v1866
        %v1881 = vpop.permute.xlu0 %1880
        %1884 = vset.pattern.permute.xlu0 0
        %1885 = vperm.xlu0 %1884, %v1867
        %v1886 = vpop.permute.xlu0 %1885
        %v1889 = vsel %vm1091, %v1860, 0
        %v1892 = vsel %vm1091, %v1861, 0
        %v1895 = vsel %vm1091, %v1862, 0
        %v1898 = vsel %vm1091, %v1863, 0
        %1900 = vmatpush.msra.mxu0 0.0
        %1901 = vmatpush.msra.mxu0 0.0
        %1902 = vmatpush.msra.mxu0 0.0
        %1903 = vmatpush.msra.mxu0 0.0
        %1904 = vmatpush.msra.mxu0 0.0
        %1905 = vmatpush.msra.mxu0 0.0
        %1906 = vmatpush.msra.mxu0 0.0
        %1907 = vmatpush.msra.mxu0 0.0
        %1908 = vmatpush.msra.mxu0 0.0
        %1909 = vmatpush.msra.mxu0 0.0
        %1910 = vmatpush.msra.mxu0 0.0
        %1911 = vmatpush.msra.mxu0 0.0
        %v1912 = vand.u32 %v1858, 4294901760
        %1913 = vmatpush.msra.mxu0 %v1912
        %v1914 = vand.u32 %v1856, 4294901760
        %1915 = vmatpush.msra.mxu0 %v1914
        %v1916 = vand.u32 %v1854, 4294901760
        %1917 = vmatpush.msra.mxu0 %v1916
        %v1918 = vand.u32 %v1852, 4294901760
        %1919 = vmatpush.msra.mxu0 %v1918
        %v1920 = vand.u32 %v1889, 4294901760
        %v1921 = vsub.f32 %v1889, %v1920
        %v1922 = vand.u32 %v1921, 4294901760
        %v1923 = vsub.f32 %v1921, %v1922
        %v1924 = vand.u32 %v1923, 4294901760
        %1925 = vmatmul.f32.gmra.mxu0 %v1924
        %v1926 = vpop.f32.mrf.mxu0
        %v1927 = vadd.f32 %v1871, %v1926
        %v1928 = vand.u32 %v1892, 4294901760
        %v1929 = vsub.f32 %v1892, %v1928
        %v1930 = vand.u32 %v1929, 4294901760
        %v1931 = vsub.f32 %v1929, %v1930
        %v1932 = vand.u32 %v1931, 4294901760
        %1933 = vmatmul.f32.gmra.mxu0 %v1932
        %v1934 = vpop.f32.mrf.mxu0
        %v1935 = vadd.f32 %v1876, %v1934
        %v1936 = vand.u32 %v1895, 4294901760
        %v1937 = vsub.f32 %v1895, %v1936
        %v1938 = vand.u32 %v1937, 4294901760
        %v1939 = vsub.f32 %v1937, %v1938
        %v1940 = vand.u32 %v1939, 4294901760
        %1941 = vmatmul.f32.gmra.mxu0 %v1940
        %v1942 = vpop.f32.mrf.mxu0
        %v1943 = vadd.f32 %v1881, %v1942
        %v1944 = vand.u32 %v1898, 4294901760
        %v1945 = vsub.f32 %v1898, %v1944
        %v1946 = vand.u32 %v1945, 4294901760
        %v1947 = vsub.f32 %v1945, %v1946
        %v1948 = vand.u32 %v1947, 4294901760
        %1949 = vmatmul.f32.gmra.mxu0 %v1948
        %v1950 = vpop.f32.mrf.mxu0
        %v1951 = vadd.f32 %v1886, %v1950
        %1952 = vdwg.mxu0
        %1953 = vmatpush.msra.mxu0 0.0
        %1954 = vmatpush.msra.mxu0 0.0
        %1955 = vmatpush.msra.mxu0 0.0
        %1956 = vmatpush.msra.mxu0 0.0
        %1957 = vmatpush.msra.mxu0 0.0
        %1958 = vmatpush.msra.mxu0 0.0
        %1959 = vmatpush.msra.mxu0 0.0
        %1960 = vmatpush.msra.mxu0 0.0
        %1961 = vmatpush.msra.mxu0 0.0
        %1962 = vmatpush.msra.mxu0 0.0
        %1963 = vmatpush.msra.mxu0 0.0
        %1964 = vmatpush.msra.mxu0 0.0
        %v1965 = vand.u32 %v1858, 4294901760
        %v1966 = vsub.f32 %v1858, %v1965
        %v1967 = vand.u32 %v1966, 4294901760
        %v1968 = vsub.f32 %v1966, %v1967
        %v1969 = vand.u32 %v1968, 4294901760
        %1970 = vmatpush.msra.mxu0 %v1969
        %v1971 = vand.u32 %v1856, 4294901760
        %v1972 = vsub.f32 %v1856, %v1971
        %v1973 = vand.u32 %v1972, 4294901760
        %v1974 = vsub.f32 %v1972, %v1973
        %v1975 = vand.u32 %v1974, 4294901760
        %1976 = vmatpush.msra.mxu0 %v1975
        %v1977 = vand.u32 %v1854, 4294901760
        %v1978 = vsub.f32 %v1854, %v1977
        %v1979 = vand.u32 %v1978, 4294901760
        %v1980 = vsub.f32 %v1978, %v1979
        %v1981 = vand.u32 %v1980, 4294901760
        %1982 = vmatpush.msra.mxu0 %v1981
        %v1983 = vand.u32 %v1852, 4294901760
        %v1984 = vsub.f32 %v1852, %v1983
        %v1985 = vand.u32 %v1984, 4294901760
        %v1986 = vsub.f32 %v1984, %v1985
        %v1987 = vand.u32 %v1986, 4294901760
        %1988 = vmatpush.msra.mxu0 %v1987
        %v1989 = vand.u32 %v1889, 4294901760
        %1990 = vmatmul.f32.gmra.mxu0 %v1989
        %v1991 = vpop.f32.mrf.mxu0
        %v1992 = vadd.f32 %v1927, %v1991
        %v1993 = vand.u32 %v1892, 4294901760
        %1994 = vmatmul.f32.gmra.mxu0 %v1993
        %v1995 = vpop.f32.mrf.mxu0
        %v1996 = vadd.f32 %v1935, %v1995
        %v1997 = vand.u32 %v1895, 4294901760
        %1998 = vmatmul.f32.gmra.mxu0 %v1997
        %v1999 = vpop.f32.mrf.mxu0
        %v2000 = vadd.f32 %v1943, %v1999
        %v2001 = vand.u32 %v1898, 4294901760
        %2002 = vmatmul.f32.gmra.mxu0 %v2001
        %v2003 = vpop.f32.mrf.mxu0
        %v2004 = vadd.f32 %v1951, %v2003
        %2005 = vdwg.mxu0
        %2006 = vmatpush.msra.mxu0 0.0
        %2007 = vmatpush.msra.mxu0 0.0
        %2008 = vmatpush.msra.mxu0 0.0
        %2009 = vmatpush.msra.mxu0 0.0
        %2010 = vmatpush.msra.mxu0 0.0
        %2011 = vmatpush.msra.mxu0 0.0
        %2012 = vmatpush.msra.mxu0 0.0
        %2013 = vmatpush.msra.mxu0 0.0
        %2014 = vmatpush.msra.mxu0 0.0
        %2015 = vmatpush.msra.mxu0 0.0
        %2016 = vmatpush.msra.mxu0 0.0
        %2017 = vmatpush.msra.mxu0 0.0
        %v2018 = vand.u32 %v1858, 4294901760
        %v2019 = vsub.f32 %v1858, %v2018
        %2020 = vmatpush.msra.mxu0 %v2019
        %v2021 = vand.u32 %v1856, 4294901760
        %v2022 = vsub.f32 %v1856, %v2021
        %2023 = vmatpush.msra.mxu0 %v2022
        %v2024 = vand.u32 %v1854, 4294901760
        %v2025 = vsub.f32 %v1854, %v2024
        %2026 = vmatpush.msra.mxu0 %v2025
        %v2027 = vand.u32 %v1852, 4294901760
        %v2028 = vsub.f32 %v1852, %v2027
        %2029 = vmatpush.msra.mxu0 %v2028
        %v2030 = vand.u32 %v1889, 4294901760
        %v2031 = vsub.f32 %v1889, %v2030
        %2032 = vmatmul.f32.gmra.mxu0 %v2031
        %v2033 = vpop.f32.mrf.mxu0
        %v2034 = vadd.f32 %v1992, %v2033
        %v2035 = vand.u32 %v1892, 4294901760
        %v2036 = vsub.f32 %v1892, %v2035
        %2037 = vmatmul.f32.gmra.mxu0 %v2036
        %v2038 = vpop.f32.mrf.mxu0
        %v2039 = vadd.f32 %v1996, %v2038
        %v2040 = vand.u32 %v1895, 4294901760
        %v2041 = vsub.f32 %v1895, %v2040
        %2042 = vmatmul.f32.gmra.mxu0 %v2041
        %v2043 = vpop.f32.mrf.mxu0
        %v2044 = vadd.f32 %v2000, %v2043
        %v2045 = vand.u32 %v1898, 4294901760
        %v2046 = vsub.f32 %v1898, %v2045
        %2047 = vmatmul.f32.gmra.mxu0 %v2046
        %v2048 = vpop.f32.mrf.mxu0
        %v2049 = vadd.f32 %v2004, %v2048
        %2050 = vdwg.mxu0
        %2051 = vmatpush.msra.mxu0 0.0
        %2052 = vmatpush.msra.mxu0 0.0
        %2053 = vmatpush.msra.mxu0 0.0
        %2054 = vmatpush.msra.mxu0 0.0
        %2055 = vmatpush.msra.mxu0 0.0
        %2056 = vmatpush.msra.mxu0 0.0
        %2057 = vmatpush.msra.mxu0 0.0
        %2058 = vmatpush.msra.mxu0 0.0
        %2059 = vmatpush.msra.mxu0 0.0
        %2060 = vmatpush.msra.mxu0 0.0
        %2061 = vmatpush.msra.mxu0 0.0
        %2062 = vmatpush.msra.mxu0 0.0
        %v2063 = vand.u32 %v1858, 4294901760
        %2064 = vmatpush.msra.mxu0 %v2063
        %v2065 = vand.u32 %v1856, 4294901760
        %2066 = vmatpush.msra.mxu0 %v2065
        %v2067 = vand.u32 %v1854, 4294901760
        %2068 = vmatpush.msra.mxu0 %v2067
        %v2069 = vand.u32 %v1852, 4294901760
        %2070 = vmatpush.msra.mxu0 %v2069
        %v2071 = vand.u32 %v1889, 4294901760
        %v2072 = vsub.f32 %v1889, %v2071
        %v2073 = vand.u32 %v2072, 4294901760
        %2074 = vmatmul.f32.gmra.mxu0 %v2073
        %v2075 = vpop.f32.mrf.mxu0
        %v2076 = vadd.f32 %v2034, %v2075
        %v2077 = vand.u32 %v1892, 4294901760
        %v2078 = vsub.f32 %v1892, %v2077
        %v2079 = vand.u32 %v2078, 4294901760
        %2080 = vmatmul.f32.gmra.mxu0 %v2079
        %v2081 = vpop.f32.mrf.mxu0
        %v2082 = vadd.f32 %v2039, %v2081
        %v2083 = vand.u32 %v1895, 4294901760
        %v2084 = vsub.f32 %v1895, %v2083
        %v2085 = vand.u32 %v2084, 4294901760
        %2086 = vmatmul.f32.gmra.mxu0 %v2085
        %v2087 = vpop.f32.mrf.mxu0
        %v2088 = vadd.f32 %v2044, %v2087
        %v2089 = vand.u32 %v1898, 4294901760
        %v2090 = vsub.f32 %v1898, %v2089
        %v2091 = vand.u32 %v2090, 4294901760
        %2092 = vmatmul.f32.gmra.mxu0 %v2091
        %v2093 = vpop.f32.mrf.mxu0
        %v2094 = vadd.f32 %v2049, %v2093
        %2095 = vdwg.mxu0
        %2096 = vmatpush.msra.mxu0 0.0
        %2097 = vmatpush.msra.mxu0 0.0
        %2098 = vmatpush.msra.mxu0 0.0
        %2099 = vmatpush.msra.mxu0 0.0
        %2100 = vmatpush.msra.mxu0 0.0
        %2101 = vmatpush.msra.mxu0 0.0
        %2102 = vmatpush.msra.mxu0 0.0
        %2103 = vmatpush.msra.mxu0 0.0
        %2104 = vmatpush.msra.mxu0 0.0
        %2105 = vmatpush.msra.mxu0 0.0
        %2106 = vmatpush.msra.mxu0 0.0
        %2107 = vmatpush.msra.mxu0 0.0
        %v2108 = vand.u32 %v1858, 4294901760
        %v2109 = vsub.f32 %v1858, %v2108
        %v2110 = vand.u32 %v2109, 4294901760
        %2111 = vmatpush.msra.mxu0 %v2110
        %v2112 = vand.u32 %v1856, 4294901760
        %v2113 = vsub.f32 %v1856, %v2112
        %v2114 = vand.u32 %v2113, 4294901760
        %2115 = vmatpush.msra.mxu0 %v2114
        %v2116 = vand.u32 %v1854, 4294901760
        %v2117 = vsub.f32 %v1854, %v2116
        %v2118 = vand.u32 %v2117, 4294901760
        %2119 = vmatpush.msra.mxu0 %v2118
        %v2120 = vand.u32 %v1852, 4294901760
        %v2121 = vsub.f32 %v1852, %v2120
        %v2122 = vand.u32 %v2121, 4294901760
        %2123 = vmatpush.msra.mxu0 %v2122
        %v2124 = vand.u32 %v1889, 4294901760
        %2125 = vmatmul.f32.gmra.mxu0 %v2124
        %v2126 = vpop.f32.mrf.mxu0
        %v2127 = vadd.f32 %v2076, %v2126
        %v2128 = vand.u32 %v1892, 4294901760
        %2129 = vmatmul.f32.gmra.mxu0 %v2128
        %v2130 = vpop.f32.mrf.mxu0
        %v2131 = vadd.f32 %v2082, %v2130
        %v2132 = vand.u32 %v1895, 4294901760
        %2133 = vmatmul.f32.gmra.mxu0 %v2132
        %v2134 = vpop.f32.mrf.mxu0
        %v2135 = vadd.f32 %v2088, %v2134
        %v2136 = vand.u32 %v1898, 4294901760
        %2137 = vmatmul.f32.gmra.mxu0 %v2136
        %v2138 = vpop.f32.mrf.mxu0
        %v2139 = vadd.f32 %v2094, %v2138
        %2140 = vdwg.mxu0
        %2141 = vmatpush.msra.mxu0 0.0
        %2142 = vmatpush.msra.mxu0 0.0
        %2143 = vmatpush.msra.mxu0 0.0
        %2144 = vmatpush.msra.mxu0 0.0
        %2145 = vmatpush.msra.mxu0 0.0
        %2146 = vmatpush.msra.mxu0 0.0
        %2147 = vmatpush.msra.mxu0 0.0
        %2148 = vmatpush.msra.mxu0 0.0
        %2149 = vmatpush.msra.mxu0 0.0
        %2150 = vmatpush.msra.mxu0 0.0
        %2151 = vmatpush.msra.mxu0 0.0
        %2152 = vmatpush.msra.mxu0 0.0
        %v2153 = vand.u32 %v1858, 4294901760
        %2154 = vmatpush.msra.mxu0 %v2153
        %v2155 = vand.u32 %v1856, 4294901760
        %2156 = vmatpush.msra.mxu0 %v2155
        %v2157 = vand.u32 %v1854, 4294901760
        %2158 = vmatpush.msra.mxu0 %v2157
        %v2159 = vand.u32 %v1852, 4294901760
        %2160 = vmatpush.msra.mxu0 %v2159
        %v2161 = vand.u32 %v1889, 4294901760
        %2162 = vmatmul.f32.gmra.mxu0 %v2161
        %v2163 = vpop.f32.mrf.mxu0
        %v2164 = vadd.f32 %v2127, %v2163
        %v2165 = vand.u32 %v1892, 4294901760
        %2166 = vmatmul.f32.gmra.mxu0 %v2165
        %v2167 = vpop.f32.mrf.mxu0
        %v2168 = vadd.f32 %v2131, %v2167
        %v2169 = vand.u32 %v1895, 4294901760
        %2170 = vmatmul.f32.gmra.mxu0 %v2169
        %v2171 = vpop.f32.mrf.mxu0
        %v2172 = vadd.f32 %v2135, %v2171
        %v2173 = vand.u32 %v1898, 4294901760
        %2174 = vmatmul.f32.gmra.mxu0 %v2173
        %v2175 = vpop.f32.mrf.mxu0
        %v2176 = vadd.f32 %v2139, %v2175
        %2177 = vdwg.mxu0
        %2178 = vmatpush.msra.mxu0 0.0
        %2179 = vmatpush.msra.mxu0 0.0
        %2180 = vmatpush.msra.mxu0 0.0
        %2181 = vmatpush.msra.mxu0 0.0
        %2182 = vmatpush.msra.mxu0 0.0
        %2183 = vmatpush.msra.mxu0 0.0
        %2184 = vmatpush.msra.mxu0 0.0
        %2185 = vmatpush.msra.mxu0 0.0
        %2186 = vmatpush.msra.mxu0 0.0
        %2187 = vmatpush.msra.mxu0 0.0
        %2188 = vmatpush.msra.mxu0 0.0
        %2189 = vmatpush.msra.mxu0 0.0
        %v2190 = vand.u32 %v1859, 4294901760
        %2191 = vmatpush.msra.mxu0 %v2190
        %v2192 = vand.u32 %v1857, 4294901760
        %2193 = vmatpush.msra.mxu0 %v2192
        %v2194 = vand.u32 %v1855, 4294901760
        %2195 = vmatpush.msra.mxu0 %v2194
        %v2196 = vand.u32 %v1853, 4294901760
        %2197 = vmatpush.msra.mxu0 %v2196
        %v2198 = vand.u32 %v1889, 4294901760
        %v2199 = vsub.f32 %v1889, %v2198
        %v2200 = vand.u32 %v2199, 4294901760
        %v2201 = vsub.f32 %v2199, %v2200
        %v2202 = vand.u32 %v2201, 4294901760
        %2203 = vmatmul.f32.gmra.mxu0 %v2202
        %v2204 = vpop.f32.mrf.mxu0
        %v2205 = vadd.f32 %v1871, %v2204
        %v2206 = vand.u32 %v1892, 4294901760
        %v2207 = vsub.f32 %v1892, %v2206
        %v2208 = vand.u32 %v2207, 4294901760
        %v2209 = vsub.f32 %v2207, %v2208
        %v2210 = vand.u32 %v2209, 4294901760
        %2211 = vmatmul.f32.gmra.mxu0 %v2210
        %v2212 = vpop.f32.mrf.mxu0
        %v2213 = vadd.f32 %v1876, %v2212
        %v2214 = vand.u32 %v1895, 4294901760
        %v2215 = vsub.f32 %v1895, %v2214
        %v2216 = vand.u32 %v2215, 4294901760
        %v2217 = vsub.f32 %v2215, %v2216
        %v2218 = vand.u32 %v2217, 4294901760
        %2219 = vmatmul.f32.gmra.mxu0 %v2218
        %v2220 = vpop.f32.mrf.mxu0
        %v2221 = vadd.f32 %v1881, %v2220
        %v2222 = vand.u32 %v1898, 4294901760
        %v2223 = vsub.f32 %v1898, %v2222
        %v2224 = vand.u32 %v2223, 4294901760
        %v2225 = vsub.f32 %v2223, %v2224
        %v2226 = vand.u32 %v2225, 4294901760
        %2227 = vmatmul.f32.gmra.mxu0 %v2226
        %v2228 = vpop.f32.mrf.mxu0
        %v2229 = vadd.f32 %v1886, %v2228
        %2230 = vdwg.mxu0
        %2231 = vmatpush.msra.mxu0 0.0
        %2232 = vmatpush.msra.mxu0 0.0
        %2233 = vmatpush.msra.mxu0 0.0
        %2234 = vmatpush.msra.mxu0 0.0
        %2235 = vmatpush.msra.mxu0 0.0
        %2236 = vmatpush.msra.mxu0 0.0
        %2237 = vmatpush.msra.mxu0 0.0
        %2238 = vmatpush.msra.mxu0 0.0
        %2239 = vmatpush.msra.mxu0 0.0
        %2240 = vmatpush.msra.mxu0 0.0
        %2241 = vmatpush.msra.mxu0 0.0
        %2242 = vmatpush.msra.mxu0 0.0
        %v2243 = vand.u32 %v1859, 4294901760
        %v2244 = vsub.f32 %v1859, %v2243
        %v2245 = vand.u32 %v2244, 4294901760
        %v2246 = vsub.f32 %v2244, %v2245
        %v2247 = vand.u32 %v2246, 4294901760
        %2248 = vmatpush.msra.mxu0 %v2247
        %v2249 = vand.u32 %v1857, 4294901760
        %v2250 = vsub.f32 %v1857, %v2249
        %v2251 = vand.u32 %v2250, 4294901760
        %v2252 = vsub.f32 %v2250, %v2251
        %v2253 = vand.u32 %v2252, 4294901760
        %2254 = vmatpush.msra.mxu0 %v2253
        %v2255 = vand.u32 %v1855, 4294901760
        %v2256 = vsub.f32 %v1855, %v2255
        %v2257 = vand.u32 %v2256, 4294901760
        %v2258 = vsub.f32 %v2256, %v2257
        %v2259 = vand.u32 %v2258, 4294901760
        %2260 = vmatpush.msra.mxu0 %v2259
        %v2261 = vand.u32 %v1853, 4294901760
        %v2262 = vsub.f32 %v1853, %v2261
        %v2263 = vand.u32 %v2262, 4294901760
        %v2264 = vsub.f32 %v2262, %v2263
        %v2265 = vand.u32 %v2264, 4294901760
        %2266 = vmatpush.msra.mxu0 %v2265
        %v2267 = vand.u32 %v1889, 4294901760
        %2268 = vmatmul.f32.gmra.mxu0 %v2267
        %v2269 = vpop.f32.mrf.mxu0
        %v2270 = vadd.f32 %v2205, %v2269
        %v2271 = vand.u32 %v1892, 4294901760
        %2272 = vmatmul.f32.gmra.mxu0 %v2271
        %v2273 = vpop.f32.mrf.mxu0
        %v2274 = vadd.f32 %v2213, %v2273
        %v2275 = vand.u32 %v1895, 4294901760
        %2276 = vmatmul.f32.gmra.mxu0 %v2275
        %v2277 = vpop.f32.mrf.mxu0
        %v2278 = vadd.f32 %v2221, %v2277
        %v2279 = vand.u32 %v1898, 4294901760
        %2280 = vmatmul.f32.gmra.mxu0 %v2279
        %v2281 = vpop.f32.mrf.mxu0
        %v2282 = vadd.f32 %v2229, %v2281
        %2283 = vdwg.mxu0
        %2284 = vmatpush.msra.mxu0 0.0
        %2285 = vmatpush.msra.mxu0 0.0
        %2286 = vmatpush.msra.mxu0 0.0
        %2287 = vmatpush.msra.mxu0 0.0
        %2288 = vmatpush.msra.mxu0 0.0
        %2289 = vmatpush.msra.mxu0 0.0
        %2290 = vmatpush.msra.mxu0 0.0
        %2291 = vmatpush.msra.mxu0 0.0
        %2292 = vmatpush.msra.mxu0 0.0
        %2293 = vmatpush.msra.mxu0 0.0
        %2294 = vmatpush.msra.mxu0 0.0
        %2295 = vmatpush.msra.mxu0 0.0
        %v2296 = vand.u32 %v1859, 4294901760
        %v2297 = vsub.f32 %v1859, %v2296
        %2298 = vmatpush.msra.mxu0 %v2297
        %v2299 = vand.u32 %v1857, 4294901760
        %v2300 = vsub.f32 %v1857, %v2299
        %2301 = vmatpush.msra.mxu0 %v2300
        %v2302 = vand.u32 %v1855, 4294901760
        %v2303 = vsub.f32 %v1855, %v2302
        %2304 = vmatpush.msra.mxu0 %v2303
        %v2305 = vand.u32 %v1853, 4294901760
        %v2306 = vsub.f32 %v1853, %v2305
        %2307 = vmatpush.msra.mxu0 %v2306
        %v2308 = vand.u32 %v1889, 4294901760
        %v2309 = vsub.f32 %v1889, %v2308
        %2310 = vmatmul.f32.gmra.mxu0 %v2309
        %v2311 = vpop.f32.mrf.mxu0
        %v2312 = vadd.f32 %v2270, %v2311
        %v2313 = vand.u32 %v1892, 4294901760
        %v2314 = vsub.f32 %v1892, %v2313
        %2315 = vmatmul.f32.gmra.mxu0 %v2314
        %v2316 = vpop.f32.mrf.mxu0
        %v2317 = vadd.f32 %v2274, %v2316
        %v2318 = vand.u32 %v1895, 4294901760
        %v2319 = vsub.f32 %v1895, %v2318
        %2320 = vmatmul.f32.gmra.mxu0 %v2319
        %v2321 = vpop.f32.mrf.mxu0
        %v2322 = vadd.f32 %v2278, %v2321
        %v2323 = vand.u32 %v1898, 4294901760
        %v2324 = vsub.f32 %v1898, %v2323
        %2325 = vmatmul.f32.gmra.mxu0 %v2324
        %v2326 = vpop.f32.mrf.mxu0
        %v2327 = vadd.f32 %v2282, %v2326
        %2328 = vdwg.mxu0
        %2329 = vmatpush.msra.mxu0 0.0
        %2330 = vmatpush.msra.mxu0 0.0
        %2331 = vmatpush.msra.mxu0 0.0
        %2332 = vmatpush.msra.mxu0 0.0
        %2333 = vmatpush.msra.mxu0 0.0
        %2334 = vmatpush.msra.mxu0 0.0
        %2335 = vmatpush.msra.mxu0 0.0
        %2336 = vmatpush.msra.mxu0 0.0
        %2337 = vmatpush.msra.mxu0 0.0
        %2338 = vmatpush.msra.mxu0 0.0
        %2339 = vmatpush.msra.mxu0 0.0
        %2340 = vmatpush.msra.mxu0 0.0
        %v2341 = vand.u32 %v1859, 4294901760
        %2342 = vmatpush.msra.mxu0 %v2341
        %v2343 = vand.u32 %v1857, 4294901760
        %2344 = vmatpush.msra.mxu0 %v2343
        %v2345 = vand.u32 %v1855, 4294901760
        %2346 = vmatpush.msra.mxu0 %v2345
        %v2347 = vand.u32 %v1853, 4294901760
        %2348 = vmatpush.msra.mxu0 %v2347
        %v2349 = vand.u32 %v1889, 4294901760
        %v2350 = vsub.f32 %v1889, %v2349
        %v2351 = vand.u32 %v2350, 4294901760
        %2352 = vmatmul.f32.gmra.mxu0 %v2351
        %v2353 = vpop.f32.mrf.mxu0
        %v2354 = vadd.f32 %v2312, %v2353
        %v2355 = vand.u32 %v1892, 4294901760
        %v2356 = vsub.f32 %v1892, %v2355
        %v2357 = vand.u32 %v2356, 4294901760
        %2358 = vmatmul.f32.gmra.mxu0 %v2357
        %v2359 = vpop.f32.mrf.mxu0
        %v2360 = vadd.f32 %v2317, %v2359
        %v2361 = vand.u32 %v1895, 4294901760
        %v2362 = vsub.f32 %v1895, %v2361
        %v2363 = vand.u32 %v2362, 4294901760
        %2364 = vmatmul.f32.gmra.mxu0 %v2363
        %v2365 = vpop.f32.mrf.mxu0
        %v2366 = vadd.f32 %v2322, %v2365
        %v2367 = vand.u32 %v1898, 4294901760
        %v2368 = vsub.f32 %v1898, %v2367
        %v2369 = vand.u32 %v2368, 4294901760
        %2370 = vmatmul.f32.gmra.mxu0 %v2369
        %v2371 = vpop.f32.mrf.mxu0
        %v2372 = vadd.f32 %v2327, %v2371
        %2373 = vdwg.mxu0
        %2374 = vmatpush.msra.mxu0 0.0
        %2375 = vmatpush.msra.mxu0 0.0
        %2376 = vmatpush.msra.mxu0 0.0
        %2377 = vmatpush.msra.mxu0 0.0
        %2378 = vmatpush.msra.mxu0 0.0
        %2379 = vmatpush.msra.mxu0 0.0
        %2380 = vmatpush.msra.mxu0 0.0
        %2381 = vmatpush.msra.mxu0 0.0
        %2382 = vmatpush.msra.mxu0 0.0
        %2383 = vmatpush.msra.mxu0 0.0
        %2384 = vmatpush.msra.mxu0 0.0
        %2385 = vmatpush.msra.mxu0 0.0
        %v2386 = vand.u32 %v1859, 4294901760
        %v2387 = vsub.f32 %v1859, %v2386
        %v2388 = vand.u32 %v2387, 4294901760
        %2389 = vmatpush.msra.mxu0 %v2388
        %v2390 = vand.u32 %v1857, 4294901760
        %v2391 = vsub.f32 %v1857, %v2390
        %v2392 = vand.u32 %v2391, 4294901760
        %2393 = vmatpush.msra.mxu0 %v2392
        %v2394 = vand.u32 %v1855, 4294901760
        %v2395 = vsub.f32 %v1855, %v2394
        %v2396 = vand.u32 %v2395, 4294901760
        %2397 = vmatpush.msra.mxu0 %v2396
        %v2398 = vand.u32 %v1853, 4294901760
        %v2399 = vsub.f32 %v1853, %v2398
        %v2400 = vand.u32 %v2399, 4294901760
        %2401 = vmatpush.msra.mxu0 %v2400
        %v2402 = vand.u32 %v1889, 4294901760
        %2403 = vmatmul.f32.gmra.mxu0 %v2402
        %v2404 = vpop.f32.mrf.mxu0
        %v2405 = vadd.f32 %v2354, %v2404
        %v2406 = vand.u32 %v1892, 4294901760
        %2407 = vmatmul.f32.gmra.mxu0 %v2406
        %v2408 = vpop.f32.mrf.mxu0
        %v2409 = vadd.f32 %v2360, %v2408
        %v2410 = vand.u32 %v1895, 4294901760
        %2411 = vmatmul.f32.gmra.mxu0 %v2410
        %v2412 = vpop.f32.mrf.mxu0
        %v2413 = vadd.f32 %v2366, %v2412
        %v2414 = vand.u32 %v1898, 4294901760
        %2415 = vmatmul.f32.gmra.mxu0 %v2414
        %v2416 = vpop.f32.mrf.mxu0
        %v2417 = vadd.f32 %v2372, %v2416
        %2418 = vdwg.mxu0
        %2419 = vmatpush.msra.mxu0 0.0
        %2420 = vmatpush.msra.mxu0 0.0
        %2421 = vmatpush.msra.mxu0 0.0
        %2422 = vmatpush.msra.mxu0 0.0
        %2423 = vmatpush.msra.mxu0 0.0
        %2424 = vmatpush.msra.mxu0 0.0
        %2425 = vmatpush.msra.mxu0 0.0
        %2426 = vmatpush.msra.mxu0 0.0
        %2427 = vmatpush.msra.mxu0 0.0
        %2428 = vmatpush.msra.mxu0 0.0
        %2429 = vmatpush.msra.mxu0 0.0
        %2430 = vmatpush.msra.mxu0 0.0
        %v2431 = vand.u32 %v1859, 4294901760
        %2432 = vmatpush.msra.mxu0 %v2431
        %v2433 = vand.u32 %v1857, 4294901760
        %2434 = vmatpush.msra.mxu0 %v2433
        %v2435 = vand.u32 %v1855, 4294901760
        %2436 = vmatpush.msra.mxu0 %v2435
        %v2437 = vand.u32 %v1853, 4294901760
        %2438 = vmatpush.msra.mxu0 %v2437
        %v2439 = vand.u32 %v1889, 4294901760
        %2440 = vmatmul.f32.gmra.mxu0 %v2439
        %v2441 = vpop.f32.mrf.mxu0
        %v2442 = vadd.f32 %v2405, %v2441
        %v2443 = vand.u32 %v1892, 4294901760
        %2444 = vmatmul.f32.gmra.mxu0 %v2443
        %v2445 = vpop.f32.mrf.mxu0
        %v2446 = vadd.f32 %v2409, %v2445
        %v2447 = vand.u32 %v1895, 4294901760
        %2448 = vmatmul.f32.gmra.mxu0 %v2447
        %v2449 = vpop.f32.mrf.mxu0
        %v2450 = vadd.f32 %v2413, %v2449
        %v2451 = vand.u32 %v1898, 4294901760
        %2452 = vmatmul.f32.gmra.mxu0 %v2451
        %v2453 = vpop.f32.mrf.mxu0
        %v2454 = vadd.f32 %v2417, %v2453
        %2455 = vdwg.mxu0
        %v2456 = vmul.f32 %v2164, 0.31830987
        %v2457 = vmul.f32 %v2442, 0.31830987
        %v2458 = vmul.f32 %v2168, 0.31830987
        %v2459 = vmul.f32 %v2446, 0.31830987
        %v2460 = vmul.f32 %v2172, 0.31830987
        %v2461 = vmul.f32 %v2450, 0.31830987
        %v2462 = vmul.f32 %v2176, 0.31830987
        %v2463 = vmul.f32 %v2454, 0.31830987
        %v2464 = vround.ne.pseudo %v2456
        %v2465 = vround.ne.pseudo %v2457
        %v2466 = vround.ne.pseudo %v2458
        %v2467 = vround.ne.pseudo %v2459
        %v2468 = vround.ne.pseudo %v2460
        %v2469 = vround.ne.pseudo %v2461
        %v2470 = vround.ne.pseudo %v2462
        %v2471 = vround.ne.pseudo %v2463
        %v2472 = vmul.f32 %v2464, 3.140625
        %v2473 = vmul.f32 %v2465, 3.140625
        %v2474 = vmul.f32 %v2466, 3.140625
        %v2475 = vmul.f32 %v2467, 3.140625
        %v2476 = vmul.f32 %v2468, 3.140625
        %v2477 = vmul.f32 %v2469, 3.140625
        %v2478 = vmul.f32 %v2470, 3.140625
        %v2479 = vmul.f32 %v2471, 3.140625
        %v2480 = vsub.f32 %v2164, %v2472
        %v2481 = vsub.f32 %v2442, %v2473
        %v2482 = vsub.f32 %v2168, %v2474
        %v2483 = vsub.f32 %v2446, %v2475
        %v2484 = vsub.f32 %v2172, %v2476
        %v2485 = vsub.f32 %v2450, %v2477
        %v2486 = vsub.f32 %v2176, %v2478
        %v2487 = vsub.f32 %v2454, %v2479
        %v2488 = vmul.f32 %v2464, 0.0009676536
        %v2489 = vmul.f32 %v2465, 0.0009676536
        %v2490 = vmul.f32 %v2466, 0.0009676536
        %v2491 = vmul.f32 %v2467, 0.0009676536
        %v2492 = vmul.f32 %v2468, 0.0009676536
        %v2493 = vmul.f32 %v2469, 0.0009676536
        %v2494 = vmul.f32 %v2470, 0.0009676536
        %v2495 = vmul.f32 %v2471, 0.0009676536
        %v2496 = vsub.f32 %v2480, %v2488
        %v2497 = vsub.f32 %v2481, %v2489
        %v2498 = vsub.f32 %v2482, %v2490
        %v2499 = vsub.f32 %v2483, %v2491
        %v2500 = vsub.f32 %v2484, %v2492
        %v2501 = vsub.f32 %v2485, %v2493
        %v2502 = vsub.f32 %v2486, %v2494
        %v2503 = vsub.f32 %v2487, %v2495
        %v2504 = vmul.f32 %v2464, 0.5
        %v2505 = vmul.f32 %v2465, 0.5
        %v2506 = vmul.f32 %v2466, 0.5
        %v2507 = vmul.f32 %v2467, 0.5
        %v2508 = vmul.f32 %v2468, 0.5
        %v2509 = vmul.f32 %v2469, 0.5
        %v2510 = vmul.f32 %v2470, 0.5
        %v2511 = vmul.f32 %v2471, 0.5
        %v2512 = vfloor.f32 %v2504
        %v2513 = vfloor.f32 %v2505
        %v2514 = vfloor.f32 %v2506
        %v2515 = vfloor.f32 %v2507
        %v2516 = vfloor.f32 %v2508
        %v2517 = vfloor.f32 %v2509
        %v2518 = vfloor.f32 %v2510
        %v2519 = vfloor.f32 %v2511
        %v2520 = vmul.f32 %v2512, 2.0
        %v2521 = vmul.f32 %v2513, 2.0
        %v2522 = vmul.f32 %v2514, 2.0
        %v2523 = vmul.f32 %v2515, 2.0
        %v2524 = vmul.f32 %v2516, 2.0
        %v2525 = vmul.f32 %v2517, 2.0
        %v2526 = vmul.f32 %v2518, 2.0
        %v2527 = vmul.f32 %v2519, 2.0
        %v2528 = vsub.f32 %v2464, %v2520
        %v2529 = vsub.f32 %v2465, %v2521
        %v2530 = vsub.f32 %v2466, %v2522
        %v2531 = vsub.f32 %v2467, %v2523
        %v2532 = vsub.f32 %v2468, %v2524
        %v2533 = vsub.f32 %v2469, %v2525
        %v2534 = vsub.f32 %v2470, %v2526
        %v2535 = vsub.f32 %v2471, %v2527
        %v2536 = vmul.f32 %v2528, 2.0
        %v2537 = vmul.f32 %v2529, 2.0
        %v2538 = vmul.f32 %v2530, 2.0
        %v2539 = vmul.f32 %v2531, 2.0
        %v2540 = vmul.f32 %v2532, 2.0
        %v2541 = vmul.f32 %v2533, 2.0
        %v2542 = vmul.f32 %v2534, 2.0
        %v2543 = vmul.f32 %v2535, 2.0
        %v2544 = vsub.f32 1.0, %v2536
        %v2545 = vsub.f32 1.0, %v2537
        %v2546 = vsub.f32 1.0, %v2538
        %v2547 = vsub.f32 1.0, %v2539
        %v2548 = vsub.f32 1.0, %v2540
        %v2549 = vsub.f32 1.0, %v2541
        %v2550 = vsub.f32 1.0, %v2542
        %v2551 = vsub.f32 1.0, %v2543
        %v2552 = vmul.f32 %v2496, %v2496
        %v2553 = vmul.f32 %v2497, %v2497
        %v2554 = vmul.f32 %v2498, %v2498
        %v2555 = vmul.f32 %v2499, %v2499
        %v2556 = vmul.f32 %v2500, %v2500
        %v2557 = vmul.f32 %v2501, %v2501
        %v2558 = vmul.f32 %v2502, %v2502
        %v2559 = vmul.f32 %v2503, %v2503
        %v2560 = vmul.f32 %v2552, -2.5052108e-08
        %v2561 = vmul.f32 %v2553, -2.5052108e-08
        %v2562 = vmul.f32 %v2554, -2.5052108e-08
        %v2563 = vmul.f32 %v2555, -2.5052108e-08
        %v2564 = vmul.f32 %v2556, -2.5052108e-08
        %v2565 = vmul.f32 %v2557, -2.5052108e-08
        %v2566 = vmul.f32 %v2558, -2.5052108e-08
        %v2567 = vmul.f32 %v2559, -2.5052108e-08
        %v2568 = vadd.f32 %v2560, 2.7557319e-06
        %v2569 = vadd.f32 %v2561, 2.7557319e-06
        %v2570 = vadd.f32 %v2562, 2.7557319e-06
        %v2571 = vadd.f32 %v2563, 2.7557319e-06
        %v2572 = vadd.f32 %v2564, 2.7557319e-06
        %v2573 = vadd.f32 %v2565, 2.7557319e-06
        %v2574 = vadd.f32 %v2566, 2.7557319e-06
        %v2575 = vadd.f32 %v2567, 2.7557319e-06
        %v2576 = vmul.f32 %v2568, %v2552
        %v2577 = vmul.f32 %v2569, %v2553
        %v2578 = vmul.f32 %v2570, %v2554
        %v2579 = vmul.f32 %v2571, %v2555
        %v2580 = vmul.f32 %v2572, %v2556
        %v2581 = vmul.f32 %v2573, %v2557
        %v2582 = vmul.f32 %v2574, %v2558
        %v2583 = vmul.f32 %v2575, %v2559
        %v2584 = vsub.f32 %v2576, 0.0001984127
        %v2585 = vsub.f32 %v2577, 0.0001984127
        %v2586 = vsub.f32 %v2578, 0.0001984127
        %v2587 = vsub.f32 %v2579, 0.0001984127
        %v2588 = vsub.f32 %v2580, 0.0001984127
        %v2589 = vsub.f32 %v2581, 0.0001984127
        %v2590 = vsub.f32 %v2582, 0.0001984127
        %v2591 = vsub.f32 %v2583, 0.0001984127
        %v2592 = vmul.f32 %v2584, %v2552
        %v2593 = vmul.f32 %v2585, %v2553
        %v2594 = vmul.f32 %v2586, %v2554
        %v2595 = vmul.f32 %v2587, %v2555
        %v2596 = vmul.f32 %v2588, %v2556
        %v2597 = vmul.f32 %v2589, %v2557
        %v2598 = vmul.f32 %v2590, %v2558
        %v2599 = vmul.f32 %v2591, %v2559
        %v2600 = vadd.f32 %v2592, 0.008333334
        %v2601 = vadd.f32 %v2593, 0.008333334
        %v2602 = vadd.f32 %v2594, 0.008333334
        %v2603 = vadd.f32 %v2595, 0.008333334
        %v2604 = vadd.f32 %v2596, 0.008333334
        %v2605 = vadd.f32 %v2597, 0.008333334
        %v2606 = vadd.f32 %v2598, 0.008333334
        %v2607 = vadd.f32 %v2599, 0.008333334
        %v2608 = vmul.f32 %v2600, %v2552
        %v2609 = vmul.f32 %v2601, %v2553
        %v2610 = vmul.f32 %v2602, %v2554
        %v2611 = vmul.f32 %v2603, %v2555
        %v2612 = vmul.f32 %v2604, %v2556
        %v2613 = vmul.f32 %v2605, %v2557
        %v2614 = vmul.f32 %v2606, %v2558
        %v2615 = vmul.f32 %v2607, %v2559
        %v2616 = vsub.f32 %v2608, 0.16666667
        %v2617 = vsub.f32 %v2609, 0.16666667
        %v2618 = vsub.f32 %v2610, 0.16666667
        %v2619 = vsub.f32 %v2611, 0.16666667
        %v2620 = vsub.f32 %v2612, 0.16666667
        %v2621 = vsub.f32 %v2613, 0.16666667
        %v2622 = vsub.f32 %v2614, 0.16666667
        %v2623 = vsub.f32 %v2615, 0.16666667
        %v2624 = vmul.f32 %v2616, %v2552
        %v2625 = vmul.f32 %v2617, %v2553
        %v2626 = vmul.f32 %v2618, %v2554
        %v2627 = vmul.f32 %v2619, %v2555
        %v2628 = vmul.f32 %v2620, %v2556
        %v2629 = vmul.f32 %v2621, %v2557
        %v2630 = vmul.f32 %v2622, %v2558
        %v2631 = vmul.f32 %v2623, %v2559
        %v2632 = vadd.f32 %v2624, 1.0
        %v2633 = vadd.f32 %v2625, 1.0
        %v2634 = vadd.f32 %v2626, 1.0
        %v2635 = vadd.f32 %v2627, 1.0
        %v2636 = vadd.f32 %v2628, 1.0
        %v2637 = vadd.f32 %v2629, 1.0
        %v2638 = vadd.f32 %v2630, 1.0
        %v2639 = vadd.f32 %v2631, 1.0
        %v2640 = vmul.f32 %v2496, %v2632
        %v2641 = vmul.f32 %v2497, %v2633
        %v2642 = vmul.f32 %v2498, %v2634
        %v2643 = vmul.f32 %v2499, %v2635
        %v2644 = vmul.f32 %v2500, %v2636
        %v2645 = vmul.f32 %v2501, %v2637
        %v2646 = vmul.f32 %v2502, %v2638
        %v2647 = vmul.f32 %v2503, %v2639
        %v2648 = vmul.f32 %v2544, %v2640
        %v2649 = vmul.f32 %v2545, %v2641
        %v2650 = vmul.f32 %v2546, %v2642
        %v2651 = vmul.f32 %v2547, %v2643
        %v2652 = vmul.f32 %v2548, %v2644
        %v2653 = vmul.f32 %v2549, %v2645
        %v2654 = vmul.f32 %v2550, %v2646
        %v2655 = vmul.f32 %v2551, %v2647
        %v2656 = vld [vmem:[%s7] sm:$0x7]
        %v2657 = vld [vmem:[%s8] sm:$0x7]
        %2659 = vset.pattern.permute.xlu0 0
        %2660 = vperm.xlu0 %2659, %v2657
        %v2661 = vpop.permute.xlu0 %2660
        %v2664 = vsel %vm1091, %v2656, 0
        %2666 = vmatpush.msra.mxu0 0.0
        %2667 = vmatpush.msra.mxu0 0.0
        %2668 = vmatpush.msra.mxu0 0.0
        %2669 = vmatpush.msra.mxu0 0.0
        %2670 = vmatpush.msra.mxu0 0.0
        %2671 = vmatpush.msra.mxu0 0.0
        %2672 = vmatpush.msra.mxu0 0.0
        %2673 = vmatpush.msra.mxu0 0.0
        %2674 = vmatpush.msra.mxu0 0.0
        %2675 = vmatpush.msra.mxu0 0.0
        %2676 = vmatpush.msra.mxu0 0.0
        %2677 = vmatpush.msra.mxu0 0.0
        %v2678 = vand.u32 %v2654, 4294901760
        %2679 = vmatpush.msra.mxu0 %v2678
        %v2680 = vand.u32 %v2652, 4294901760
        %2681 = vmatpush.msra.mxu0 %v2680
        %v2682 = vand.u32 %v2650, 4294901760
        %2683 = vmatpush.msra.mxu0 %v2682
        %v2684 = vand.u32 %v2648, 4294901760
        %2685 = vmatpush.msra.mxu0 %v2684
        %v2686 = vand.u32 %v2664, 4294901760
        %v2687 = vsub.f32 %v2664, %v2686
        %v2688 = vand.u32 %v2687, 4294901760
        %v2689 = vsub.f32 %v2687, %v2688
        %v2690 = vand.u32 %v2689, 4294901760
        %2691 = vmatmul.f32.gmra.mxu0 %v2690
        %v2692 = vpop.f32.mrf.mxu0
        %v2693 = vadd.f32 %v2661, %v2692
        %2694 = vdwg.mxu0
        %2695 = vmatpush.msra.mxu0 0.0
        %2696 = vmatpush.msra.mxu0 0.0
        %2697 = vmatpush.msra.mxu0 0.0
        %2698 = vmatpush.msra.mxu0 0.0
        %2699 = vmatpush.msra.mxu0 0.0
        %2700 = vmatpush.msra.mxu0 0.0
        %2701 = vmatpush.msra.mxu0 0.0
        %2702 = vmatpush.msra.mxu0 0.0
        %2703 = vmatpush.msra.mxu0 0.0
        %2704 = vmatpush.msra.mxu0 0.0
        %2705 = vmatpush.msra.mxu0 0.0
        %2706 = vmatpush.msra.mxu0 0.0
        %v2707 = vand.u32 %v2654, 4294901760
        %v2708 = vsub.f32 %v2654, %v2707
        %v2709 = vand.u32 %v2708, 4294901760
        %v2710 = vsub.f32 %v2708, %v2709
        %v2711 = vand.u32 %v2710, 4294901760
        %2712 = vmatpush.msra.mxu0 %v2711
        %v2713 = vand.u32 %v2652, 4294901760
        %v2714 = vsub.f32 %v2652, %v2713
        %v2715 = vand.u32 %v2714, 4294901760
        %v2716 = vsub.f32 %v2714, %v2715
        %v2717 = vand.u32 %v2716, 4294901760
        %2718 = vmatpush.msra.mxu0 %v2717
        %v2719 = vand.u32 %v2650, 4294901760
        %v2720 = vsub.f32 %v2650, %v2719
        %v2721 = vand.u32 %v2720, 4294901760
        %v2722 = vsub.f32 %v2720, %v2721
        %v2723 = vand.u32 %v2722, 4294901760
        %2724 = vmatpush.msra.mxu0 %v2723
        %v2725 = vand.u32 %v2648, 4294901760
        %v2726 = vsub.f32 %v2648, %v2725
        %v2727 = vand.u32 %v2726, 4294901760
        %v2728 = vsub.f32 %v2726, %v2727
        %v2729 = vand.u32 %v2728, 4294901760
        %2730 = vmatpush.msra.mxu0 %v2729
        %v2731 = vand.u32 %v2664, 4294901760
        %2732 = vmatmul.f32.gmra.mxu0 %v2731
        %v2733 = vpop.f32.mrf.mxu0
        %v2734 = vadd.f32 %v2693, %v2733
        %2735 = vdwg.mxu0
        %2736 = vmatpush.msra.mxu0 0.0
        %2737 = vmatpush.msra.mxu0 0.0
        %2738 = vmatpush.msra.mxu0 0.0
        %2739 = vmatpush.msra.mxu0 0.0
        %2740 = vmatpush.msra.mxu0 0.0
        %2741 = vmatpush.msra.mxu0 0.0
        %2742 = vmatpush.msra.mxu0 0.0
        %2743 = vmatpush.msra.mxu0 0.0
        %2744 = vmatpush.msra.mxu0 0.0
        %2745 = vmatpush.msra.mxu0 0.0
        %2746 = vmatpush.msra.mxu0 0.0
        %2747 = vmatpush.msra.mxu0 0.0
        %v2748 = vand.u32 %v2654, 4294901760
        %v2749 = vsub.f32 %v2654, %v2748
        %2750 = vmatpush.msra.mxu0 %v2749
        %v2751 = vand.u32 %v2652, 4294901760
        %v2752 = vsub.f32 %v2652, %v2751
        %2753 = vmatpush.msra.mxu0 %v2752
        %v2754 = vand.u32 %v2650, 4294901760
        %v2755 = vsub.f32 %v2650, %v2754
        %2756 = vmatpush.msra.mxu0 %v2755
        %v2757 = vand.u32 %v2648, 4294901760
        %v2758 = vsub.f32 %v2648, %v2757
        %2759 = vmatpush.msra.mxu0 %v2758
        %v2760 = vand.u32 %v2664, 4294901760
        %v2761 = vsub.f32 %v2664, %v2760
        %2762 = vmatmul.f32.gmra.mxu0 %v2761
        %v2763 = vpop.f32.mrf.mxu0
        %v2764 = vadd.f32 %v2734, %v2763
        %2765 = vdwg.mxu0
        %2766 = vmatpush.msra.mxu0 0.0
        %2767 = vmatpush.msra.mxu0 0.0
        %2768 = vmatpush.msra.mxu0 0.0
        %2769 = vmatpush.msra.mxu0 0.0
        %2770 = vmatpush.msra.mxu0 0.0
        %2771 = vmatpush.msra.mxu0 0.0
        %2772 = vmatpush.msra.mxu0 0.0
        %2773 = vmatpush.msra.mxu0 0.0
        %2774 = vmatpush.msra.mxu0 0.0
        %2775 = vmatpush.msra.mxu0 0.0
        %2776 = vmatpush.msra.mxu0 0.0
        %2777 = vmatpush.msra.mxu0 0.0
        %v2778 = vand.u32 %v2654, 4294901760
        %2779 = vmatpush.msra.mxu0 %v2778
        %v2780 = vand.u32 %v2652, 4294901760
        %2781 = vmatpush.msra.mxu0 %v2780
        %v2782 = vand.u32 %v2650, 4294901760
        %2783 = vmatpush.msra.mxu0 %v2782
        %v2784 = vand.u32 %v2648, 4294901760
        %2785 = vmatpush.msra.mxu0 %v2784
        %v2786 = vand.u32 %v2664, 4294901760
        %v2787 = vsub.f32 %v2664, %v2786
        %v2788 = vand.u32 %v2787, 4294901760
        %2789 = vmatmul.f32.gmra.mxu0 %v2788
        %v2790 = vpop.f32.mrf.mxu0
        %v2791 = vadd.f32 %v2764, %v2790
        %2792 = vdwg.mxu0
        %2793 = vmatpush.msra.mxu0 0.0
        %2794 = vmatpush.msra.mxu0 0.0
        %2795 = vmatpush.msra.mxu0 0.0
        %2796 = vmatpush.msra.mxu0 0.0
        %2797 = vmatpush.msra.mxu0 0.0
        %2798 = vmatpush.msra.mxu0 0.0
        %2799 = vmatpush.msra.mxu0 0.0
        %2800 = vmatpush.msra.mxu0 0.0
        %2801 = vmatpush.msra.mxu0 0.0
        %2802 = vmatpush.msra.mxu0 0.0
        %2803 = vmatpush.msra.mxu0 0.0
        %2804 = vmatpush.msra.mxu0 0.0
        %v2805 = vand.u32 %v2654, 4294901760
        %v2806 = vsub.f32 %v2654, %v2805
        %v2807 = vand.u32 %v2806, 4294901760
        %2808 = vmatpush.msra.mxu0 %v2807
        %v2809 = vand.u32 %v2652, 4294901760
        %v2810 = vsub.f32 %v2652, %v2809
        %v2811 = vand.u32 %v2810, 4294901760
        %2812 = vmatpush.msra.mxu0 %v2811
        %v2813 = vand.u32 %v2650, 4294901760
        %v2814 = vsub.f32 %v2650, %v2813
        %v2815 = vand.u32 %v2814, 4294901760
        %2816 = vmatpush.msra.mxu0 %v2815
        %v2817 = vand.u32 %v2648, 4294901760
        %v2818 = vsub.f32 %v2648, %v2817
        %v2819 = vand.u32 %v2818, 4294901760
        %2820 = vmatpush.msra.mxu0 %v2819
        %v2821 = vand.u32 %v2664, 4294901760
        %2822 = vmatmul.f32.gmra.mxu0 %v2821
        %v2823 = vpop.f32.mrf.mxu0
        %v2824 = vadd.f32 %v2791, %v2823
        %2825 = vdwg.mxu0
        %2826 = vmatpush.msra.mxu0 0.0
        %2827 = vmatpush.msra.mxu0 0.0
        %2828 = vmatpush.msra.mxu0 0.0
        %2829 = vmatpush.msra.mxu0 0.0
        %2830 = vmatpush.msra.mxu0 0.0
        %2831 = vmatpush.msra.mxu0 0.0
        %2832 = vmatpush.msra.mxu0 0.0
        %2833 = vmatpush.msra.mxu0 0.0
        %2834 = vmatpush.msra.mxu0 0.0
        %2835 = vmatpush.msra.mxu0 0.0
        %2836 = vmatpush.msra.mxu0 0.0
        %2837 = vmatpush.msra.mxu0 0.0
        %v2838 = vand.u32 %v2654, 4294901760
        %2839 = vmatpush.msra.mxu0 %v2838
        %v2840 = vand.u32 %v2652, 4294901760
        %2841 = vmatpush.msra.mxu0 %v2840
        %v2842 = vand.u32 %v2650, 4294901760
        %2843 = vmatpush.msra.mxu0 %v2842
        %v2844 = vand.u32 %v2648, 4294901760
        %2845 = vmatpush.msra.mxu0 %v2844
        %v2846 = vand.u32 %v2664, 4294901760
        %2847 = vmatmul.f32.gmra.mxu0 %v2846
        %v2848 = vpop.f32.mrf.mxu0
        %v2849 = vadd.f32 %v2824, %v2848
        %2850 = vdwg.mxu0
        %2851 = vmatpush.msra.mxu0 0.0
        %2852 = vmatpush.msra.mxu0 0.0
        %2853 = vmatpush.msra.mxu0 0.0
        %2854 = vmatpush.msra.mxu0 0.0
        %2855 = vmatpush.msra.mxu0 0.0
        %2856 = vmatpush.msra.mxu0 0.0
        %2857 = vmatpush.msra.mxu0 0.0
        %2858 = vmatpush.msra.mxu0 0.0
        %2859 = vmatpush.msra.mxu0 0.0
        %2860 = vmatpush.msra.mxu0 0.0
        %2861 = vmatpush.msra.mxu0 0.0
        %2862 = vmatpush.msra.mxu0 0.0
        %v2863 = vand.u32 %v2655, 4294901760
        %2864 = vmatpush.msra.mxu0 %v2863
        %v2865 = vand.u32 %v2653, 4294901760
        %2866 = vmatpush.msra.mxu0 %v2865
        %v2867 = vand.u32 %v2651, 4294901760
        %2868 = vmatpush.msra.mxu0 %v2867
        %v2869 = vand.u32 %v2649, 4294901760
        %2870 = vmatpush.msra.mxu0 %v2869
        %v2871 = vand.u32 %v2664, 4294901760
        %v2872 = vsub.f32 %v2664, %v2871
        %v2873 = vand.u32 %v2872, 4294901760
        %v2874 = vsub.f32 %v2872, %v2873
        %v2875 = vand.u32 %v2874, 4294901760
        %2876 = vmatmul.f32.gmra.mxu0 %v2875
        %v2877 = vpop.f32.mrf.mxu0
        %v2878 = vadd.f32 %v2661, %v2877
        %2879 = vdwg.mxu0
        %2880 = vmatpush.msra.mxu0 0.0
        %2881 = vmatpush.msra.mxu0 0.0
        %2882 = vmatpush.msra.mxu0 0.0
        %2883 = vmatpush.msra.mxu0 0.0
        %2884 = vmatpush.msra.mxu0 0.0
        %2885 = vmatpush.msra.mxu0 0.0
        %2886 = vmatpush.msra.mxu0 0.0
        %2887 = vmatpush.msra.mxu0 0.0
        %2888 = vmatpush.msra.mxu0 0.0
        %2889 = vmatpush.msra.mxu0 0.0
        %2890 = vmatpush.msra.mxu0 0.0
        %2891 = vmatpush.msra.mxu0 0.0
        %v2892 = vand.u32 %v2655, 4294901760
        %v2893 = vsub.f32 %v2655, %v2892
        %v2894 = vand.u32 %v2893, 4294901760
        %v2895 = vsub.f32 %v2893, %v2894
        %v2896 = vand.u32 %v2895, 4294901760
        %2897 = vmatpush.msra.mxu0 %v2896
        %v2898 = vand.u32 %v2653, 4294901760
        %v2899 = vsub.f32 %v2653, %v2898
        %v2900 = vand.u32 %v2899, 4294901760
        %v2901 = vsub.f32 %v2899, %v2900
        %v2902 = vand.u32 %v2901, 4294901760
        %2903 = vmatpush.msra.mxu0 %v2902
        %v2904 = vand.u32 %v2651, 4294901760
        %v2905 = vsub.f32 %v2651, %v2904
        %v2906 = vand.u32 %v2905, 4294901760
        %v2907 = vsub.f32 %v2905, %v2906
        %v2908 = vand.u32 %v2907, 4294901760
        %2909 = vmatpush.msra.mxu0 %v2908
        %v2910 = vand.u32 %v2649, 4294901760
        %v2911 = vsub.f32 %v2649, %v2910
        %v2912 = vand.u32 %v2911, 4294901760
        %v2913 = vsub.f32 %v2911, %v2912
        %v2914 = vand.u32 %v2913, 4294901760
        %2915 = vmatpush.msra.mxu0 %v2914
        %v2916 = vand.u32 %v2664, 4294901760
        %2917 = vmatmul.f32.gmra.mxu0 %v2916
        %v2918 = vpop.f32.mrf.mxu0
        %v2919 = vadd.f32 %v2878, %v2918
        %2920 = vdwg.mxu0
        %2921 = vmatpush.msra.mxu0 0.0
        %2922 = vmatpush.msra.mxu0 0.0
        %2923 = vmatpush.msra.mxu0 0.0
        %2924 = vmatpush.msra.mxu0 0.0
        %2925 = vmatpush.msra.mxu0 0.0
        %2926 = vmatpush.msra.mxu0 0.0
        %2927 = vmatpush.msra.mxu0 0.0
        %2928 = vmatpush.msra.mxu0 0.0
        %2929 = vmatpush.msra.mxu0 0.0
        %2930 = vmatpush.msra.mxu0 0.0
        %2931 = vmatpush.msra.mxu0 0.0
        %2932 = vmatpush.msra.mxu0 0.0
        %v2933 = vand.u32 %v2655, 4294901760
        %v2934 = vsub.f32 %v2655, %v2933
        %2935 = vmatpush.msra.mxu0 %v2934
        %v2936 = vand.u32 %v2653, 4294901760
        %v2937 = vsub.f32 %v2653, %v2936
        %2938 = vmatpush.msra.mxu0 %v2937
        %v2939 = vand.u32 %v2651, 4294901760
        %v2940 = vsub.f32 %v2651, %v2939
        %2941 = vmatpush.msra.mxu0 %v2940
        %v2942 = vand.u32 %v2649, 4294901760
        %v2943 = vsub.f32 %v2649, %v2942
        %2944 = vmatpush.msra.mxu0 %v2943
        %v2945 = vand.u32 %v2664, 4294901760
        %v2946 = vsub.f32 %v2664, %v2945
        %2947 = vmatmul.f32.gmra.mxu0 %v2946
        %v2948 = vpop.f32.mrf.mxu0
        %v2949 = vadd.f32 %v2919, %v2948
        %2950 = vdwg.mxu0
        %2951 = vmatpush.msra.mxu0 0.0
        %2952 = vmatpush.msra.mxu0 0.0
        %2953 = vmatpush.msra.mxu0 0.0
        %2954 = vmatpush.msra.mxu0 0.0
        %2955 = vmatpush.msra.mxu0 0.0
        %2956 = vmatpush.msra.mxu0 0.0
        %2957 = vmatpush.msra.mxu0 0.0
        %2958 = vmatpush.msra.mxu0 0.0
        %2959 = vmatpush.msra.mxu0 0.0
        %2960 = vmatpush.msra.mxu0 0.0
        %2961 = vmatpush.msra.mxu0 0.0
        %2962 = vmatpush.msra.mxu0 0.0
        %v2963 = vand.u32 %v2655, 4294901760
        %2964 = vmatpush.msra.mxu0 %v2963
        %v2965 = vand.u32 %v2653, 4294901760
        %2966 = vmatpush.msra.mxu0 %v2965
        %v2967 = vand.u32 %v2651, 4294901760
        %2968 = vmatpush.msra.mxu0 %v2967
        %v2969 = vand.u32 %v2649, 4294901760
        %2970 = vmatpush.msra.mxu0 %v2969
        %v2971 = vand.u32 %v2664, 4294901760
        %v2972 = vsub.f32 %v2664, %v2971
        %v2973 = vand.u32 %v2972, 4294901760
        %2974 = vmatmul.f32.gmra.mxu0 %v2973
        %v2975 = vpop.f32.mrf.mxu0
        %v2976 = vadd.f32 %v2949, %v2975
        %2977 = vdwg.mxu0
        %2978 = vmatpush.msra.mxu0 0.0
        %2979 = vmatpush.msra.mxu0 0.0
        %2980 = vmatpush.msra.mxu0 0.0
        %2981 = vmatpush.msra.mxu0 0.0
        %2982 = vmatpush.msra.mxu0 0.0
        %2983 = vmatpush.msra.mxu0 0.0
        %2984 = vmatpush.msra.mxu0 0.0
        %2985 = vmatpush.msra.mxu0 0.0
        %2986 = vmatpush.msra.mxu0 0.0
        %2987 = vmatpush.msra.mxu0 0.0
        %2988 = vmatpush.msra.mxu0 0.0
        %2989 = vmatpush.msra.mxu0 0.0
        %v2990 = vand.u32 %v2655, 4294901760
        %v2991 = vsub.f32 %v2655, %v2990
        %v2992 = vand.u32 %v2991, 4294901760
        %2993 = vmatpush.msra.mxu0 %v2992
        %v2994 = vand.u32 %v2653, 4294901760
        %v2995 = vsub.f32 %v2653, %v2994
        %v2996 = vand.u32 %v2995, 4294901760
        %2997 = vmatpush.msra.mxu0 %v2996
        %v2998 = vand.u32 %v2651, 4294901760
        %v2999 = vsub.f32 %v2651, %v2998
        %v3000 = vand.u32 %v2999, 4294901760
        %3001 = vmatpush.msra.mxu0 %v3000
        %v3002 = vand.u32 %v2649, 4294901760
        %v3003 = vsub.f32 %v2649, %v3002
        %v3004 = vand.u32 %v3003, 4294901760
        %3005 = vmatpush.msra.mxu0 %v3004
        %v3006 = vand.u32 %v2664, 4294901760
        %3007 = vmatmul.f32.gmra.mxu0 %v3006
        %v3008 = vpop.f32.mrf.mxu0
        %v3009 = vadd.f32 %v2976, %v3008
        %3010 = vdwg.mxu0
        %3011 = vmatpush.msra.mxu0 0.0
        %3012 = vmatpush.msra.mxu0 0.0
        %3013 = vmatpush.msra.mxu0 0.0
        %3014 = vmatpush.msra.mxu0 0.0
        %3015 = vmatpush.msra.mxu0 0.0
        %3016 = vmatpush.msra.mxu0 0.0
        %3017 = vmatpush.msra.mxu0 0.0
        %3018 = vmatpush.msra.mxu0 0.0
        %3019 = vmatpush.msra.mxu0 0.0
        %3020 = vmatpush.msra.mxu0 0.0
        %3021 = vmatpush.msra.mxu0 0.0
        %3022 = vmatpush.msra.mxu0 0.0
        %v3023 = vand.u32 %v2655, 4294901760
        %3024 = vmatpush.msra.mxu0 %v3023
        %v3025 = vand.u32 %v2653, 4294901760
        %3026 = vmatpush.msra.mxu0 %v3025
        %v3027 = vand.u32 %v2651, 4294901760
        %3028 = vmatpush.msra.mxu0 %v3027
        %v3029 = vand.u32 %v2649, 4294901760
        %3030 = vmatpush.msra.mxu0 %v3029
        %v3031 = vand.u32 %v2664, 4294901760
        %3032 = vmatmul.f32.gmra.mxu0 %v3031
        %v3033 = vpop.f32.mrf.mxu0
        %v3034 = vadd.f32 %v3009, %v3033
        %3035 = vdwg.mxu0
        %v3036 = vmul.f32 %v2849, 0.31830987
        %v3037 = vmul.f32 %v3034, 0.31830987
        %v3038 = vround.ne.pseudo %v3036
        %v3039 = vround.ne.pseudo %v3037
        %v3040 = vmul.f32 %v3038, 3.140625
        %v3041 = vmul.f32 %v3039, 3.140625
        %v3042 = vsub.f32 %v2849, %v3040
        %v3043 = vsub.f32 %v3034, %v3041
        %v3044 = vmul.f32 %v3038, 0.0009676536
        %v3045 = vmul.f32 %v3039, 0.0009676536
        %v3046 = vsub.f32 %v3042, %v3044
        %v3047 = vsub.f32 %v3043, %v3045
        %v3048 = vmul.f32 %v3038, 0.5
        %v3049 = vmul.f32 %v3039, 0.5
        %v3050 = vfloor.f32 %v3048
        %v3051 = vfloor.f32 %v3049
        %v3052 = vmul.f32 %v3050, 2.0
        %v3053 = vmul.f32 %v3051, 2.0
        %v3054 = vsub.f32 %v3038, %v3052
        %v3055 = vsub.f32 %v3039, %v3053
        %v3056 = vmul.f32 %v3054, 2.0
        %v3057 = vmul.f32 %v3055, 2.0
        %v3058 = vsub.f32 1.0, %v3056
        %v3059 = vsub.f32 1.0, %v3057
        %v3060 = vmul.f32 %v3046, %v3046
        %v3061 = vmul.f32 %v3047, %v3047
        %v3062 = vmul.f32 %v3060, -2.5052108e-08
        %v3063 = vmul.f32 %v3061, -2.5052108e-08
        %v3064 = vadd.f32 %v3062, 2.7557319e-06
        %v3065 = vadd.f32 %v3063, 2.7557319e-06
        %v3066 = vmul.f32 %v3064, %v3060
        %v3067 = vmul.f32 %v3065, %v3061
        %v3068 = vsub.f32 %v3066, 0.0001984127
        %v3069 = vsub.f32 %v3067, 0.0001984127
        %v3070 = vmul.f32 %v3068, %v3060
        %v3071 = vmul.f32 %v3069, %v3061
        %v3072 = vadd.f32 %v3070, 0.008333334
        %v3073 = vadd.f32 %v3071, 0.008333334
        %v3074 = vmul.f32 %v3072, %v3060
        %v3075 = vmul.f32 %v3073, %v3061
        %v3076 = vsub.f32 %v3074, 0.16666667
        %v3077 = vsub.f32 %v3075, 0.16666667
        %v3078 = vmul.f32 %v3076, %v3060
        %v3079 = vmul.f32 %v3077, %v3061
        %v3080 = vadd.f32 %v3078, 1.0
        %v3081 = vadd.f32 %v3079, 1.0
        %v3082 = vmul.f32 %v3046, %v3080
        %v3083 = vmul.f32 %v3047, %v3081
        %v3084 = vmul.f32 %v3058, %v3082
        %v3085 = vmul.f32 %v3059, %v3083
        %v3088 = vrot.slane %v3085, 4
        %vm3089 = vcmask 1043456
        %v3090 = vsel %vm3089, %v3084, %v3088
        %3092 = vst [vmem:[%s326] sm:$0x77] %v3090
        %s3093 = sand.u32 %s225, 1
        %s3094 = scalar_lea.sflag [#allocation3], %s3093
        %s3095 = sand.u32 %s225, 1
        %s3096 = smul.addr %s3095, 8
        %s3097 = scalar_lea.vmem [#allocation2], %s3096
        // Predicated region
        $region57: #{tpu_custom_call.1} parent=55 // pred_check
          %p3098 = pneg %p235
        $region58: #{tpu_custom_call.1} parent=55 // pred_check_branch
          %3100 = sbr.rel (%p3098) target = $region60
        $region59: #{tpu_custom_call.1} parent=55 // pred_region
          %s3101 = smul.u32 2, %s23
          %3103 = vsyncadd %s3094, 0
          %s3104 = smul.addr %s3101, 4
          %s3105 = scalar_lea.hbm %s9, %s3104
          %s3107 = sshll.u32 %s3097, 4
          %s3108 = int_to_ptr.vmem [resolvable:$true] %s3107
          %s3109 = sshll.u32 %s3105, 4
          %s3110 = int_to_ptr.hbm [resolvable:$true] %s3109
          %3112 = dma.vmem_to_hbm [thread:$0]  %s3108, 128, %s3110, %s3094
        $region60: #{tpu_custom_call.1} parent=55 // pred_fallthru
          _
      $region56: #{tpu_custom_call.1} parent=5 // pred_fallthru
        _
      %p3113 = scmp.le.s32.totalorder 2, %s18
      // Predicated region
      $region61: #{tpu_custom_call.1} parent=5 // pred_check
        %p3114 = pneg %p3113
      $region62: #{tpu_custom_call.1} parent=5 // pred_check_branch
        %3116 = sbr.rel (%p3114) target = $region64
      $region63: #{tpu_custom_call.1} parent=5 // pred_region
        %s3117 = ssub.s32 %s18, 2
        // Predicated region
        $region65: #{tpu_custom_call.1} parent=63 // pred_check
          %p3118 = pneg %p241
        $region66: #{tpu_custom_call.1} parent=63 // pred_check_branch
          %3120 = sbr.rel (%p3118) target = $region68
        $region67: #{tpu_custom_call.1} parent=63 // pred_region
          %s3121 = sand.u32 %s226, 1
          %s3122 = scalar_lea.sflag [#allocation3], %s3121
          %s3123 = sand.u32 %s226, 1
          %s3124 = smul.addr %s3123, 8
          %s3125 = scalar_lea.vmem [#allocation2], %s3124
          %3127 = dma.done %s3122, 128
        $region68: #{tpu_custom_call.1} parent=63 // pred_fallthru
          _
      $region64: #{tpu_custom_call.1} parent=5 // pred_fallthru
        _
    $region6: #{tpu_custom_call.1} parent=1 // loop_footer
      %s22 = sadd.s32 1, %s18
    $region7: #{tpu_custom_call.1} parent=1 // loop_footer_branch
      %17 = sbr.rel target = $region3
    $region8: #{tpu_custom_call.1} parent=1 // loop_exit
      _
    %3128 = vsyncpa [#allocation3], 1
    %s3129 = scalar_lea.sflag [#allocation3], 1
    %3130 = vsyncpa %s3129, 1

// kernel: tpu_custom_call.1
$region0: #{tpu_custom_call.1}
  #allocation0 [shape = 'u32[]', space=smem, size = 0x4, offset = 0x4, fixed_abs, tag = 'smem constant byte address 0x4 - core index']
  #allocation1 [shape = 'u32[72,128]{1,0:T(1,128)}', space=vmem, size = 0x9000, scoped, tag = 'internal scratch']
  %s0 = inlined_call_operand.vmem [shape: f32[2,512], index: 0, kind: input, shape index: {}]
  %s1 = inlined_call_operand.vmem [shape: f32[32,2], index: 1, kind: input, shape index: {}]
  %s2 = inlined_call_operand.vmem [shape: f32[32,1], index: 2, kind: input, shape index: {}]
  %s3 = inlined_call_operand.vmem [shape: f32[32,32], index: 3, kind: input, shape index: {}]
  %s4 = inlined_call_operand.vmem [shape: f32[32,1], index: 4, kind: input, shape index: {}]
  %s5 = inlined_call_operand.vmem [shape: f32[32,32], index: 5, kind: input, shape index: {}]
  %s6 = inlined_call_operand.vmem [shape: f32[32,1], index: 6, kind: input, shape index: {}]
  %s7 = inlined_call_operand.vmem [shape: f32[3,32], index: 7, kind: input, shape index: {}]
  %s8 = inlined_call_operand.vmem [shape: f32[3,1], index: 8, kind: input, shape index: {}]
  %s9 = inlined_call_operand.hbm [shape: f32[3,512], index: 9, kind: output, shape index: {}]
  %s10 = sld [smem:[#allocation0]]
  $region69: #{tpu_custom_call.1} parent=0
    _
  %s12 = ssub.s32 1, %s10
  %s13 = scalar_select 0, %s12, %s10
  $region1: #{tpu_custom_call.1} parent=0
    #allocation2 [shape = 'u8[8192]{0}', space=vmem, size = 0x2000, scoped, tag = 'output window, operand 0']
    #allocation3 [shape = 's32[2]{0}', space=sflag, size = 0x8, scoped, tag = 'scoped memory for tpu_custom_call.1']
    %14 = vsyncpa [#allocation3], 0
    %s15 = scalar_lea.sflag [#allocation3], 1
    %16 = vsyncpa %s15, 0
    loop: start=0, step=1, limit=4
    $region2: #{tpu_custom_call.1} parent=1 // loop_pre_header
      _
    $region3: #{tpu_custom_call.1} parent=1 // loop_header
      %s18 = sphi 0, %s22
      %p19 = scmp.ge.s32.totalorder %s18, 4
      %s28 = sphi 0, %s30
      %s31 = sphi 0, %s28
      %s32 = sphi 0, %s31
      %s48 = sphi 0, %s32
      %s52 = sphi 0, %s52
      %s54 = sphi 0, %s52
      %s55 = sphi 0, %s54
      %s69 = sphi 0, %s55
      %s73 = sphi 0, %s73
      %s75 = sphi 0, %s73
      %s76 = sphi 0, %s75
      %s90 = sphi 0, %s76
      %s94 = sphi 0, %s94
      %s96 = sphi 0, %s94
      %s97 = sphi 0, %s96
      %s111 = sphi 0, %s97
      %s115 = sphi 0, %s115
      %s117 = sphi 0, %s115
      %s118 = sphi 0, %s117
      %s132 = sphi 0, %s118
      %s136 = sphi 0, %s136
      %s138 = sphi 0, %s136
      %s139 = sphi 0, %s138
      %s153 = sphi 0, %s139
      %s157 = sphi 0, %s157
      %s159 = sphi 0, %s157
      %s160 = sphi 0, %s159
      %s174 = sphi 0, %s160
      %s178 = sphi 0, %s178
      %s180 = sphi 0, %s178
      %s181 = sphi 0, %s180
      %s195 = sphi 0, %s181
      %s199 = sphi 0, %s199
      %s201 = sphi 0, %s199
      %s202 = sphi 0, %s201
      %s216 = sphi 0, %s202
      %s222 = sphi 0, %s224
      %s225 = sphi 0, %s222
      %s226 = sphi 0, %s225
      %s242 = sphi 0, %s226
    $region4: #{tpu_custom_call.1} parent=1 // loop_header_branch
      %21 = sbr.rel (%p19) target = $region8
    $region5: #{tpu_custom_call.1} parent=1 // loop_body
      %s23 = ssub.s32 %s18, 1
      %s24 = ssub.s32 %s18, 2
      %s25 = sadd.s32 %s18, 1
      %s26 = ssub.s32 %s18, %s25
      %p27 = scmp.eq.s32.totalorder %s26, 0
      %s29 = sadd.s32 %s28, 1
      %s30 = scalar_select %p27, %s28, %s29
      %p33 = pneg %p27
      %p34 = scmp.eq.s32.totalorder %s18, 1
      %p35 = por %p33, %p34
      %p36 = scmp.ne.s32.totalorder %s28, %s31
      %p37 = scmp.eq.s32.totalorder %s18, 0
      %p38 = por %p36, %p37
      %p39 = scmp.ne.s32.totalorder %s28, %s31
      %p40 = scmp.eq.s32.totalorder %s23, 1
      %p41 = por %p39, %p40
      %p42 = scmp.ne.s32.totalorder %s31, %s32
      %p43 = scmp.eq.s32.totalorder %s23, 0
      %p44 = por %p42, %p43
      %p45 = scmp.ne.s32.totalorder %s31, %s32
      %p46 = scmp.eq.s32.totalorder %s24, 1
      %p47 = por %p45, %p46
      %p49 = scmp.ne.s32.totalorder %s32, %s48
      %p50 = scmp.eq.s32.totalorder %s24, 0
      %p51 = por %p49, %p50
      %s53 = sadd.s32 %s52, 1
      %p56 = scmp.eq.s32.totalorder %s18, 1
      %p57 = scmp.ne.s32.totalorder %s52, %s54
      %p58 = scmp.eq.s32.totalorder %s18, 0
      %p59 = por %p57, %p58
      %p60 = scmp.ne.s32.totalorder %s52, %s54
      %p61 = scmp.eq.s32.totalorder %s23, 1
      %p62 = por %p60, %p61
      %p63 = scmp.ne.s32.totalorder %s54, %s55
      %p64 = scmp.eq.s32.totalorder %s23, 0
      %p65 = por %p63, %p64
      %p66 = scmp.ne.s32.totalorder %s54, %s55
      %p67 = scmp.eq.s32.totalorder %s24, 1
      %p68 = por %p66, %p67
      %p70 = scmp.ne.s32.totalorder %s55, %s69
      %p71 = scmp.eq.s32.totalorder %s24, 0
      %p72 = por %p70, %p71
      %s74 = sadd.s32 %s73, 1
      %p77 = scmp.eq.s32.totalorder %s18, 1
      %p78 = scmp.ne.s32.totalorder %s73, %s75
      %p79 = scmp.eq.s32.totalorder %s18, 0
      %p80 = por %p78, %p79
      %p81 = scmp.ne.s32.totalorder %s73, %s75
      %p82 = scmp.eq.s32.totalorder %s23, 1
      %p83 = por %p81, %p82
      %p84 = scmp.ne.s32.totalorder %s75, %s76
      %p85 = scmp.eq.s32.totalorder %s23, 0
      %p86 = por %p84, %p85
      %p87 = scmp.ne.s32.totalorder %s75, %s76
      %p88 = scmp.eq.s32.totalorder %s24, 1
      %p89 = por %p87, %p88
      %p91 = scmp.ne.s32.totalorder %s76, %s90
      %p92 = scmp.eq.s32.totalorder %s24, 0
      %p93 = por %p91, %p92
      %s95 = sadd.s32 %s94, 1
      %p98 = scmp.eq.s32.totalorder %s18, 1
      %p99 = scmp.ne.s32.totalorder %s94, %s96
      %p100 = scmp.eq.s32.totalorder %s18, 0
      %p101 = por %p99, %p100
      %p102 = scmp.ne.s32.totalorder %s94, %s96
      %p103 = scmp.eq.s32.totalorder %s23, 1
      %p104 = por %p102, %p103
      %p105 = scmp.ne.s32.totalorder %s96, %s97
      %p106 = scmp.eq.s32.totalorder %s23, 0
      %p107 = por %p105, %p106
      %p108 = scmp.ne.s32.totalorder %s96, %s97
      %p109 = scmp.eq.s32.totalorder %s24, 1
      %p110 = por %p108, %p109
      %p112 = scmp.ne.s32.totalorder %s97, %s111
      %p113 = scmp.eq.s32.totalorder %s24, 0
      %p114 = por %p112, %p113
      %s116 = sadd.s32 %s115, 1
      %p119 = scmp.eq.s32.totalorder %s18, 1
      %p120 = scmp.ne.s32.totalorder %s115, %s117
      %p121 = scmp.eq.s32.totalorder %s18, 0
      %p122 = por %p120, %p121
      %p123 = scmp.ne.s32.totalorder %s115, %s117
      %p124 = scmp.eq.s32.totalorder %s23, 1
      %p125 = por %p123, %p124
      %p126 = scmp.ne.s32.totalorder %s117, %s118
      %p127 = scmp.eq.s32.totalorder %s23, 0
      %p128 = por %p126, %p127
      %p129 = scmp.ne.s32.totalorder %s117, %s118
      %p130 = scmp.eq.s32.totalorder %s24, 1
      %p131 = por %p129, %p130
      %p133 = scmp.ne.s32.totalorder %s118, %s132
      %p134 = scmp.eq.s32.totalorder %s24, 0
      %p135 = por %p133, %p134
      %s137 = sadd.s32 %s136, 1
      %p140 = scmp.eq.s32.totalorder %s18, 1
      %p141 = scmp.ne.s32.totalorder %s136, %s138
      %p142 = scmp.eq.s32.totalorder %s18, 0
      %p143 = por %p141, %p142
      %p144 = scmp.ne.s32.totalorder %s136, %s138
      %p145 = scmp.eq.s32.totalorder %s23, 1
      %p146 = por %p144, %p145
      %p147 = scmp.ne.s32.totalorder %s138, %s139
      %p148 = scmp.eq.s32.totalorder %s23, 0
      %p149 = por %p147, %p148
      %p150 = scmp.ne.s32.totalorder %s138, %s139
      %p151 = scmp.eq.s32.totalorder %s24, 1
      %p152 = por %p150, %p151
      %p154 = scmp.ne.s32.totalorder %s139, %s153
      %p155 = scmp.eq.s32.totalorder %s24, 0
      %p156 = por %p154, %p155
      %s158 = sadd.s32 %s157, 1
      %p161 = scmp.eq.s32.totalorder %s18, 1
      %p162 = scmp.ne.s32.totalorder %s157, %s159
      %p163 = scmp.eq.s32.totalorder %s18, 0
      %p164 = por %p162, %p163
      %p165 = scmp.ne.s32.totalorder %s157, %s159
      %p166 = scmp.eq.s32.totalorder %s23, 1
      %p167 = por %p165, %p166
      %p168 = scmp.ne.s32.totalorder %s159, %s160
      %p169 = scmp.eq.s32.totalorder %s23, 0
      %p170 = por %p168, %p169
      %p171 = scmp.ne.s32.totalorder %s159, %s160
      %p172 = scmp.eq.s32.totalorder %s24, 1
      %p173 = por %p171, %p172
      %p175 = scmp.ne.s32.totalorder %s160, %s174
      %p176 = scmp.eq.s32.totalorder %s24, 0
      %p177 = por %p175, %p176
      %s179 = sadd.s32 %s178, 1
      %p182 = scmp.eq.s32.totalorder %s18, 1
      %p183 = scmp.ne.s32.totalorder %s178, %s180
      %p184 = scmp.eq.s32.totalorder %s18, 0
      %p185 = por %p183, %p184
      %p186 = scmp.ne.s32.totalorder %s178, %s180
      %p187 = scmp.eq.s32.totalorder %s23, 1
      %p188 = por %p186, %p187
      %p189 = scmp.ne.s32.totalorder %s180, %s181
      %p190 = scmp.eq.s32.totalorder %s23, 0
      %p191 = por %p189, %p190
      %p192 = scmp.ne.s32.totalorder %s180, %s181
      %p193 = scmp.eq.s32.totalorder %s24, 1
      %p194 = por %p192, %p193
      %p196 = scmp.ne.s32.totalorder %s181, %s195
      %p197 = scmp.eq.s32.totalorder %s24, 0
      %p198 = por %p196, %p197
      %s200 = sadd.s32 %s199, 1
      %p203 = scmp.eq.s32.totalorder %s18, 1
      %p204 = scmp.ne.s32.totalorder %s199, %s201
      %p205 = scmp.eq.s32.totalorder %s18, 0
      %p206 = por %p204, %p205
      %p207 = scmp.ne.s32.totalorder %s199, %s201
      %p208 = scmp.eq.s32.totalorder %s23, 1
      %p209 = por %p207, %p208
      %p210 = scmp.ne.s32.totalorder %s201, %s202
      %p211 = scmp.eq.s32.totalorder %s23, 0
      %p212 = por %p210, %p211
      %p213 = scmp.ne.s32.totalorder %s201, %s202
      %p214 = scmp.eq.s32.totalorder %s24, 1
      %p215 = por %p213, %p214
      %p217 = scmp.ne.s32.totalorder %s202, %s216
      %p218 = scmp.eq.s32.totalorder %s24, 0
      %p219 = por %p217, %p218
      %s220 = ssub.s32 %s18, %s25
      %p221 = scmp.eq.s32.totalorder %s220, 0
      %s223 = sadd.s32 %s222, 1
      %s224 = scalar_select %p221, %s222, %s223
      %p227 = pneg %p221
      %p228 = scmp.eq.s32.totalorder %s18, 1
      %p229 = por %p227, %p228
      %p230 = scmp.ne.s32.totalorder %s222, %s225
      %p231 = scmp.eq.s32.totalorder %s18, 0
      %p232 = por %p230, %p231
      %p233 = scmp.ne.s32.totalorder %s222, %s225
      %p234 = scmp.eq.s32.totalorder %s23, 1
      %p235 = por %p233, %p234
      %p236 = scmp.ne.s32.totalorder %s225, %s226
      %p237 = scmp.eq.s32.totalorder %s23, 0
      %p238 = por %p236, %p237
      %p239 = scmp.ne.s32.totalorder %s225, %s226
      %p240 = scmp.eq.s32.totalorder %s24, 1
      %p241 = por %p239, %p240
      %p243 = scmp.ne.s32.totalorder %s226, %s242
      %p244 = scmp.eq.s32.totalorder %s24, 0
      %p245 = por %p243, %p244
      %p246 = scmp.le.s32.totalorder 1, %s18
      %p247 = scmp.lt.s32.totalorder %s18, 3
      %p248 = pnand %p246, %p247
      %p249 = pneg %p248
      // Predicated region
      $region9: #{tpu_custom_call.1} parent=5 // pred_check
        _
      $region10: #{tpu_custom_call.1} parent=5 // pred_check_branch
        %251 = sbr.rel (%p248) target = $region12
      $region11: #{tpu_custom_call.1} parent=5 // pred_region
        %s252 = ssub.s32 %s18, 1
        // Predicated region
        $region13: #{tpu_custom_call.1} parent=11 // pred_check
          %p253 = pneg %p65
        $region14: #{tpu_custom_call.1} parent=11 // pred_check_branch
          %255 = sbr.rel (%p253) target = $region16
        $region15: #{tpu_custom_call.1} parent=11 // pred_region
          _
        $region16: #{tpu_custom_call.1} parent=11 // pred_fallthru
          _
        // Predicated region
        $region17: #{tpu_custom_call.1} parent=11 // pred_check
          %p256 = pneg %p86
        $region18: #{tpu_custom_call.1} parent=11 // pred_check_branch
          %258 = sbr.rel (%p256) target = $region20
        $region19: #{tpu_custom_call.1} parent=11 // pred_region
          _
        $region20: #{tpu_custom_call.1} parent=11 // pred_fallthru
          _
        // Predicated region
        $region21: #{tpu_custom_call.1} parent=11 // pred_check
          %p259 = pneg %p107
        $region22: #{tpu_custom_call.1} parent=11 // pred_check_branch
          %261 = sbr.rel (%p259) target = $region24
        $region23: #{tpu_custom_call.1} parent=11 // pred_region
          _
        $region24: #{tpu_custom_call.1} parent=11 // pred_fallthru
          _
        // Predicated region
        $region25: #{tpu_custom_call.1} parent=11 // pred_check
          %p262 = pneg %p128
        $region26: #{tpu_custom_call.1} parent=11 // pred_check_branch
          %264 = sbr.rel (%p262) target = $region28
        $region27: #{tpu_custom_call.1} parent=11 // pred_region
          _
        $region28: #{tpu_custom_call.1} parent=11 // pred_fallthru
          _
        // Predicated region
        $region29: #{tpu_custom_call.1} parent=11 // pred_check
          %p265 = pneg %p149
        $region30: #{tpu_custom_call.1} parent=11 // pred_check_branch
          %267 = sbr.rel (%p265) target = $region32
        $region31: #{tpu_custom_call.1} parent=11 // pred_region
          _
        $region32: #{tpu_custom_call.1} parent=11 // pred_fallthru
          _
        // Predicated region
        $region33: #{tpu_custom_call.1} parent=11 // pred_check
          %p268 = pneg %p170
        $region34: #{tpu_custom_call.1} parent=11 // pred_check_branch
          %270 = sbr.rel (%p268) target = $region36
        $region35: #{tpu_custom_call.1} parent=11 // pred_region
          _
        $region36: #{tpu_custom_call.1} parent=11 // pred_fallthru
          _
        // Predicated region
        $region37: #{tpu_custom_call.1} parent=11 // pred_check
          %p271 = pneg %p191
        $region38: #{tpu_custom_call.1} parent=11 // pred_check_branch
          %273 = sbr.rel (%p271) target = $region40
        $region39: #{tpu_custom_call.1} parent=11 // pred_region
          _
        $region40: #{tpu_custom_call.1} parent=11 // pred_fallthru
          _
        // Predicated region
        $region41: #{tpu_custom_call.1} parent=11 // pred_check
          %p274 = pneg %p212
        $region42: #{tpu_custom_call.1} parent=11 // pred_check_branch
          %276 = sbr.rel (%p274) target = $region44
        $region43: #{tpu_custom_call.1} parent=11 // pred_region
          _
        $region44: #{tpu_custom_call.1} parent=11 // pred_fallthru
          _
      $region12: #{tpu_custom_call.1} parent=5 // pred_fallthru
        _
      %p277 = scmp.lt.s32.totalorder %s18, 2
      // Predicated region
      $region45: #{tpu_custom_call.1} parent=5 // pred_check
        %p278 = pneg %p277
      $region46: #{tpu_custom_call.1} parent=5 // pred_check_branch
        %280 = sbr.rel (%p278) target = $region48
      $region47: #{tpu_custom_call.1} parent=5 // pred_region
        // Predicated region
        $region49: #{tpu_custom_call.1} parent=47 // pred_check
          %p281 = pneg %p38
        $region50: #{tpu_custom_call.1} parent=47 // pred_check_branch
          %283 = sbr.rel (%p281) target = $region52
        $region51: #{tpu_custom_call.1} parent=47 // pred_region
          %s284 = smul.u32 2, %s18
          %p285 = scmp.lt.s32.totalorder %s284, 3
          %s286 = scalar_select %p285, %s284, 3
          %s287 = smul.addr %s286, 2
          %s288 = scalar_lea.vmem %s0, %s287
          %s289 = smul.u32 2, %s18
        $region52: #{tpu_custom_call.1} parent=47 // pred_fallthru
          _
      $region48: #{tpu_custom_call.1} parent=5 // pred_fallthru
        _
      %p290 = scmp.le.s32.totalorder 1, %s18
      %p291 = scmp.lt.s32.totalorder %s18, 3
      %p292 = pnand %p290, %p291
      %p293 = pneg %p292
      // Predicated region
      $region53: #{tpu_custom_call.1} parent=5 // pred_check
        _
      $region54: #{tpu_custom_call.1} parent=5 // pred_check_branch
        %295 = sbr.rel (%p292) target = $region56
      $region55: #{tpu_custom_call.1} parent=5 // pred_region
        %s296 = ssub.s32 %s18, 1
        %s297 = smul.u32 2, %s23
        %p298 = scmp.lt.s32.totalorder %s297, 3
        %s299 = scalar_select %p298, %s297, 3
        %s300 = smul.addr %s299, 2
        %s301 = scalar_lea.vmem %s0, %s300
        %p302 = pneg %p44
        %p303 = pneg %p41
        %p304 = pneg %p65
        %p305 = pneg %p62
        %p306 = pneg %p86
        %p307 = pneg %p83
        %p308 = pneg %p107
        %p309 = pneg %p104
        %p310 = pneg %p128
        %p311 = pneg %p125
        %p312 = pneg %p149
        %p313 = pneg %p146
        %p314 = pneg %p170
        %p315 = pneg %p167
        %p316 = pneg %p191
        %p317 = pneg %p188
        %p318 = pneg %p212
        %p319 = pneg %p209
        %p320 = pneg %p238
        %p321 = pneg %p235
        %s322 = sand.u32 %s225, 1
        %s323 = scalar_lea.sflag [#allocation3], %s322
        %s324 = sand.u32 %s225, 1
        %s325 = smul.addr %s324, 8
        %s326 = scalar_lea.vmem [#allocation2], %s325
        %s327 = smul.u32 2, %s23
        %p328 = scmp.lt.s32.totalorder %s327, 3
        %s329 = scalar_select %p328, %s327, 3
        %s330 = smul.addr %s329, 2
        %s331 = scalar_lea.vmem %s0, %s330
        %s332 = smul.u32 2, %s23
        %s333 = smul.u32 2, %s23
        %v334 = vld [vmem:[%s331] sm:$0xf]
        %v335 = vld [vmem:[%s1] sm:$0xff]
        %v336 = vld [vmem:[%s1 + $0x8] sm:$0xff]
        %v337 = vld [vmem:[%s1 + $0x10] sm:$0xff]
        %v338 = vld [vmem:[%s1 + $0x18] sm:$0xff]
        %v339 = vld [vmem:[%s2] sm:$0xff]
        %v340 = vld [vmem:[%s2 + $0x8] sm:$0xff]
        %v341 = vld [vmem:[%s2 + $0x10] sm:$0xff]
        %v342 = vld [vmem:[%s2 + $0x18] sm:$0xff]
        %344 = vset.pattern.permute.xlu0 0
        %345 = vperm.xlu0 %344, %v339
        %v346 = vpop.permute.xlu0 %345
        %349 = vset.pattern.permute.xlu0 0
        %350 = vperm.xlu0 %349, %v340
        %v351 = vpop.permute.xlu0 %350
        %354 = vset.pattern.permute.xlu0 0
        %355 = vperm.xlu0 %354, %v341
        %v356 = vpop.permute.xlu0 %355
        %359 = vset.pattern.permute.xlu0 0
        %360 = vperm.xlu0 %359, %v342
        %v361 = vpop.permute.xlu0 %360
        %364 = vst [vmem:[#allocation1] ss:$4 sm:$0xff] %v334
        %v365 = vld.sshfl [vmem:[#allocation1] sm:$0xff pattern:$0x73625140]
        %v366 = vld.sshfl [vmem:[#allocation1 + $0x8] sm:$0xff pattern:$0x73625140]
        %vm367 = vcmask 15360
        %v369 = vsel %vm367, %v335, 0
        %v372 = vsel %vm367, %v336, 0
        %v375 = vsel %vm367, %v337, 0
        %v378 = vsel %vm367, %v338, 0
        %vm380 = vcmask 1041408
        %v381 = vsel %vm380, %v365, 0
        %v383 = vsel %vm380, %v366, 0
        %385 = vmatpush.msra.mxu0 0.0
        %386 = vmatpush.msra.mxu0 0.0
        %387 = vmatpush.msra.mxu0 0.0
        %388 = vmatpush.msra.mxu0 0.0
        %389 = vmatpush.msra.mxu0 0.0
        %390 = vmatpush.msra.mxu0 0.0
        %391 = vmatpush.msra.mxu0 0.0
        %392 = vmatpush.msra.mxu0 0.0
        %393 = vmatpush.msra.mxu0 0.0
        %394 = vmatpush.msra.mxu0 0.0
        %395 = vmatpush.msra.mxu0 0.0
        %396 = vmatpush.msra.mxu0 0.0
        %397 = vmatpush.msra.mxu0 0.0
        %398 = vmatpush.msra.mxu0 0.0
        %399 = vmatpush.msra.mxu0 0.0
        %400 = vmatpush.msra.mxu0 %v381
        %401 = vmatmul.f32.gmra.mxu0 %v369
        %v402 = vpop.f32.mrf.mxu0
        %v403 = vadd.f32 %v346, %v402
        %404 = vmatmul.f32.gmra.mxu0 %v372
        %v405 = vpop.f32.mrf.mxu0
        %v406 = vadd.f32 %v351, %v405
        %407 = vmatmul.f32.gmra.mxu0 %v375
        %v408 = vpop.f32.mrf.mxu0
        %v409 = vadd.f32 %v356, %v408
        %410 = vmatmul.f32.gmra.mxu0 %v378
        %v411 = vpop.f32.mrf.mxu0
        %v412 = vadd.f32 %v361, %v411
        %413 = vdwg.mxu0
        %414 = vmatpush.msra.mxu0 0.0
        %415 = vmatpush.msra.mxu0 0.0
        %416 = vmatpush.msra.mxu0 0.0
        %417 = vmatpush.msra.mxu0 0.0
        %418 = vmatpush.msra.mxu0 0.0
        %419 = vmatpush.msra.mxu0 0.0
        %420 = vmatpush.msra.mxu0 0.0
        %421 = vmatpush.msra.mxu0 0.0
        %422 = vmatpush.msra.mxu0 0.0
        %423 = vmatpush.msra.mxu0 0.0
        %424 = vmatpush.msra.mxu0 0.0
        %425 = vmatpush.msra.mxu0 0.0
        %426 = vmatpush.msra.mxu0 0.0
        %427 = vmatpush.msra.mxu0 0.0
        %428 = vmatpush.msra.mxu0 0.0
        %429 = vmatpush.msra.mxu0 %v383
        %430 = vmatmul.f32.gmra.mxu0 %v369
        %v431 = vpop.f32.mrf.mxu0
        %v432 = vadd.f32 %v346, %v431
        %433 = vmatmul.f32.gmra.mxu0 %v372
        %v434 = vpop.f32.mrf.mxu0
        %v435 = vadd.f32 %v351, %v434
        %436 = vmatmul.f32.gmra.mxu0 %v375
        %v437 = vpop.f32.mrf.mxu0
        %v438 = vadd.f32 %v356, %v437
        %439 = vmatmul.f32.gmra.mxu0 %v378
        %v440 = vpop.f32.mrf.mxu0
        %v441 = vadd.f32 %v361, %v440
        %442 = vdwg.mxu0
        %v443 = vmul.f32 %v403, 0.31830987
        %v444 = vmul.f32 %v432, 0.31830987
        %v445 = vmul.f32 %v406, 0.31830987
        %v446 = vmul.f32 %v435, 0.31830987
        %v447 = vmul.f32 %v409, 0.31830987
        %v448 = vmul.f32 %v438, 0.31830987
        %v449 = vmul.f32 %v412, 0.31830987
        %v450 = vmul.f32 %v441, 0.31830987
        %v451 = vround.ne.pseudo %v443
        %v452 = vround.ne.pseudo %v444
        %v453 = vround.ne.pseudo %v445
        %v454 = vround.ne.pseudo %v446
        %v455 = vround.ne.pseudo %v447
        %v456 = vround.ne.pseudo %v448
        %v457 = vround.ne.pseudo %v449
        %v458 = vround.ne.pseudo %v450
        %v459 = vmul.f32 %v451, 3.140625
        %v460 = vmul.f32 %v452, 3.140625
        %v461 = vmul.f32 %v453, 3.140625
        %v462 = vmul.f32 %v454, 3.140625
        %v463 = vmul.f32 %v455, 3.140625
        %v464 = vmul.f32 %v456, 3.140625
        %v465 = vmul.f32 %v457, 3.140625
        %v466 = vmul.f32 %v458, 3.140625
        %v467 = vsub.f32 %v403, %v459
        %v468 = vsub.f32 %v432, %v460
        %v469 = vsub.f32 %v406, %v461
        %v470 = vsub.f32 %v435, %v462
        %v471 = vsub.f32 %v409, %v463
        %v472 = vsub.f32 %v438, %v464
        %v473 = vsub.f32 %v412, %v465
        %v474 = vsub.f32 %v441, %v466
        %v475 = vmul.f32 %v451, 0.0009676536
        %v476 = vmul.f32 %v452, 0.0009676536
        %v477 = vmul.f32 %v453, 0.0009676536
        %v478 = vmul.f32 %v454, 0.0009676536
        %v479 = vmul.f32 %v455, 0.0009676536
        %v480 = vmul.f32 %v456, 0.0009676536
        %v481 = vmul.f32 %v457, 0.0009676536
        %v482 = vmul.f32 %v458, 0.0009676536
        %v483 = vsub.f32 %v467, %v475
        %v484 = vsub.f32 %v468, %v476
        %v485 = vsub.f32 %v469, %v477
        %v486 = vsub.f32 %v470, %v478
        %v487 = vsub.f32 %v471, %v479
        %v488 = vsub.f32 %v472, %v480
        %v489 = vsub.f32 %v473, %v481
        %v490 = vsub.f32 %v474, %v482
        %v491 = vmul.f32 %v451, 0.5
        %v492 = vmul.f32 %v452, 0.5
        %v493 = vmul.f32 %v453, 0.5
        %v494 = vmul.f32 %v454, 0.5
        %v495 = vmul.f32 %v455, 0.5
        %v496 = vmul.f32 %v456, 0.5
        %v497 = vmul.f32 %v457, 0.5
        %v498 = vmul.f32 %v458, 0.5
        %v499 = vfloor.f32 %v491
        %v500 = vfloor.f32 %v492
        %v501 = vfloor.f32 %v493
        %v502 = vfloor.f32 %v494
        %v503 = vfloor.f32 %v495
        %v504 = vfloor.f32 %v496
        %v505 = vfloor.f32 %v497
        %v506 = vfloor.f32 %v498
        %v507 = vmul.f32 %v499, 2.0
        %v508 = vmul.f32 %v500, 2.0
        %v509 = vmul.f32 %v501, 2.0
        %v510 = vmul.f32 %v502, 2.0
        %v511 = vmul.f32 %v503, 2.0
        %v512 = vmul.f32 %v504, 2.0
        %v513 = vmul.f32 %v505, 2.0
        %v514 = vmul.f32 %v506, 2.0
        %v515 = vsub.f32 %v451, %v507
        %v516 = vsub.f32 %v452, %v508
        %v517 = vsub.f32 %v453, %v509
        %v518 = vsub.f32 %v454, %v510
        %v519 = vsub.f32 %v455, %v511
        %v520 = vsub.f32 %v456, %v512
        %v521 = vsub.f32 %v457, %v513
        %v522 = vsub.f32 %v458, %v514
        %v523 = vmul.f32 %v515, 2.0
        %v524 = vmul.f32 %v516, 2.0
        %v525 = vmul.f32 %v517, 2.0
        %v526 = vmul.f32 %v518, 2.0
        %v527 = vmul.f32 %v519, 2.0
        %v528 = vmul.f32 %v520, 2.0
        %v529 = vmul.f32 %v521, 2.0
        %v530 = vmul.f32 %v522, 2.0
        %v531 = vsub.f32 1.0, %v523
        %v532 = vsub.f32 1.0, %v524
        %v533 = vsub.f32 1.0, %v525
        %v534 = vsub.f32 1.0, %v526
        %v535 = vsub.f32 1.0, %v527
        %v536 = vsub.f32 1.0, %v528
        %v537 = vsub.f32 1.0, %v529
        %v538 = vsub.f32 1.0, %v530
        %v539 = vmul.f32 %v483, %v483
        %v540 = vmul.f32 %v484, %v484
        %v541 = vmul.f32 %v485, %v485
        %v542 = vmul.f32 %v486, %v486
        %v543 = vmul.f32 %v487, %v487
        %v544 = vmul.f32 %v488, %v488
        %v545 = vmul.f32 %v489, %v489
        %v546 = vmul.f32 %v490, %v490
        %v547 = vmul.f32 %v539, -2.5052108e-08
        %v548 = vmul.f32 %v540, -2.5052108e-08
        %v549 = vmul.f32 %v541, -2.5052108e-08
        %v550 = vmul.f32 %v542, -2.5052108e-08
        %v551 = vmul.f32 %v543, -2.5052108e-08
        %v552 = vmul.f32 %v544, -2.5052108e-08
        %v553 = vmul.f32 %v545, -2.5052108e-08
        %v554 = vmul.f32 %v546, -2.5052108e-08
        %v555 = vadd.f32 %v547, 2.7557319e-06
        %v556 = vadd.f32 %v548, 2.7557319e-06
        %v557 = vadd.f32 %v549, 2.7557319e-06
        %v558 = vadd.f32 %v550, 2.7557319e-06
        %v559 = vadd.f32 %v551, 2.7557319e-06
        %v560 = vadd.f32 %v552, 2.7557319e-06
        %v561 = vadd.f32 %v553, 2.7557319e-06
        %v562 = vadd.f32 %v554, 2.7557319e-06
        %v563 = vmul.f32 %v555, %v539
        %v564 = vmul.f32 %v556, %v540
        %v565 = vmul.f32 %v557, %v541
        %v566 = vmul.f32 %v558, %v542
        %v567 = vmul.f32 %v559, %v543
        %v568 = vmul.f32 %v560, %v544
        %v569 = vmul.f32 %v561, %v545
        %v570 = vmul.f32 %v562, %v546
        %v571 = vsub.f32 %v563, 0.0001984127
        %v572 = vsub.f32 %v564, 0.0001984127
        %v573 = vsub.f32 %v565, 0.0001984127
        %v574 = vsub.f32 %v566, 0.0001984127
        %v575 = vsub.f32 %v567, 0.0001984127
        %v576 = vsub.f32 %v568, 0.0001984127
        %v577 = vsub.f32 %v569, 0.0001984127
        %v578 = vsub.f32 %v570, 0.0001984127
        %v579 = vmul.f32 %v571, %v539
        %v580 = vmul.f32 %v572, %v540
        %v581 = vmul.f32 %v573, %v541
        %v582 = vmul.f32 %v574, %v542
        %v583 = vmul.f32 %v575, %v543
        %v584 = vmul.f32 %v576, %v544
        %v585 = vmul.f32 %v577, %v545
        %v586 = vmul.f32 %v578, %v546
        %v587 = vadd.f32 %v579, 0.008333334
        %v588 = vadd.f32 %v580, 0.008333334
        %v589 = vadd.f32 %v581, 0.008333334
        %v590 = vadd.f32 %v582, 0.008333334
        %v591 = vadd.f32 %v583, 0.008333334
        %v592 = vadd.f32 %v584, 0.008333334
        %v593 = vadd.f32 %v585, 0.008333334
        %v594 = vadd.f32 %v586, 0.008333334
        %v595 = vmul.f32 %v587, %v539
        %v596 = vmul.f32 %v588, %v540
        %v597 = vmul.f32 %v589, %v541
        %v598 = vmul.f32 %v590, %v542
        %v599 = vmul.f32 %v591, %v543
        %v600 = vmul.f32 %v592, %v544
        %v601 = vmul.f32 %v593, %v545
        %v602 = vmul.f32 %v594, %v546
        %v603 = vsub.f32 %v595, 0.16666667
        %v604 = vsub.f32 %v596, 0.16666667
        %v605 = vsub.f32 %v597, 0.16666667
        %v606 = vsub.f32 %v598, 0.16666667
        %v607 = vsub.f32 %v599, 0.16666667
        %v608 = vsub.f32 %v600, 0.16666667
        %v609 = vsub.f32 %v601, 0.16666667
        %v610 = vsub.f32 %v602, 0.16666667
        %v611 = vmul.f32 %v603, %v539
        %v612 = vmul.f32 %v604, %v540
        %v613 = vmul.f32 %v605, %v541
        %v614 = vmul.f32 %v606, %v542
        %v615 = vmul.f32 %v607, %v543
        %v616 = vmul.f32 %v608, %v544
        %v617 = vmul.f32 %v609, %v545
        %v618 = vmul.f32 %v610, %v546
        %v619 = vadd.f32 %v611, 1.0
        %v620 = vadd.f32 %v612, 1.0
        %v621 = vadd.f32 %v613, 1.0
        %v622 = vadd.f32 %v614, 1.0
        %v623 = vadd.f32 %v615, 1.0
        %v624 = vadd.f32 %v616, 1.0
        %v625 = vadd.f32 %v617, 1.0
        %v626 = vadd.f32 %v618, 1.0
        %v627 = vmul.f32 %v483, %v619
        %v628 = vmul.f32 %v484, %v620
        %v629 = vmul.f32 %v485, %v621
        %v630 = vmul.f32 %v486, %v622
        %v631 = vmul.f32 %v487, %v623
        %v632 = vmul.f32 %v488, %v624
        %v633 = vmul.f32 %v489, %v625
        %v634 = vmul.f32 %v490, %v626
        %v635 = vmul.f32 %v531, %v627
        %v636 = vmul.f32 %v532, %v628
        %v637 = vmul.f32 %v533, %v629
        %v638 = vmul.f32 %v534, %v630
        %v639 = vmul.f32 %v535, %v631
        %v640 = vmul.f32 %v536, %v632
        %v641 = vmul.f32 %v537, %v633
        %v642 = vmul.f32 %v538, %v634
        %v643 = vld [vmem:[%s3] sm:$0xff]
        %v644 = vld [vmem:[%s3 + $0x8] sm:$0xff]
        %v645 = vld [vmem:[%s3 + $0x10] sm:$0xff]
        %v646 = vld [vmem:[%s3 + $0x18] sm:$0xff]
        %v647 = vld [vmem:[%s4] sm:$0xff]
        %v648 = vld [vmem:[%s4 + $0x8] sm:$0xff]
        %v649 = vld [vmem:[%s4 + $0x10] sm:$0xff]
        %v650 = vld [vmem:[%s4 + $0x18] sm:$0xff]
        %652 = vset.pattern.permute.xlu0 0
        %653 = vperm.xlu0 %652, %v647
        %v654 = vpop.permute.xlu0 %653
        %657 = vset.pattern.permute.xlu0 0
        %658 = vperm.xlu0 %657, %v648
        %v659 = vpop.permute.xlu0 %658
        %662 = vset.pattern.permute.xlu0 0
        %663 = vperm.xlu0 %662, %v649
        %v664 = vpop.permute.xlu0 %663
        %667 = vset.pattern.permute.xlu0 0
        %668 = vperm.xlu0 %667, %v650
        %v669 = vpop.permute.xlu0 %668
        %vm671 = vcmask 261120
        %v673 = vsel %vm671, %v643, 0
        %v676 = vsel %vm671, %v644, 0
        %v679 = vsel %vm671, %v645, 0
        %v682 = vsel %vm671, %v646, 0
        %684 = vmatpush.msra.mxu0 0.0
        %685 = vmatpush.msra.mxu0 0.0
        %686 = vmatpush.msra.mxu0 0.0
        %687 = vmatpush.msra.mxu0 0.0
        %688 = vmatpush.msra.mxu0 0.0
        %689 = vmatpush.msra.mxu0 0.0
        %690 = vmatpush.msra.mxu0 0.0
        %691 = vmatpush.msra.mxu0 0.0
        %692 = vmatpush.msra.mxu0 0.0
        %693 = vmatpush.msra.mxu0 0.0
        %694 = vmatpush.msra.mxu0 0.0
        %695 = vmatpush.msra.mxu0 0.0
        %696 = vmatpush.msra.mxu0 %v641
        %697 = vmatpush.msra.mxu0 %v639
        %698 = vmatpush.msra.mxu0 %v637
        %699 = vmatpush.msra.mxu0 %v635
        %700 = vmatmul.f32.gmra.mxu0 %v673
        %v701 = vpop.f32.mrf.mxu0
        %v702 = vadd.f32 %v654, %v701
        %703 = vmatmul.f32.gmra.mxu0 %v676
        %v704 = vpop.f32.mrf.mxu0
        %v705 = vadd.f32 %v659, %v704
        %706 = vmatmul.f32.gmra.mxu0 %v679
        %v707 = vpop.f32.mrf.mxu0
        %v708 = vadd.f32 %v664, %v707
        %709 = vmatmul.f32.gmra.mxu0 %v682
        %v710 = vpop.f32.mrf.mxu0
        %v711 = vadd.f32 %v669, %v710
        %712 = vdwg.mxu0
        %713 = vmatpush.msra.mxu0 0.0
        %714 = vmatpush.msra.mxu0 0.0
        %715 = vmatpush.msra.mxu0 0.0
        %716 = vmatpush.msra.mxu0 0.0
        %717 = vmatpush.msra.mxu0 0.0
        %718 = vmatpush.msra.mxu0 0.0
        %719 = vmatpush.msra.mxu0 0.0
        %720 = vmatpush.msra.mxu0 0.0
        %721 = vmatpush.msra.mxu0 0.0
        %722 = vmatpush.msra.mxu0 0.0
        %723 = vmatpush.msra.mxu0 0.0
        %724 = vmatpush.msra.mxu0 0.0
        %725 = vmatpush.msra.mxu0 %v642
        %726 = vmatpush.msra.mxu0 %v640
        %727 = vmatpush.msra.mxu0 %v638
        %728 = vmatpush.msra.mxu0 %v636
        %729 = vmatmul.f32.gmra.mxu0 %v673
        %v730 = vpop.f32.mrf.mxu0
        %v731 = vadd.f32 %v654, %v730
        %732 = vmatmul.f32.gmra.mxu0 %v676
        %v733 = vpop.f32.mrf.mxu0
        %v734 = vadd.f32 %v659, %v733
        %735 = vmatmul.f32.gmra.mxu0 %v679
        %v736 = vpop.f32.mrf.mxu0
        %v737 = vadd.f32 %v664, %v736
        %738 = vmatmul.f32.gmra.mxu0 %v682
        %v739 = vpop.f32.mrf.mxu0
        %v740 = vadd.f32 %v669, %v739
        %741 = vdwg.mxu0
        %v742 = vmul.f32 %v702, 0.31830987
        %v743 = vmul.f32 %v731, 0.31830987
        %v744 = vmul.f32 %v705, 0.31830987
        %v745 = vmul.f32 %v734, 0.31830987
        %v746 = vmul.f32 %v708, 0.31830987
        %v747 = vmul.f32 %v737, 0.31830987
        %v748 = vmul.f32 %v711, 0.31830987
        %v749 = vmul.f32 %v740, 0.31830987
        %v750 = vround.ne.pseudo %v742
        %v751 = vround.ne.pseudo %v743
        %v752 = vround.ne.pseudo %v744
        %v753 = vround.ne.pseudo %v745
        %v754 = vround.ne.pseudo %v746
        %v755 = vround.ne.pseudo %v747
        %v756 = vround.ne.pseudo %v748
        %v757 = vround.ne.pseudo %v749
        %v758 = vmul.f32 %v750, 3.140625
        %v759 = vmul.f32 %v751, 3.140625
        %v760 = vmul.f32 %v752, 3.140625
        %v761 = vmul.f32 %v753, 3.140625
        %v762 = vmul.f32 %v754, 3.140625
        %v763 = vmul.f32 %v755, 3.140625
        %v764 = vmul.f32 %v756, 3.140625
        %v765 = vmul.f32 %v757, 3.140625
        %v766 = vsub.f32 %v702, %v758
        %v767 = vsub.f32 %v731, %v759
        %v768 = vsub.f32 %v705, %v760
        %v769 = vsub.f32 %v734, %v761
        %v770 = vsub.f32 %v708, %v762
        %v771 = vsub.f32 %v737, %v763
        %v772 = vsub.f32 %v711, %v764
        %v773 = vsub.f32 %v740, %v765
        %v774 = vmul.f32 %v750, 0.0009676536
        %v775 = vmul.f32 %v751, 0.0009676536
        %v776 = vmul.f32 %v752, 0.0009676536
        %v777 = vmul.f32 %v753, 0.0009676536
        %v778 = vmul.f32 %v754, 0.0009676536
        %v779 = vmul.f32 %v755, 0.0009676536
        %v780 = vmul.f32 %v756, 0.0009676536
        %v781 = vmul.f32 %v757, 0.0009676536
        %v782 = vsub.f32 %v766, %v774
        %v783 = vsub.f32 %v767, %v775
        %v784 = vsub.f32 %v768, %v776
        %v785 = vsub.f32 %v769, %v777
        %v786 = vsub.f32 %v770, %v778
        %v787 = vsub.f32 %v771, %v779
        %v788 = vsub.f32 %v772, %v780
        %v789 = vsub.f32 %v773, %v781
        %v790 = vmul.f32 %v750, 0.5
        %v791 = vmul.f32 %v751, 0.5
        %v792 = vmul.f32 %v752, 0.5
        %v793 = vmul.f32 %v753, 0.5
        %v794 = vmul.f32 %v754, 0.5
        %v795 = vmul.f32 %v755, 0.5
        %v796 = vmul.f32 %v756, 0.5
        %v797 = vmul.f32 %v757, 0.5
        %v798 = vfloor.f32 %v790
        %v799 = vfloor.f32 %v791
        %v800 = vfloor.f32 %v792
        %v801 = vfloor.f32 %v793
        %v802 = vfloor.f32 %v794
        %v803 = vfloor.f32 %v795
        %v804 = vfloor.f32 %v796
        %v805 = vfloor.f32 %v797
        %v806 = vmul.f32 %v798, 2.0
        %v807 = vmul.f32 %v799, 2.0
        %v808 = vmul.f32 %v800, 2.0
        %v809 = vmul.f32 %v801, 2.0
        %v810 = vmul.f32 %v802, 2.0
        %v811 = vmul.f32 %v803, 2.0
        %v812 = vmul.f32 %v804, 2.0
        %v813 = vmul.f32 %v805, 2.0
        %v814 = vsub.f32 %v750, %v806
        %v815 = vsub.f32 %v751, %v807
        %v816 = vsub.f32 %v752, %v808
        %v817 = vsub.f32 %v753, %v809
        %v818 = vsub.f32 %v754, %v810
        %v819 = vsub.f32 %v755, %v811
        %v820 = vsub.f32 %v756, %v812
        %v821 = vsub.f32 %v757, %v813
        %v822 = vmul.f32 %v814, 2.0
        %v823 = vmul.f32 %v815, 2.0
        %v824 = vmul.f32 %v816, 2.0
        %v825 = vmul.f32 %v817, 2.0
        %v826 = vmul.f32 %v818, 2.0
        %v827 = vmul.f32 %v819, 2.0
        %v828 = vmul.f32 %v820, 2.0
        %v829 = vmul.f32 %v821, 2.0
        %v830 = vsub.f32 1.0, %v822
        %v831 = vsub.f32 1.0, %v823
        %v832 = vsub.f32 1.0, %v824
        %v833 = vsub.f32 1.0, %v825
        %v834 = vsub.f32 1.0, %v826
        %v835 = vsub.f32 1.0, %v827
        %v836 = vsub.f32 1.0, %v828
        %v837 = vsub.f32 1.0, %v829
        %v838 = vmul.f32 %v782, %v782
        %v839 = vmul.f32 %v783, %v783
        %v840 = vmul.f32 %v784, %v784
        %v841 = vmul.f32 %v785, %v785
        %v842 = vmul.f32 %v786, %v786
        %v843 = vmul.f32 %v787, %v787
        %v844 = vmul.f32 %v788, %v788
        %v845 = vmul.f32 %v789, %v789
        %v846 = vmul.f32 %v838, -2.5052108e-08
        %v847 = vmul.f32 %v839, -2.5052108e-08
        %v848 = vmul.f32 %v840, -2.5052108e-08
        %v849 = vmul.f32 %v841, -2.5052108e-08
        %v850 = vmul.f32 %v842, -2.5052108e-08
        %v851 = vmul.f32 %v843, -2.5052108e-08
        %v852 = vmul.f32 %v844, -2.5052108e-08
        %v853 = vmul.f32 %v845, -2.5052108e-08
        %v854 = vadd.f32 %v846, 2.7557319e-06
        %v855 = vadd.f32 %v847, 2.7557319e-06
        %v856 = vadd.f32 %v848, 2.7557319e-06
        %v857 = vadd.f32 %v849, 2.7557319e-06
        %v858 = vadd.f32 %v850, 2.7557319e-06
        %v859 = vadd.f32 %v851, 2.7557319e-06
        %v860 = vadd.f32 %v852, 2.7557319e-06
        %v861 = vadd.f32 %v853, 2.7557319e-06
        %v862 = vmul.f32 %v854, %v838
        %v863 = vmul.f32 %v855, %v839
        %v864 = vmul.f32 %v856, %v840
        %v865 = vmul.f32 %v857, %v841
        %v866 = vmul.f32 %v858, %v842
        %v867 = vmul.f32 %v859, %v843
        %v868 = vmul.f32 %v860, %v844
        %v869 = vmul.f32 %v861, %v845
        %v870 = vsub.f32 %v862, 0.0001984127
        %v871 = vsub.f32 %v863, 0.0001984127
        %v872 = vsub.f32 %v864, 0.0001984127
        %v873 = vsub.f32 %v865, 0.0001984127
        %v874 = vsub.f32 %v866, 0.0001984127
        %v875 = vsub.f32 %v867, 0.0001984127
        %v876 = vsub.f32 %v868, 0.0001984127
        %v877 = vsub.f32 %v869, 0.0001984127
        %v878 = vmul.f32 %v870, %v838
        %v879 = vmul.f32 %v871, %v839
        %v880 = vmul.f32 %v872, %v840
        %v881 = vmul.f32 %v873, %v841
        %v882 = vmul.f32 %v874, %v842
        %v883 = vmul.f32 %v875, %v843
        %v884 = vmul.f32 %v876, %v844
        %v885 = vmul.f32 %v877, %v845
        %v886 = vadd.f32 %v878, 0.008333334
        %v887 = vadd.f32 %v879, 0.008333334
        %v888 = vadd.f32 %v880, 0.008333334
        %v889 = vadd.f32 %v881, 0.008333334
        %v890 = vadd.f32 %v882, 0.008333334
        %v891 = vadd.f32 %v883, 0.008333334
        %v892 = vadd.f32 %v884, 0.008333334
        %v893 = vadd.f32 %v885, 0.008333334
        %v894 = vmul.f32 %v886, %v838
        %v895 = vmul.f32 %v887, %v839
        %v896 = vmul.f32 %v888, %v840
        %v897 = vmul.f32 %v889, %v841
        %v898 = vmul.f32 %v890, %v842
        %v899 = vmul.f32 %v891, %v843
        %v900 = vmul.f32 %v892, %v844
        %v901 = vmul.f32 %v893, %v845
        %v902 = vsub.f32 %v894, 0.16666667
        %v903 = vsub.f32 %v895, 0.16666667
        %v904 = vsub.f32 %v896, 0.16666667
        %v905 = vsub.f32 %v897, 0.16666667
        %v906 = vsub.f32 %v898, 0.16666667
        %v907 = vsub.f32 %v899, 0.16666667
        %v908 = vsub.f32 %v900, 0.16666667
        %v909 = vsub.f32 %v901, 0.16666667
        %v910 = vmul.f32 %v902, %v838
        %v911 = vmul.f32 %v903, %v839
        %v912 = vmul.f32 %v904, %v840
        %v913 = vmul.f32 %v905, %v841
        %v914 = vmul.f32 %v906, %v842
        %v915 = vmul.f32 %v907, %v843
        %v916 = vmul.f32 %v908, %v844
        %v917 = vmul.f32 %v909, %v845
        %v918 = vadd.f32 %v910, 1.0
        %v919 = vadd.f32 %v911, 1.0
        %v920 = vadd.f32 %v912, 1.0
        %v921 = vadd.f32 %v913, 1.0
        %v922 = vadd.f32 %v914, 1.0
        %v923 = vadd.f32 %v915, 1.0
        %v924 = vadd.f32 %v916, 1.0
        %v925 = vadd.f32 %v917, 1.0
        %v926 = vmul.f32 %v782, %v918
        %v927 = vmul.f32 %v783, %v919
        %v928 = vmul.f32 %v784, %v920
        %v929 = vmul.f32 %v785, %v921
        %v930 = vmul.f32 %v786, %v922
        %v931 = vmul.f32 %v787, %v923
        %v932 = vmul.f32 %v788, %v924
        %v933 = vmul.f32 %v789, %v925
        %v934 = vmul.f32 %v830, %v926
        %v935 = vmul.f32 %v831, %v927
        %v936 = vmul.f32 %v832, %v928
        %v937 = vmul.f32 %v833, %v929
        %v938 = vmul.f32 %v834, %v930
        %v939 = vmul.f32 %v835, %v931
        %v940 = vmul.f32 %v836, %v932
        %v941 = vmul.f32 %v837, %v933
        %v942 = vld [vmem:[%s5] sm:$0xff]
        %v943 = vld [vmem:[%s5 + $0x8] sm:$0xff]
        %v944 = vld [vmem:[%s5 + $0x10] sm:$0xff]
        %v945 = vld [vmem:[%s5 + $0x18] sm:$0xff]
        %v946 = vld [vmem:[%s6] sm:$0xff]
        %v947 = vld [vmem:[%s6 + $0x8] sm:$0xff]
        %v948 = vld [vmem:[%s6 + $0x10] sm:$0xff]
        %v949 = vld [vmem:[%s6 + $0x18] sm:$0xff]
        %951 = vset.pattern.permute.xlu0 0
        %952 = vperm.xlu0 %951, %v946
        %v953 = vpop.permute.xlu0 %952
        %956 = vset.pattern.permute.xlu0 0
        %957 = vperm.xlu0 %956, %v947
        %v958 = vpop.permute.xlu0 %957
        %961 = vset.pattern.permute.xlu0 0
        %962 = vperm.xlu0 %961, %v948
        %v963 = vpop.permute.xlu0 %962
        %966 = vset.pattern.permute.xlu0 0
        %967 = vperm.xlu0 %966, %v949
        %v968 = vpop.permute.xlu0 %967
        %v971 = vsel %vm671, %v942, 0
        %v974 = vsel %vm671, %v943, 0
        %v977 = vsel %vm671, %v944, 0
        %v980 = vsel %vm671, %v945, 0
        %982 = vmatpush.msra.mxu0 0.0
        %983 = vmatpush.msra.mxu0 0.0
        %984 = vmatpush.msra.mxu0 0.0
        %985 = vmatpush.msra.mxu0 0.0
        %986 = vmatpush.msra.mxu0 0.0
        %987 = vmatpush.msra.mxu0 0.0
        %988 = vmatpush.msra.mxu0 0.0
        %989 = vmatpush.msra.mxu0 0.0
        %990 = vmatpush.msra.mxu0 0.0
        %991 = vmatpush.msra.mxu0 0.0
        %992 = vmatpush.msra.mxu0 0.0
        %993 = vmatpush.msra.mxu0 0.0
        %994 = vmatpush.msra.mxu0 %v940
        %995 = vmatpush.msra.mxu0 %v938
        %996 = vmatpush.msra.mxu0 %v936
        %997 = vmatpush.msra.mxu0 %v934
        %998 = vmatmul.f32.gmra.mxu0 %v971
        %v999 = vpop.f32.mrf.mxu0
        %v1000 = vadd.f32 %v953, %v999
        %1001 = vmatmul.f32.gmra.mxu0 %v974
        %v1002 = vpop.f32.mrf.mxu0
        %v1003 = vadd.f32 %v958, %v1002
        %1004 = vmatmul.f32.gmra.mxu0 %v977
        %v1005 = vpop.f32.mrf.mxu0
        %v1006 = vadd.f32 %v963, %v1005
        %1007 = vmatmul.f32.gmra.mxu0 %v980
        %v1008 = vpop.f32.mrf.mxu0
        %v1009 = vadd.f32 %v968, %v1008
        %1010 = vdwg.mxu0
        %1011 = vmatpush.msra.mxu0 0.0
        %1012 = vmatpush.msra.mxu0 0.0
        %1013 = vmatpush.msra.mxu0 0.0
        %1014 = vmatpush.msra.mxu0 0.0
        %1015 = vmatpush.msra.mxu0 0.0
        %1016 = vmatpush.msra.mxu0 0.0
        %1017 = vmatpush.msra.mxu0 0.0
        %1018 = vmatpush.msra.mxu0 0.0
        %1019 = vmatpush.msra.mxu0 0.0
        %1020 = vmatpush.msra.mxu0 0.0
        %1021 = vmatpush.msra.mxu0 0.0
        %1022 = vmatpush.msra.mxu0 0.0
        %1023 = vmatpush.msra.mxu0 %v941
        %1024 = vmatpush.msra.mxu0 %v939
        %1025 = vmatpush.msra.mxu0 %v937
        %1026 = vmatpush.msra.mxu0 %v935
        %1027 = vmatmul.f32.gmra.mxu0 %v971
        %v1028 = vpop.f32.mrf.mxu0
        %v1029 = vadd.f32 %v953, %v1028
        %1030 = vmatmul.f32.gmra.mxu0 %v974
        %v1031 = vpop.f32.mrf.mxu0
        %v1032 = vadd.f32 %v958, %v1031
        %1033 = vmatmul.f32.gmra.mxu0 %v977
        %v1034 = vpop.f32.mrf.mxu0
        %v1035 = vadd.f32 %v963, %v1034
        %1036 = vmatmul.f32.gmra.mxu0 %v980
        %v1037 = vpop.f32.mrf.mxu0
        %v1038 = vadd.f32 %v968, %v1037
        %1039 = vdwg.mxu0
        %v1040 = vmul.f32 %v1000, 0.31830987
        %v1041 = vmul.f32 %v1029, 0.31830987
        %v1042 = vmul.f32 %v1003, 0.31830987
        %v1043 = vmul.f32 %v1032, 0.31830987
        %v1044 = vmul.f32 %v1006, 0.31830987
        %v1045 = vmul.f32 %v1035, 0.31830987
        %v1046 = vmul.f32 %v1009, 0.31830987
        %v1047 = vmul.f32 %v1038, 0.31830987
        %v1048 = vround.ne.pseudo %v1040
        %v1049 = vround.ne.pseudo %v1041
        %v1050 = vround.ne.pseudo %v1042
        %v1051 = vround.ne.pseudo %v1043
        %v1052 = vround.ne.pseudo %v1044
        %v1053 = vround.ne.pseudo %v1045
        %v1054 = vround.ne.pseudo %v1046
        %v1055 = vround.ne.pseudo %v1047
        %v1056 = vmul.f32 %v1048, 3.140625
        %v1057 = vmul.f32 %v1049, 3.140625
        %v1058 = vmul.f32 %v1050, 3.140625
        %v1059 = vmul.f32 %v1051, 3.140625
        %v1060 = vmul.f32 %v1052, 3.140625
        %v1061 = vmul.f32 %v1053, 3.140625
        %v1062 = vmul.f32 %v1054, 3.140625
        %v1063 = vmul.f32 %v1055, 3.140625
        %v1064 = vsub.f32 %v1000, %v1056
        %v1065 = vsub.f32 %v1029, %v1057
        %v1066 = vsub.f32 %v1003, %v1058
        %v1067 = vsub.f32 %v1032, %v1059
        %v1068 = vsub.f32 %v1006, %v1060
        %v1069 = vsub.f32 %v1035, %v1061
        %v1070 = vsub.f32 %v1009, %v1062
        %v1071 = vsub.f32 %v1038, %v1063
        %v1072 = vmul.f32 %v1048, 0.0009676536
        %v1073 = vmul.f32 %v1049, 0.0009676536
        %v1074 = vmul.f32 %v1050, 0.0009676536
        %v1075 = vmul.f32 %v1051, 0.0009676536
        %v1076 = vmul.f32 %v1052, 0.0009676536
        %v1077 = vmul.f32 %v1053, 0.0009676536
        %v1078 = vmul.f32 %v1054, 0.0009676536
        %v1079 = vmul.f32 %v1055, 0.0009676536
        %v1080 = vsub.f32 %v1064, %v1072
        %v1081 = vsub.f32 %v1065, %v1073
        %v1082 = vsub.f32 %v1066, %v1074
        %v1083 = vsub.f32 %v1067, %v1075
        %v1084 = vsub.f32 %v1068, %v1076
        %v1085 = vsub.f32 %v1069, %v1077
        %v1086 = vsub.f32 %v1070, %v1078
        %v1087 = vsub.f32 %v1071, %v1079
        %v1088 = vmul.f32 %v1048, 0.5
        %v1089 = vmul.f32 %v1049, 0.5
        %v1090 = vmul.f32 %v1050, 0.5
        %v1091 = vmul.f32 %v1051, 0.5
        %v1092 = vmul.f32 %v1052, 0.5
        %v1093 = vmul.f32 %v1053, 0.5
        %v1094 = vmul.f32 %v1054, 0.5
        %v1095 = vmul.f32 %v1055, 0.5
        %v1096 = vfloor.f32 %v1088
        %v1097 = vfloor.f32 %v1089
        %v1098 = vfloor.f32 %v1090
        %v1099 = vfloor.f32 %v1091
        %v1100 = vfloor.f32 %v1092
        %v1101 = vfloor.f32 %v1093
        %v1102 = vfloor.f32 %v1094
        %v1103 = vfloor.f32 %v1095
        %v1104 = vmul.f32 %v1096, 2.0
        %v1105 = vmul.f32 %v1097, 2.0
        %v1106 = vmul.f32 %v1098, 2.0
        %v1107 = vmul.f32 %v1099, 2.0
        %v1108 = vmul.f32 %v1100, 2.0
        %v1109 = vmul.f32 %v1101, 2.0
        %v1110 = vmul.f32 %v1102, 2.0
        %v1111 = vmul.f32 %v1103, 2.0
        %v1112 = vsub.f32 %v1048, %v1104
        %v1113 = vsub.f32 %v1049, %v1105
        %v1114 = vsub.f32 %v1050, %v1106
        %v1115 = vsub.f32 %v1051, %v1107
        %v1116 = vsub.f32 %v1052, %v1108
        %v1117 = vsub.f32 %v1053, %v1109
        %v1118 = vsub.f32 %v1054, %v1110
        %v1119 = vsub.f32 %v1055, %v1111
        %v1120 = vmul.f32 %v1112, 2.0
        %v1121 = vmul.f32 %v1113, 2.0
        %v1122 = vmul.f32 %v1114, 2.0
        %v1123 = vmul.f32 %v1115, 2.0
        %v1124 = vmul.f32 %v1116, 2.0
        %v1125 = vmul.f32 %v1117, 2.0
        %v1126 = vmul.f32 %v1118, 2.0
        %v1127 = vmul.f32 %v1119, 2.0
        %v1128 = vsub.f32 1.0, %v1120
        %v1129 = vsub.f32 1.0, %v1121
        %v1130 = vsub.f32 1.0, %v1122
        %v1131 = vsub.f32 1.0, %v1123
        %v1132 = vsub.f32 1.0, %v1124
        %v1133 = vsub.f32 1.0, %v1125
        %v1134 = vsub.f32 1.0, %v1126
        %v1135 = vsub.f32 1.0, %v1127
        %v1136 = vmul.f32 %v1080, %v1080
        %v1137 = vmul.f32 %v1081, %v1081
        %v1138 = vmul.f32 %v1082, %v1082
        %v1139 = vmul.f32 %v1083, %v1083
        %v1140 = vmul.f32 %v1084, %v1084
        %v1141 = vmul.f32 %v1085, %v1085
        %v1142 = vmul.f32 %v1086, %v1086
        %v1143 = vmul.f32 %v1087, %v1087
        %v1144 = vmul.f32 %v1136, -2.5052108e-08
        %v1145 = vmul.f32 %v1137, -2.5052108e-08
        %v1146 = vmul.f32 %v1138, -2.5052108e-08
        %v1147 = vmul.f32 %v1139, -2.5052108e-08
        %v1148 = vmul.f32 %v1140, -2.5052108e-08
        %v1149 = vmul.f32 %v1141, -2.5052108e-08
        %v1150 = vmul.f32 %v1142, -2.5052108e-08
        %v1151 = vmul.f32 %v1143, -2.5052108e-08
        %v1152 = vadd.f32 %v1144, 2.7557319e-06
        %v1153 = vadd.f32 %v1145, 2.7557319e-06
        %v1154 = vadd.f32 %v1146, 2.7557319e-06
        %v1155 = vadd.f32 %v1147, 2.7557319e-06
        %v1156 = vadd.f32 %v1148, 2.7557319e-06
        %v1157 = vadd.f32 %v1149, 2.7557319e-06
        %v1158 = vadd.f32 %v1150, 2.7557319e-06
        %v1159 = vadd.f32 %v1151, 2.7557319e-06
        %v1160 = vmul.f32 %v1152, %v1136
        %v1161 = vmul.f32 %v1153, %v1137
        %v1162 = vmul.f32 %v1154, %v1138
        %v1163 = vmul.f32 %v1155, %v1139
        %v1164 = vmul.f32 %v1156, %v1140
        %v1165 = vmul.f32 %v1157, %v1141
        %v1166 = vmul.f32 %v1158, %v1142
        %v1167 = vmul.f32 %v1159, %v1143
        %v1168 = vsub.f32 %v1160, 0.0001984127
        %v1169 = vsub.f32 %v1161, 0.0001984127
        %v1170 = vsub.f32 %v1162, 0.0001984127
        %v1171 = vsub.f32 %v1163, 0.0001984127
        %v1172 = vsub.f32 %v1164, 0.0001984127
        %v1173 = vsub.f32 %v1165, 0.0001984127
        %v1174 = vsub.f32 %v1166, 0.0001984127
        %v1175 = vsub.f32 %v1167, 0.0001984127
        %v1176 = vmul.f32 %v1168, %v1136
        %v1177 = vmul.f32 %v1169, %v1137
        %v1178 = vmul.f32 %v1170, %v1138
        %v1179 = vmul.f32 %v1171, %v1139
        %v1180 = vmul.f32 %v1172, %v1140
        %v1181 = vmul.f32 %v1173, %v1141
        %v1182 = vmul.f32 %v1174, %v1142
        %v1183 = vmul.f32 %v1175, %v1143
        %v1184 = vadd.f32 %v1176, 0.008333334
        %v1185 = vadd.f32 %v1177, 0.008333334
        %v1186 = vadd.f32 %v1178, 0.008333334
        %v1187 = vadd.f32 %v1179, 0.008333334
        %v1188 = vadd.f32 %v1180, 0.008333334
        %v1189 = vadd.f32 %v1181, 0.008333334
        %v1190 = vadd.f32 %v1182, 0.008333334
        %v1191 = vadd.f32 %v1183, 0.008333334
        %v1192 = vmul.f32 %v1184, %v1136
        %v1193 = vmul.f32 %v1185, %v1137
        %v1194 = vmul.f32 %v1186, %v1138
        %v1195 = vmul.f32 %v1187, %v1139
        %v1196 = vmul.f32 %v1188, %v1140
        %v1197 = vmul.f32 %v1189, %v1141
        %v1198 = vmul.f32 %v1190, %v1142
        %v1199 = vmul.f32 %v1191, %v1143
        %v1200 = vsub.f32 %v1192, 0.16666667
        %v1201 = vsub.f32 %v1193, 0.16666667
        %v1202 = vsub.f32 %v1194, 0.16666667
        %v1203 = vsub.f32 %v1195, 0.16666667
        %v1204 = vsub.f32 %v1196, 0.16666667
        %v1205 = vsub.f32 %v1197, 0.16666667
        %v1206 = vsub.f32 %v1198, 0.16666667
        %v1207 = vsub.f32 %v1199, 0.16666667
        %v1208 = vmul.f32 %v1200, %v1136
        %v1209 = vmul.f32 %v1201, %v1137
        %v1210 = vmul.f32 %v1202, %v1138
        %v1211 = vmul.f32 %v1203, %v1139
        %v1212 = vmul.f32 %v1204, %v1140
        %v1213 = vmul.f32 %v1205, %v1141
        %v1214 = vmul.f32 %v1206, %v1142
        %v1215 = vmul.f32 %v1207, %v1143
        %v1216 = vadd.f32 %v1208, 1.0
        %v1217 = vadd.f32 %v1209, 1.0
        %v1218 = vadd.f32 %v1210, 1.0
        %v1219 = vadd.f32 %v1211, 1.0
        %v1220 = vadd.f32 %v1212, 1.0
        %v1221 = vadd.f32 %v1213, 1.0
        %v1222 = vadd.f32 %v1214, 1.0
        %v1223 = vadd.f32 %v1215, 1.0
        %v1224 = vmul.f32 %v1080, %v1216
        %v1225 = vmul.f32 %v1081, %v1217
        %v1226 = vmul.f32 %v1082, %v1218
        %v1227 = vmul.f32 %v1083, %v1219
        %v1228 = vmul.f32 %v1084, %v1220
        %v1229 = vmul.f32 %v1085, %v1221
        %v1230 = vmul.f32 %v1086, %v1222
        %v1231 = vmul.f32 %v1087, %v1223
        %v1232 = vmul.f32 %v1128, %v1224
        %v1233 = vmul.f32 %v1129, %v1225
        %v1234 = vmul.f32 %v1130, %v1226
        %v1235 = vmul.f32 %v1131, %v1227
        %v1236 = vmul.f32 %v1132, %v1228
        %v1237 = vmul.f32 %v1133, %v1229
        %v1238 = vmul.f32 %v1134, %v1230
        %v1239 = vmul.f32 %v1135, %v1231
        %v1240 = vld [vmem:[%s7] sm:$0x7]
        %v1241 = vld [vmem:[%s8] sm:$0x7]
        %1243 = vset.pattern.permute.xlu0 0
        %1244 = vperm.xlu0 %1243, %v1241
        %v1245 = vpop.permute.xlu0 %1244
        %v1248 = vsel %vm671, %v1240, 0
        %1250 = vmatpush.msra.mxu0 0.0
        %1251 = vmatpush.msra.mxu0 0.0
        %1252 = vmatpush.msra.mxu0 0.0
        %1253 = vmatpush.msra.mxu0 0.0
        %1254 = vmatpush.msra.mxu0 0.0
        %1255 = vmatpush.msra.mxu0 0.0
        %1256 = vmatpush.msra.mxu0 0.0
        %1257 = vmatpush.msra.mxu0 0.0
        %1258 = vmatpush.msra.mxu0 0.0
        %1259 = vmatpush.msra.mxu0 0.0
        %1260 = vmatpush.msra.mxu0 0.0
        %1261 = vmatpush.msra.mxu0 0.0
        %1262 = vmatpush.msra.mxu0 %v1238
        %1263 = vmatpush.msra.mxu0 %v1236
        %1264 = vmatpush.msra.mxu0 %v1234
        %1265 = vmatpush.msra.mxu0 %v1232
        %1266 = vmatmul.f32.gmra.mxu0 %v1248
        %v1267 = vpop.f32.mrf.mxu0
        %v1268 = vadd.f32 %v1245, %v1267
        %1269 = vdwg.mxu0
        %1270 = vmatpush.msra.mxu0 0.0
        %1271 = vmatpush.msra.mxu0 0.0
        %1272 = vmatpush.msra.mxu0 0.0
        %1273 = vmatpush.msra.mxu0 0.0
        %1274 = vmatpush.msra.mxu0 0.0
        %1275 = vmatpush.msra.mxu0 0.0
        %1276 = vmatpush.msra.mxu0 0.0
        %1277 = vmatpush.msra.mxu0 0.0
        %1278 = vmatpush.msra.mxu0 0.0
        %1279 = vmatpush.msra.mxu0 0.0
        %1280 = vmatpush.msra.mxu0 0.0
        %1281 = vmatpush.msra.mxu0 0.0
        %1282 = vmatpush.msra.mxu0 %v1239
        %1283 = vmatpush.msra.mxu0 %v1237
        %1284 = vmatpush.msra.mxu0 %v1235
        %1285 = vmatpush.msra.mxu0 %v1233
        %1286 = vmatmul.f32.gmra.mxu0 %v1248
        %v1287 = vpop.f32.mrf.mxu0
        %v1288 = vadd.f32 %v1245, %v1287
        %1289 = vdwg.mxu0
        %v1290 = vmul.f32 %v1268, 0.31830987
        %v1291 = vmul.f32 %v1288, 0.31830987
        %v1292 = vround.ne.pseudo %v1290
        %v1293 = vround.ne.pseudo %v1291
        %v1294 = vmul.f32 %v1292, 3.140625
        %v1295 = vmul.f32 %v1293, 3.140625
        %v1296 = vsub.f32 %v1268, %v1294
        %v1297 = vsub.f32 %v1288, %v1295
        %v1298 = vmul.f32 %v1292, 0.0009676536
        %v1299 = vmul.f32 %v1293, 0.0009676536
        %v1300 = vsub.f32 %v1296, %v1298
        %v1301 = vsub.f32 %v1297, %v1299
        %v1302 = vmul.f32 %v1292, 0.5
        %v1303 = vmul.f32 %v1293, 0.5
        %v1304 = vfloor.f32 %v1302
        %v1305 = vfloor.f32 %v1303
        %v1306 = vmul.f32 %v1304, 2.0
        %v1307 = vmul.f32 %v1305, 2.0
        %v1308 = vsub.f32 %v1292, %v1306
        %v1309 = vsub.f32 %v1293, %v1307
        %v1310 = vmul.f32 %v1308, 2.0
        %v1311 = vmul.f32 %v1309, 2.0
        %v1312 = vsub.f32 1.0, %v1310
        %v1313 = vsub.f32 1.0, %v1311
        %v1314 = vmul.f32 %v1300, %v1300
        %v1315 = vmul.f32 %v1301, %v1301
        %v1316 = vmul.f32 %v1314, -2.5052108e-08
        %v1317 = vmul.f32 %v1315, -2.5052108e-08
        %v1318 = vadd.f32 %v1316, 2.7557319e-06
        %v1319 = vadd.f32 %v1317, 2.7557319e-06
        %v1320 = vmul.f32 %v1318, %v1314
        %v1321 = vmul.f32 %v1319, %v1315
        %v1322 = vsub.f32 %v1320, 0.0001984127
        %v1323 = vsub.f32 %v1321, 0.0001984127
        %v1324 = vmul.f32 %v1322, %v1314
        %v1325 = vmul.f32 %v1323, %v1315
        %v1326 = vadd.f32 %v1324, 0.008333334
        %v1327 = vadd.f32 %v1325, 0.008333334
        %v1328 = vmul.f32 %v1326, %v1314
        %v1329 = vmul.f32 %v1327, %v1315
        %v1330 = vsub.f32 %v1328, 0.16666667
        %v1331 = vsub.f32 %v1329, 0.16666667
        %v1332 = vmul.f32 %v1330, %v1314
        %v1333 = vmul.f32 %v1331, %v1315
        %v1334 = vadd.f32 %v1332, 1.0
        %v1335 = vadd.f32 %v1333, 1.0
        %v1336 = vmul.f32 %v1300, %v1334
        %v1337 = vmul.f32 %v1301, %v1335
        %v1338 = vmul.f32 %v1312, %v1336
        %v1339 = vmul.f32 %v1313, %v1337
        %v1342 = vrot.slane %v1339, 4
        %vm1343 = vcmask 1043456
        %v1344 = vsel %vm1343, %v1338, %v1342
        %1346 = vst [vmem:[%s326] sm:$0x77] %v1344
        %s1347 = sand.u32 %s225, 1
        %s1348 = scalar_lea.sflag [#allocation3], %s1347
        %s1349 = sand.u32 %s225, 1
        %s1350 = smul.addr %s1349, 8
        %s1351 = scalar_lea.vmem [#allocation2], %s1350
        // Predicated region
        $region57: #{tpu_custom_call.1} parent=55 // pred_check
          %p1352 = pneg %p235
        $region58: #{tpu_custom_call.1} parent=55 // pred_check_branch
          %1354 = sbr.rel (%p1352) target = $region60
        $region59: #{tpu_custom_call.1} parent=55 // pred_region
          %s1355 = smul.u32 2, %s23
          %1357 = vsyncadd %s1348, 0
          %s1358 = smul.addr %s1355, 4
          %s1359 = scalar_lea.hbm %s9, %s1358
          %s1361 = sshll.u32 %s1351, 4
          %s1362 = int_to_ptr.vmem [resolvable:$true] %s1361
          %s1363 = sshll.u32 %s1359, 4
          %s1364 = int_to_ptr.hbm [resolvable:$true] %s1363
          %1366 = dma.vmem_to_hbm [thread:$0]  %s1362, 128, %s1364, %s1348
        $region60: #{tpu_custom_call.1} parent=55 // pred_fallthru
          _
      $region56: #{tpu_custom_call.1} parent=5 // pred_fallthru
        _
      %p1367 = scmp.le.s32.totalorder 2, %s18
      // Predicated region
      $region61: #{tpu_custom_call.1} parent=5 // pred_check
        %p1368 = pneg %p1367
      $region62: #{tpu_custom_call.1} parent=5 // pred_check_branch
        %1370 = sbr.rel (%p1368) target = $region64
      $region63: #{tpu_custom_call.1} parent=5 // pred_region
        %s1371 = ssub.s32 %s18, 2
        // Predicated region
        $region65: #{tpu_custom_call.1} parent=63 // pred_check
          %p1372 = pneg %p241
        $region66: #{tpu_custom_call.1} parent=63 // pred_check_branch
          %1374 = sbr.rel (%p1372) target = $region68
        $region67: #{tpu_custom_call.1} parent=63 // pred_region
          %s1375 = sand.u32 %s226, 1
          %s1376 = scalar_lea.sflag [#allocation3], %s1375
          %s1377 = sand.u32 %s226, 1
          %s1378 = smul.addr %s1377, 8
          %s1379 = scalar_lea.vmem [#allocation2], %s1378
          %1381 = dma.done %s1376, 128
        $region68: #{tpu_custom_call.1} parent=63 // pred_fallthru
          _
      $region64: #{tpu_custom_call.1} parent=5 // pred_fallthru
        _
    $region6: #{tpu_custom_call.1} parent=1 // loop_footer
      %s22 = sadd.s32 1, %s18
    $region7: #{tpu_custom_call.1} parent=1 // loop_footer_branch
      %17 = sbr.rel target = $region3
    $region8: #{tpu_custom_call.1} parent=1 // loop_exit
      _
    %1382 = vsyncpa [#allocation3], 1
    %s1383 = scalar_lea.sflag [#allocation3], 1
    %1384 = vsyncpa %s1383, 1

</llo_original>
